<compile_context>
chip_gen: v7x
topology: tpu7x:2x2x1
jax: 0.10.0
libtpu: 0.0.40
codegen_flags: <defaults>
</compile_context>

<pallas_src>
import functools

import jax
import jax.numpy as jnp
from jax.experimental import pallas as pl
from jax.experimental.pallas import tpu as pltpu


# ---------------------------------------------------------------------------
# Kernel 1 & 3: fused conv stack (3x3, stride 1, pad 1) in NHWC [B*H, W*C] layout
# ---------------------------------------------------------------------------

def _conv_stack_kernel(*refs, n_layers, final_act):
    # refs = x, r_neg, r_pos, (m_neg, m_zero, m_pos, b_row) * n_layers, out
    x_ref, rneg_ref, rpos_ref = refs[0], refs[1], refs[2]
    out_ref = refs[-1]
    layer_refs = refs[3:-1]

    h = x_ref[...]
    r_neg = rneg_ref[...]          # hoisted: shared by all layers
    r_pos = rpos_ref[...]

    for l in range(n_layers):
        m_neg = layer_refs[4 * l + 0][...]
        m_zero = layer_refs[4 * l + 1][...]
        m_pos = layer_refs[4 * l + 2][...]
        b_row = layer_refs[4 * l + 3][...]

        t_neg = jnp.dot(h, m_neg, preferred_element_type=jnp.float32)
        t_zero = jnp.dot(h, m_zero, preferred_element_type=jnp.float32)
        t_pos = jnp.dot(h, m_pos, preferred_element_type=jnp.float32)
        y = (t_zero
             + jnp.dot(r_neg, t_neg, preferred_element_type=jnp.float32)
             + jnp.dot(r_pos, t_pos, preferred_element_type=jnp.float32)
             + b_row)

        if l == n_layers - 1 and final_act == "sigmoid":
            # sigmoid(y) == 0.5*(tanh(0.5*y)+1): tanh goes to the EUP slot.
            h = 0.5 * (jnp.tanh(0.5 * y) + 1.0)
        else:
            h = jnp.maximum(y, 0.0)

    out_ref[...] = h.astype(out_ref.dtype)


def conv_stack(x2d, r_neg, r_pos, layer_mats, final_act):
    """x2d: [B*H, W*Cin].  layer_mats: list of (m_neg, m_zero, m_pos, b_row)."""
    n_layers = len(layer_mats)
    bh = x2d.shape[0]
    n_out = layer_mats[-1][3].shape[1]

    flat_inputs = [x2d, r_neg, r_pos]
    for mats in layer_mats:
        flat_inputs.extend(mats)

    flops = 0
    k = x2d.shape[1]
    for (_, _, _, b_row) in layer_mats:
        n = b_row.shape[1]
        flops += 2 * bh * k * n * 3 + 2 * bh * bh * n * 2
        k = n
    bytes_accessed = sum(int(a.size) * 4 for a in flat_inputs) + bh * n_out * 4
    transcendentals = bh * n_out if final_act == "sigmoid" else 0

    kernel = functools.partial(_conv_stack_kernel, n_layers=n_layers,
                               final_act=final_act)
    return pl.pallas_call(
        kernel,
        out_shape=jax.ShapeDtypeStruct((bh, n_out), jnp.float32),
        in_specs=[pl.BlockSpec(memory_space=pltpu.MemorySpace.VMEM)] * len(flat_inputs),
        out_specs=pl.BlockSpec(memory_space=pltpu.MemorySpace.VMEM),
        cost_estimate=pl.CostEstimate(flops=flops, transcendentals=transcendentals,
                                      bytes_accessed=bytes_accessed),
    )(*flat_inputs)


# ---------------------------------------------------------------------------
# Kernel 2: encoder-FC stack + mean/logvar head + reparameterize + decoder-FC stack
# ---------------------------------------------------------------------------

def _fc_vae_core_kernel(xf_ref, eps_ref, *refs, n_enc, n_dec):
    # refs = enc (w, b)*n_enc, wm, bm, wl, bl, dec (w, b)*n_dec, out
    out_ref = refs[-1]
    prefs = refs[:-1]
    idx = 0

    h = xf_ref[...]
    for _ in range(n_enc):
        w = prefs[idx][...]; b = prefs[idx + 1][...]; idx += 2
        h = jnp.maximum(jnp.dot(h, w, preferred_element_type=jnp.float32) + b, 0.0)

    wm = prefs[idx][...]; bm = prefs[idx + 1][...]
    wl = prefs[idx + 2][...]; bl = prefs[idx + 3][...]
    idx += 4
    mean = jnp.dot(h, wm, preferred_element_type=jnp.float32) + bm
    logvar = jnp.dot(h, wl, preferred_element_type=jnp.float32) + bl
    # reparameterize fused in-kernel: exp runs on the EUP slot next to the matmuls
    h = mean + jnp.exp(0.5 * logvar) * eps_ref[...]

    for _ in range(n_dec):
        w = prefs[idx][...]; b = prefs[idx + 1][...]; idx += 2
        h = jnp.maximum(jnp.dot(h, w, preferred_element_type=jnp.float32) + b, 0.0)

    out_ref[...] = h.astype(out_ref.dtype)


def fc_vae_core(xf, eps, enc_hidden, head, dec_fc):
    wm, bm, wl, bl = head
    flat_inputs = [xf, eps]
    for w, b in enc_hidden:
        flat_inputs += [w, b]
    flat_inputs += [wm, bm, wl, bl]
    for w, b in dec_fc:
        flat_inputs += [w, b]

    bsz = xf.shape[0]
    n_out = dec_fc[-1][0].shape[1]

    flops = 0
    k = xf.shape[1]
    for w, _ in enc_hidden:
        flops += 2 * bsz * k * w.shape[1]; k = w.shape[1]
    flops += 2 * bsz * k * wm.shape[1] * 2
    k = wm.shape[1]
    for w, _ in dec_fc:
        flops += 2 * bsz * k * w.shape[1]; k = w.shape[1]
    bytes_accessed = sum(int(a.size) * 4 for a in flat_inputs) + bsz * n_out * 4

    kernel = functools.partial(_fc_vae_core_kernel, n_enc=len(enc_hidden),
                               n_dec=len(dec_fc))
    return pl.pallas_call(
        kernel,
        out_shape=jax.ShapeDtypeStruct((bsz, n_out), jnp.float32),
        in_specs=[pl.BlockSpec(memory_space=pltpu.MemorySpace.VMEM)] * len(flat_inputs),
        out_specs=pl.BlockSpec(memory_space=pltpu.MemorySpace.VMEM),
        cost_estimate=pl.CostEstimate(flops=flops, transcendentals=bsz * wl.shape[1],
                                      bytes_accessed=bytes_accessed),
    )(*flat_inputs)


# ---------------------------------------------------------------------------
# Glue: structured weight / shift matrices for the in-kernel conv (one-time prep)
# ---------------------------------------------------------------------------

def conv_band_mats(w, b, W):
    """w: [Cout, Cin, 3, 3] (torch layout), b: [Cout] -> (M_{-1}, M_0, M_{+1}, bias_row).

    M_dh[(w_in)*Cin + ci, w_out*Cout + co] = w[co, ci, dh+1, (w_in - w_out) + 1]
    (zero outside the +-1 band), which folds the horizontal taps, the channel
    contraction and the W-boundary zero padding into one dense [W*Cin, W*Cout]."""
    mats = []
    for kh in range(3):                      # dh = kh - 1
        m = jnp.zeros((W * w.shape[1], W * w.shape[0]), jnp.float32)
        for kw in range(3):                  # dw = kw - 1
            shift = jnp.eye(W, k=-(kw - 1), dtype=jnp.float32)
            m = m + jnp.kron(shift, w[:, :, kh, kw].T)
        mats.append(m)
    b_row = jnp.tile(b, W).reshape(1, W * w.shape[0])
    return mats[0], mats[1], mats[2], b_row


def row_shift_mats(B, H):
    """Block-diagonal (per-sample) row shift-with-zero-fill matrices for dh = -1, +1."""
    eye_b = jnp.eye(B, dtype=jnp.float32)
    r_neg = jnp.kron(eye_b, jnp.eye(H, k=-1, dtype=jnp.float32))
    r_pos = jnp.kron(eye_b, jnp.eye(H, k=+1, dtype=jnp.float32))
    return r_neg, r_pos


# ---------------------------------------------------------------------------
# Parameter construction (deterministic, in-script)
# ---------------------------------------------------------------------------

def reverse_layers(layers):
    return [tuple(reversed(l)) for l in reversed(layers)]


def init_params(key, image_shape, latent, conv_layers, perceptron_layers):
    def nxt():
        nonlocal key
        key, sub = jax.random.split(key)
        return sub

    params = {"enc_conv": [], "enc_fc": [], "dec_fc": [], "dec_conv": []}

    for cin, cout in conv_layers:
        params["enc_conv"].append((
            0.05 * jax.random.normal(nxt(), (cout, cin, 3, 3), jnp.float32),
            0.01 * jax.random.normal(nxt(), (cout,), jnp.float32),
        ))

    enc_fc_dims = list(perceptron_layers) + [(perceptron_layers[-1][1], 2 * latent)]
    for din, dout in enc_fc_dims:
        params["enc_fc"].append((
            0.05 * jax.random.normal(nxt(), (din, dout), jnp.float32),
            0.01 * jax.random.normal(nxt(), (1, dout), jnp.float32),
        ))

    dec_fc_dims = [(latent, perceptron_layers[-1][1])] + reverse_layers(perceptron_layers)
    for din, dout in dec_fc_dims:
        params["dec_fc"].append((
            0.05 * jax.random.normal(nxt(), (din, dout), jnp.float32),
            0.01 * jax.random.normal(nxt(), (1, dout), jnp.float32),
        ))

    for cin, cout in reverse_layers(conv_layers):
        params["dec_conv"].append((
            0.05 * jax.random.normal(nxt(), (cout, cin, 3, 3), jnp.float32),
            0.01 * jax.random.normal(nxt(), (cout,), jnp.float32),
        ))
    return params


# ---------------------------------------------------------------------------
# VAE forward  ==  decoder(encoder(x))      (3 pallas_calls total)
# ---------------------------------------------------------------------------

def vae_forward(params, x, eps, image_shape, latent, conv_layers):
    B = x.shape[0]
    C, H, W = image_shape

    # NCHW -> NHWC-flattened [B*H, W*C] (only boundary transpose of the module)
    h = x.transpose(0, 2, 3, 1).reshape(B * H, W * C)
    r_neg, r_pos = row_shift_mats(B, H)

    # ---- kernel 1: encoder conv stack ----
    enc_mats = [conv_band_mats(w, b, W) for (w, b) in params["enc_conv"]]
    h = conv_stack(h, r_neg, r_pos, enc_mats, final_act="relu")

    # flatten: [B*H, W*C_last] -> [B, H*W*C_last]  (row-major compatible, free)
    h = h.reshape(B, -1)

    # ---- kernel 2: FC encoder + reparameterize + FC decoder ----
    *enc_hidden, (w_head, b_head) = params["enc_fc"]
    head = (w_head[:, :latent], b_head[:, :latent],      # mean head
            w_head[:, latent:], b_head[:, latent:])      # logvar head
    h = fc_vae_core(h, eps, enc_hidden, head, params["dec_fc"])

    # back to conv layout [B*H, W*C]  (free reshape)
    c_dec_in = conv_layers[-1][1]
    h = h.reshape(B * H, W * c_dec_in)

    # ---- kernel 3: decoder conv stack ----
    dec_mats = [conv_band_mats(w, b, W) for (w, b) in params["dec_conv"]]
    h = conv_stack(h, r_neg, r_pos, dec_mats, final_act="sigmoid")

    # NHWC-flattened -> NCHW at the module boundary
    c_out = params["dec_conv"][-1][0].shape[0]
    return h.reshape(B, H, W, c_out).transpose(0, 3, 1, 2)


# ---------------------------------------------------------------------------
# Demo
# ---------------------------------------------------------------------------

if __name__ == "__main__":
    image_shape = (4, 16, 16)                 # (C, H, W)
    latent = 8
    conv_layers = [(4, 8), (8, 8)]            # (in_ch, out_ch)
    flat = conv_layers[-1][1] * image_shape[1] * image_shape[2]
    perceptron_layers = [(flat, 32), (32, 32)]
    batch = 2

    key = jax.random.PRNGKey(0)
    k_param, k_x, k_eps = jax.random.split(key, 3)

    params = init_params(k_param, image_shape, latent, conv_layers, perceptron_layers)
    x = jax.random.normal(k_x, (batch,) + image_shape, jnp.float32)
    # deterministic reparameterization noise (could be generated in-kernel with
    # pltpu.prng_seed / prng_random_bits; kept as an input for reproducibility)
    eps = jax.random.normal(k_eps, (batch, latent), jnp.float32)

    fwd = jax.jit(lambda p, xx, ee: vae_forward(p, xx, ee, image_shape, latent, conv_layers))
    out = fwd(params, x, eps)
    jax.block_until_ready(out)
    assert out.shape == (batch,) + image_shape, out.shape
    print("KERNEL_OK")
</pallas_src>

<mosaic_0001>
module attributes {stable_mosaic.version = 11 : i64} {
  func.func @_conv_stack_kernel(%arg0: memref<32x64xf32, #tpu.memory_space<vmem>>, %arg1: memref<32x32xf32, #tpu.memory_space<vmem>>, %arg2: memref<32x32xf32, #tpu.memory_space<vmem>>, %arg3: memref<64x128xf32, #tpu.memory_space<vmem>>, %arg4: memref<64x128xf32, #tpu.memory_space<vmem>>, %arg5: memref<64x128xf32, #tpu.memory_space<vmem>>, %arg6: memref<1x128xf32, #tpu.memory_space<vmem>>, %arg7: memref<128x128xf32, #tpu.memory_space<vmem>>, %arg8: memref<128x128xf32, #tpu.memory_space<vmem>>, %arg9: memref<128x128xf32, #tpu.memory_space<vmem>>, %arg10: memref<1x128xf32, #tpu.memory_space<vmem>>, %arg11: memref<32x128xf32, #tpu.memory_space<vmem>>) attributes {dimension_semantics = [], scalar_prefetch = 0 : i64, scratch_operands = 0 : i64, tpu.core_type = #tpu.core_type<tc>} {
    %c0 = arith.constant 0 : index
    %c0_0 = arith.constant 0 : index
    %0 = vector.load %arg0[%c0, %c0_0] : memref<32x64xf32, #tpu.memory_space<vmem>>, vector<32x64xf32>
    %c0_1 = arith.constant 0 : index
    %c0_2 = arith.constant 0 : index
    %1 = vector.load %arg1[%c0_1, %c0_2] : memref<32x32xf32, #tpu.memory_space<vmem>>, vector<32x32xf32>
    %c0_3 = arith.constant 0 : index
    %c0_4 = arith.constant 0 : index
    %2 = vector.load %arg2[%c0_3, %c0_4] : memref<32x32xf32, #tpu.memory_space<vmem>>, vector<32x32xf32>
    %c0_5 = arith.constant 0 : index
    %c0_6 = arith.constant 0 : index
    %3 = vector.load %arg3[%c0_5, %c0_6] : memref<64x128xf32, #tpu.memory_space<vmem>>, vector<64x128xf32>
    %c0_7 = arith.constant 0 : index
    %c0_8 = arith.constant 0 : index
    %4 = vector.load %arg4[%c0_7, %c0_8] : memref<64x128xf32, #tpu.memory_space<vmem>>, vector<64x128xf32>
    %c0_9 = arith.constant 0 : index
    %c0_10 = arith.constant 0 : index
    %5 = vector.load %arg5[%c0_9, %c0_10] : memref<64x128xf32, #tpu.memory_space<vmem>>, vector<64x128xf32>
    %c0_11 = arith.constant 0 : index
    %c0_12 = arith.constant 0 : index
    %6 = vector.load %arg6[%c0_11, %c0_12] : memref<1x128xf32, #tpu.memory_space<vmem>>, vector<1x128xf32>
    %cst = arith.constant dense<0.000000e+00> : vector<32x128xf32>
    %7 = tpu.matmul %0, %3, %cst {dimension_numbers = #tpu.dot_dimension_numbers<[1], [0], [0], [1], [0, 0, 1, 1], [], []>} : vector<32x64xf32>, vector<64x128xf32>, vector<32x128xf32> -> vector<32x128xf32>
    %cst_13 = arith.constant dense<0.000000e+00> : vector<32x128xf32>
    %8 = tpu.matmul %0, %4, %cst_13 {dimension_numbers = #tpu.dot_dimension_numbers<[1], [0], [0], [1], [0, 0, 1, 1], [], []>} : vector<32x64xf32>, vector<64x128xf32>, vector<32x128xf32> -> vector<32x128xf32>
    %cst_14 = arith.constant dense<0.000000e+00> : vector<32x128xf32>
    %9 = tpu.matmul %0, %5, %cst_14 {dimension_numbers = #tpu.dot_dimension_numbers<[1], [0], [0], [1], [0, 0, 1, 1], [], []>} : vector<32x64xf32>, vector<64x128xf32>, vector<32x128xf32> -> vector<32x128xf32>
    %cst_15 = arith.constant dense<0.000000e+00> : vector<32x128xf32>
    %10 = tpu.matmul %1, %7, %cst_15 {dimension_numbers = #tpu.dot_dimension_numbers<[1], [0], [0], [1], [0, 0, 1, 1], [], []>} : vector<32x32xf32>, vector<32x128xf32>, vector<32x128xf32> -> vector<32x128xf32>
    %11 = arith.addf %8, %10 : vector<32x128xf32>
    %cst_16 = arith.constant dense<0.000000e+00> : vector<32x128xf32>
    %12 = tpu.matmul %2, %9, %cst_16 {dimension_numbers = #tpu.dot_dimension_numbers<[1], [0], [0], [1], [0, 0, 1, 1], [], []>} : vector<32x32xf32>, vector<32x128xf32>, vector<32x128xf32> -> vector<32x128xf32>
    %13 = arith.addf %11, %12 : vector<32x128xf32>
    %14 = vector.broadcast %6 : vector<1x128xf32> to vector<32x128xf32>
    %15 = arith.addf %13, %14 : vector<32x128xf32>
    %cst_17 = arith.constant 0.000000e+00 : f32
    %16 = vector.broadcast %cst_17 : f32 to vector<32x128xf32>
    %17 = arith.maximumf %15, %16 : vector<32x128xf32>
    %c0_18 = arith.constant 0 : index
    %c0_19 = arith.constant 0 : index
    %18 = vector.load %arg7[%c0_18, %c0_19] : memref<128x128xf32, #tpu.memory_space<vmem>>, vector<128x128xf32>
    %c0_20 = arith.constant 0 : index
    %c0_21 = arith.constant 0 : index
    %19 = vector.load %arg8[%c0_20, %c0_21] : memref<128x128xf32, #tpu.memory_space<vmem>>, vector<128x128xf32>
    %c0_22 = arith.constant 0 : index
    %c0_23 = arith.constant 0 : index
    %20 = vector.load %arg9[%c0_22, %c0_23] : memref<128x128xf32, #tpu.memory_space<vmem>>, vector<128x128xf32>
    %c0_24 = arith.constant 0 : index
    %c0_25 = arith.constant 0 : index
    %21 = vector.load %arg10[%c0_24, %c0_25] : memref<1x128xf32, #tpu.memory_space<vmem>>, vector<1x128xf32>
    %cst_26 = arith.constant dense<0.000000e+00> : vector<32x128xf32>
    %22 = tpu.matmul %17, %18, %cst_26 {dimension_numbers = #tpu.dot_dimension_numbers<[1], [0], [0], [1], [0, 0, 1, 1], [], []>} : vector<32x128xf32>, vector<128x128xf32>, vector<32x128xf32> -> vector<32x128xf32>
    %cst_27 = arith.constant dense<0.000000e+00> : vector<32x128xf32>
    %23 = tpu.matmul %17, %19, %cst_27 {dimension_numbers = #tpu.dot_dimension_numbers<[1], [0], [0], [1], [0, 0, 1, 1], [], []>} : vector<32x128xf32>, vector<128x128xf32>, vector<32x128xf32> -> vector<32x128xf32>
    %cst_28 = arith.constant dense<0.000000e+00> : vector<32x128xf32>
    %24 = tpu.matmul %17, %20, %cst_28 {dimension_numbers = #tpu.dot_dimension_numbers<[1], [0], [0], [1], [0, 0, 1, 1], [], []>} : vector<32x128xf32>, vector<128x128xf32>, vector<32x128xf32> -> vector<32x128xf32>
    %cst_29 = arith.constant dense<0.000000e+00> : vector<32x128xf32>
    %25 = tpu.matmul %1, %22, %cst_29 {dimension_numbers = #tpu.dot_dimension_numbers<[1], [0], [0], [1], [0, 0, 1, 1], [], []>} : vector<32x32xf32>, vector<32x128xf32>, vector<32x128xf32> -> vector<32x128xf32>
    %26 = arith.addf %23, %25 : vector<32x128xf32>
    %cst_30 = arith.constant dense<0.000000e+00> : vector<32x128xf32>
    %27 = tpu.matmul %2, %24, %cst_30 {dimension_numbers = #tpu.dot_dimension_numbers<[1], [0], [0], [1], [0, 0, 1, 1], [], []>} : vector<32x32xf32>, vector<32x128xf32>, vector<32x128xf32> -> vector<32x128xf32>
    %28 = arith.addf %26, %27 : vector<32x128xf32>
    %29 = vector.broadcast %21 : vector<1x128xf32> to vector<32x128xf32>
    %30 = arith.addf %28, %29 : vector<32x128xf32>
    %cst_31 = arith.constant 0.000000e+00 : f32
    %31 = vector.broadcast %cst_31 : f32 to vector<32x128xf32>
    %32 = arith.maximumf %30, %31 : vector<32x128xf32>
    %c0_32 = arith.constant 0 : index
    %c0_33 = arith.constant 0 : index
    %33 = vector.load %arg11[%c0_32, %c0_33] : memref<32x128xf32, #tpu.memory_space<vmem>>, vector<32x128xf32>
    tpu.vector_store %arg11[%c0_32, %c0_33], %32 {strides = array<i32>} : memref<32x128xf32, #tpu.memory_space<vmem>>, vector<32x128xf32>,
    return
  }
}

module attributes {stable_mosaic.version = 11 : i64} {
  func.func @_fc_vae_core_kernel(%arg0: memref<2x2048xf32, #tpu.memory_space<vmem>>, %arg1: memref<2x8xf32, #tpu.memory_space<vmem>>, %arg2: memref<2048x32xf32, #tpu.memory_space<vmem>>, %arg3: memref<1x32xf32, #tpu.memory_space<vmem>>, %arg4: memref<32x32xf32, #tpu.memory_space<vmem>>, %arg5: memref<1x32xf32, #tpu.memory_space<vmem>>, %arg6: memref<32x8xf32, #tpu.memory_space<vmem>>, %arg7: memref<1x8xf32, #tpu.memory_space<vmem>>, %arg8: memref<32x8xf32, #tpu.memory_space<vmem>>, %arg9: memref<1x8xf32, #tpu.memory_space<vmem>>, %arg10: memref<8x32xf32, #tpu.memory_space<vmem>>, %arg11: memref<1x32xf32, #tpu.memory_space<vmem>>, %arg12: memref<32x32xf32, #tpu.memory_space<vmem>>, %arg13: memref<1x32xf32, #tpu.memory_space<vmem>>, %arg14: memref<32x2048xf32, #tpu.memory_space<vmem>>, %arg15: memref<1x2048xf32, #tpu.memory_space<vmem>>, %arg16: memref<2x2048xf32, #tpu.memory_space<vmem>>) attributes {dimension_semantics = [], scalar_prefetch = 0 : i64, scratch_operands = 0 : i64, tpu.core_type = #tpu.core_type<tc>} {
    %c0 = arith.constant 0 : index
    %c0_0 = arith.constant 0 : index
    %0 = vector.load %arg0[%c0, %c0_0] : memref<2x2048xf32, #tpu.memory_space<vmem>>, vector<2x2048xf32>
    %c0_1 = arith.constant 0 : index
    %c0_2 = arith.constant 0 : index
    %1 = vector.load %arg2[%c0_1, %c0_2] : memref<2048x32xf32, #tpu.memory_space<vmem>>, vector<2048x32xf32>
    %c0_3 = arith.constant 0 : index
    %c0_4 = arith.constant 0 : index
    %2 = vector.load %arg3[%c0_3, %c0_4] : memref<1x32xf32, #tpu.memory_space<vmem>>, vector<1x32xf32>
    %cst = arith.constant dense<0.000000e+00> : vector<2x32xf32>
    %3 = tpu.matmul %0, %1, %cst {dimension_numbers = #tpu.dot_dimension_numbers<[1], [0], [0], [1], [0, 0, 1, 1], [], []>} : vector<2x2048xf32>, vector<2048x32xf32>, vector<2x32xf32> -> vector<2x32xf32>
    %4 = vector.broadcast %2 : vector<1x32xf32> to vector<2x32xf32>
    %5 = arith.addf %3, %4 : vector<2x32xf32>
    %cst_5 = arith.constant 0.000000e+00 : f32
    %6 = vector.broadcast %cst_5 : f32 to vector<2x32xf32>
    %7 = arith.maximumf %5, %6 : vector<2x32xf32>
    %c0_6 = arith.constant 0 : index
    %c0_7 = arith.constant 0 : index
    %8 = vector.load %arg4[%c0_6, %c0_7] : memref<32x32xf32, #tpu.memory_space<vmem>>, vector<32x32xf32>
    %c0_8 = arith.constant 0 : index
    %c0_9 = arith.constant 0 : index
    %9 = vector.load %arg5[%c0_8, %c0_9] : memref<1x32xf32, #tpu.memory_space<vmem>>, vector<1x32xf32>
    %cst_10 = arith.constant dense<0.000000e+00> : vector<2x32xf32>
    %10 = tpu.matmul %7, %8, %cst_10 {dimension_numbers = #tpu.dot_dimension_numbers<[1], [0], [0], [1], [0, 0, 1, 1], [], []>} : vector<2x32xf32>, vector<32x32xf32>, vector<2x32xf32> -> vector<2x32xf32>
    %11 = vector.broadcast %9 : vector<1x32xf32> to vector<2x32xf32>
    %12 = arith.addf %10, %11 : vector<2x32xf32>
    %cst_11 = arith.constant 0.000000e+00 : f32
    %13 = vector.broadcast %cst_11 : f32 to vector<2x32xf32>
    %14 = arith.maximumf %12, %13 : vector<2x32xf32>
    %c0_12 = arith.constant 0 : index
    %c0_13 = arith.constant 0 : index
    %15 = vector.load %arg6[%c0_12, %c0_13] : memref<32x8xf32, #tpu.memory_space<vmem>>, vector<32x8xf32>
    %c0_14 = arith.constant 0 : index
    %c0_15 = arith.constant 0 : index
    %16 = vector.load %arg7[%c0_14, %c0_15] : memref<1x8xf32, #tpu.memory_space<vmem>>, vector<1x8xf32>
    %c0_16 = arith.constant 0 : index
    %c0_17 = arith.constant 0 : index
    %17 = vector.load %arg8[%c0_16, %c0_17] : memref<32x8xf32, #tpu.memory_space<vmem>>, vector<32x8xf32>
    %c0_18 = arith.constant 0 : index
    %c0_19 = arith.constant 0 : index
    %18 = vector.load %arg9[%c0_18, %c0_19] : memref<1x8xf32, #tpu.memory_space<vmem>>, vector<1x8xf32>
    %cst_20 = arith.constant dense<0.000000e+00> : vector<2x8xf32>
    %19 = tpu.matmul %14, %15, %cst_20 {dimension_numbers = #tpu.dot_dimension_numbers<[1], [0], [0], [1], [0, 0, 1, 1], [], []>} : vector<2x32xf32>, vector<32x8xf32>, vector<2x8xf32> -> vector<2x8xf32>
    %20 = vector.broadcast %16 : vector<1x8xf32> to vector<2x8xf32>
    %21 = arith.addf %19, %20 : vector<2x8xf32>
    %cst_21 = arith.constant dense<0.000000e+00> : vector<2x8xf32>
    %22 = tpu.matmul %14, %17, %cst_21 {dimension_numbers = #tpu.dot_dimension_numbers<[1], [0], [0], [1], [0, 0, 1, 1], [], []>} : vector<2x32xf32>, vector<32x8xf32>, vector<2x8xf32> -> vector<2x8xf32>
    %23 = vector.broadcast %18 : vector<1x8xf32> to vector<2x8xf32>
    %24 = arith.addf %22, %23 : vector<2x8xf32>
    %cst_22 = arith.constant 5.000000e-01 : f32
    %25 = vector.broadcast %cst_22 : f32 to vector<2x8xf32>
    %26 = arith.mulf %25, %24 : vector<2x8xf32>
    %27 = math.exp %26 : vector<2x8xf32>
    %c0_23 = arith.constant 0 : index
    %c0_24 = arith.constant 0 : index
    %28 = vector.load %arg1[%c0_23, %c0_24] : memref<2x8xf32, #tpu.memory_space<vmem>>, vector<2x8xf32>
    %29 = arith.mulf %27, %28 : vector<2x8xf32>
    %30 = arith.addf %21, %29 : vector<2x8xf32>
    %c0_25 = arith.constant 0 : index
    %c0_26 = arith.constant 0 : index
    %31 = vector.load %arg10[%c0_25, %c0_26] : memref<8x32xf32, #tpu.memory_space<vmem>>, vector<8x32xf32>
    %c0_27 = arith.constant 0 : index
    %c0_28 = arith.constant 0 : index
    %32 = vector.load %arg11[%c0_27, %c0_28] : memref<1x32xf32, #tpu.memory_space<vmem>>, vector<1x32xf32>
    %cst_29 = arith.constant dense<0.000000e+00> : vector<2x32xf32>
    %33 = tpu.matmul %30, %31, %cst_29 {dimension_numbers = #tpu.dot_dimension_numbers<[1], [0], [0], [1], [0, 0, 1, 1], [], []>} : vector<2x8xf32>, vector<8x32xf32>, vector<2x32xf32> -> vector<2x32xf32>
    %34 = vector.broadcast %32 : vector<1x32xf32> to vector<2x32xf32>
    %35 = arith.addf %33, %34 : vector<2x32xf32>
    %cst_30 = arith.constant 0.000000e+00 : f32
    %36 = vector.broadcast %cst_30 : f32 to vector<2x32xf32>
    %37 = arith.maximumf %35, %36 : vector<2x32xf32>
    %c0_31 = arith.constant 0 : index
    %c0_32 = arith.constant 0 : index
    %38 = vector.load %arg12[%c0_31, %c0_32] : memref<32x32xf32, #tpu.memory_space<vmem>>, vector<32x32xf32>
    %c0_33 = arith.constant 0 : index
    %c0_34 = arith.constant 0 : index
    %39 = vector.load %arg13[%c0_33, %c0_34] : memref<1x32xf32, #tpu.memory_space<vmem>>, vector<1x32xf32>
    %cst_35 = arith.constant dense<0.000000e+00> : vector<2x32xf32>
    %40 = tpu.matmul %37, %38, %cst_35 {dimension_numbers = #tpu.dot_dimension_numbers<[1], [0], [0], [1], [0, 0, 1, 1], [], []>} : vector<2x32xf32>, vector<32x32xf32>, vector<2x32xf32> -> vector<2x32xf32>
    %41 = vector.broadcast %39 : vector<1x32xf32> to vector<2x32xf32>
    %42 = arith.addf %40, %41 : vector<2x32xf32>
    %cst_36 = arith.constant 0.000000e+00 : f32
    %43 = vector.broadcast %cst_36 : f32 to vector<2x32xf32>
    %44 = arith.maximumf %42, %43 : vector<2x32xf32>
    %c0_37 = arith.constant 0 : index
    %c0_38 = arith.constant 0 : index
    %45 = vector.load %arg14[%c0_37, %c0_38] : memref<32x2048xf32, #tpu.memory_space<vmem>>, vector<32x2048xf32>
    %c0_39 = arith.constant 0 : index
    %c0_40 = arith.constant 0 : index
    %46 = vector.load %arg15[%c0_39, %c0_40] : memref<1x2048xf32, #tpu.memory_space<vmem>>, vector<1x2048xf32>
    %cst_41 = arith.constant dense<0.000000e+00> : vector<2x2048xf32>
    %47 = tpu.matmul %44, %45, %cst_41 {dimension_numbers = #tpu.dot_dimension_numbers<[1], [0], [0], [1], [0, 0, 1, 1], [], []>} : vector<2x32xf32>, vector<32x2048xf32>, vector<2x2048xf32> -> vector<2x2048xf32>
    %48 = vector.broadcast %46 : vector<1x2048xf32> to vector<2x2048xf32>
    %49 = arith.addf %47, %48 : vector<2x2048xf32>
    %cst_42 = arith.constant 0.000000e+00 : f32
    %50 = vector.broadcast %cst_42 : f32 to vector<2x2048xf32>
    %51 = arith.maximumf %49, %50 : vector<2x2048xf32>
    %c0_43 = arith.constant 0 : index
    %c0_44 = arith.constant 0 : index
    %52 = vector.load %arg16[%c0_43, %c0_44] : memref<2x2048xf32, #tpu.memory_space<vmem>>, vector<2x2048xf32>
    tpu.vector_store %arg16[%c0_43, %c0_44], %51 {strides = array<i32>} : memref<2x2048xf32, #tpu.memory_space<vmem>>, vector<2x2048xf32>,
    return
  }
}

module attributes {stable_mosaic.version = 11 : i64} {
  func.func @_conv_stack_kernel(%arg0: memref<32x128xf32, #tpu.memory_space<vmem>>, %arg1: memref<32x32xf32, #tpu.memory_space<vmem>>, %arg2: memref<32x32xf32, #tpu.memory_space<vmem>>, %arg3: memref<128x128xf32, #tpu.memory_space<vmem>>, %arg4: memref<128x128xf32, #tpu.memory_space<vmem>>, %arg5: memref<128x128xf32, #tpu.memory_space<vmem>>, %arg6: memref<1x128xf32, #tpu.memory_space<vmem>>, %arg7: memref<128x64xf32, #tpu.memory_space<vmem>>, %arg8: memref<128x64xf32, #tpu.memory_space<vmem>>, %arg9: memref<128x64xf32, #tpu.memory_space<vmem>>, %arg10: memref<1x64xf32, #tpu.memory_space<vmem>>, %arg11: memref<32x64xf32, #tpu.memory_space<vmem>>) attributes {dimension_semantics = [], scalar_prefetch = 0 : i64, scratch_operands = 0 : i64, tpu.core_type = #tpu.core_type<tc>} {
    %c0 = arith.constant 0 : index
    %c0_0 = arith.constant 0 : index
    %0 = vector.load %arg0[%c0, %c0_0] : memref<32x128xf32, #tpu.memory_space<vmem>>, vector<32x128xf32>
    %c0_1 = arith.constant 0 : index
    %c0_2 = arith.constant 0 : index
    %1 = vector.load %arg1[%c0_1, %c0_2] : memref<32x32xf32, #tpu.memory_space<vmem>>, vector<32x32xf32>
    %c0_3 = arith.constant 0 : index
    %c0_4 = arith.constant 0 : index
    %2 = vector.load %arg2[%c0_3, %c0_4] : memref<32x32xf32, #tpu.memory_space<vmem>>, vector<32x32xf32>
    %c0_5 = arith.constant 0 : index
    %c0_6 = arith.constant 0 : index
    %3 = vector.load %arg3[%c0_5, %c0_6] : memref<128x128xf32, #tpu.memory_space<vmem>>, vector<128x128xf32>
    %c0_7 = arith.constant 0 : index
    %c0_8 = arith.constant 0 : index
    %4 = vector.load %arg4[%c0_7, %c0_8] : memref<128x128xf32, #tpu.memory_space<vmem>>, vector<128x128xf32>
    %c0_9 = arith.constant 0 : index
    %c0_10 = arith.constant 0 : index
    %5 = vector.load %arg5[%c0_9, %c0_10] : memref<128x128xf32, #tpu.memory_space<vmem>>, vector<128x128xf32>
    %c0_11 = arith.constant 0 : index
    %c0_12 = arith.constant 0 : index
    %6 = vector.load %arg6[%c0_11, %c0_12] : memref<1x128xf32, #tpu.memory_space<vmem>>, vector<1x128xf32>
    %cst = arith.constant dense<0.000000e+00> : vector<32x128xf32>
    %7 = tpu.matmul %0, %3, %cst {dimension_numbers = #tpu.dot_dimension_numbers<[1], [0], [0], [1], [0, 0, 1, 1], [], []>} : vector<32x128xf32>, vector<128x128xf32>, vector<32x128xf32> -> vector<32x128xf32>
    %cst_13 = arith.constant dense<0.000000e+00> : vector<32x128xf32>
    %8 = tpu.matmul %0, %4, %cst_13 {dimension_numbers = #tpu.dot_dimension_numbers<[1], [0], [0], [1], [0, 0, 1, 1], [], []>} : vector<32x128xf32>, vector<128x128xf32>, vector<32x128xf32> -> vector<32x128xf32>
    %cst_14 = arith.constant dense<0.000000e+00> : vector<32x128xf32>
    %9 = tpu.matmul %0, %5, %cst_14 {dimension_numbers = #tpu.dot_dimension_numbers<[1], [0], [0], [1], [0, 0, 1, 1], [], []>} : vector<32x128xf32>, vector<128x128xf32>, vector<32x128xf32> -> vector<32x128xf32>
    %cst_15 = arith.constant dense<0.000000e+00> : vector<32x128xf32>
    %10 = tpu.matmul %1, %7, %cst_15 {dimension_numbers = #tpu.dot_dimension_numbers<[1], [0], [0], [1], [0, 0, 1, 1], [], []>} : vector<32x32xf32>, vector<32x128xf32>, vector<32x128xf32> -> vector<32x128xf32>
    %11 = arith.addf %8, %10 : vector<32x128xf32>
    %cst_16 = arith.constant dense<0.000000e+00> : vector<32x128xf32>
    %12 = tpu.matmul %2, %9, %cst_16 {dimension_numbers = #tpu.dot_dimension_numbers<[1], [0], [0], [1], [0, 0, 1, 1], [], []>} : vector<32x32xf32>, vector<32x128xf32>, vector<32x128xf32> -> vector<32x128xf32>
    %13 = arith.addf %11, %12 : vector<32x128xf32>
    %14 = vector.broadcast %6 : vector<1x128xf32> to vector<32x128xf32>
    %15 = arith.addf %13, %14 : vector<32x128xf32>
    %cst_17 = arith.constant 0.000000e+00 : f32
    %16 = vector.broadcast %cst_17 : f32 to vector<32x128xf32>
    %17 = arith.maximumf %15, %16 : vector<32x128xf32>
    %c0_18 = arith.constant 0 : index
    %c0_19 = arith.constant 0 : index
    %18 = vector.load %arg7[%c0_18, %c0_19] : memref<128x64xf32, #tpu.memory_space<vmem>>, vector<128x64xf32>
    %c0_20 = arith.constant 0 : index
    %c0_21 = arith.constant 0 : index
    %19 = vector.load %arg8[%c0_20, %c0_21] : memref<128x64xf32, #tpu.memory_space<vmem>>, vector<128x64xf32>
    %c0_22 = arith.constant 0 : index
    %c0_23 = arith.constant 0 : index
    %20 = vector.load %arg9[%c0_22, %c0_23] : memref<128x64xf32, #tpu.memory_space<vmem>>, vector<128x64xf32>
    %c0_24 = arith.constant 0 : index
    %c0_25 = arith.constant 0 : index
    %21 = vector.load %arg10[%c0_24, %c0_25] : memref<1x64xf32, #tpu.memory_space<vmem>>, vector<1x64xf32>
    %cst_26 = arith.constant dense<0.000000e+00> : vector<32x64xf32>
    %22 = tpu.matmul %17, %18, %cst_26 {dimension_numbers = #tpu.dot_dimension_numbers<[1], [0], [0], [1], [0, 0, 1, 1], [], []>} : vector<32x128xf32>, vector<128x64xf32>, vector<32x64xf32> -> vector<32x64xf32>
    %cst_27 = arith.constant dense<0.000000e+00> : vector<32x64xf32>
    %23 = tpu.matmul %17, %19, %cst_27 {dimension_numbers = #tpu.dot_dimension_numbers<[1], [0], [0], [1], [0, 0, 1, 1], [], []>} : vector<32x128xf32>, vector<128x64xf32>, vector<32x64xf32> -> vector<32x64xf32>
    %cst_28 = arith.constant dense<0.000000e+00> : vector<32x64xf32>
    %24 = tpu.matmul %17, %20, %cst_28 {dimension_numbers = #tpu.dot_dimension_numbers<[1], [0], [0], [1], [0, 0, 1, 1], [], []>} : vector<32x128xf32>, vector<128x64xf32>, vector<32x64xf32> -> vector<32x64xf32>
    %cst_29 = arith.constant dense<0.000000e+00> : vector<32x64xf32>
    %25 = tpu.matmul %1, %22, %cst_29 {dimension_numbers = #tpu.dot_dimension_numbers<[1], [0], [0], [1], [0, 0, 1, 1], [], []>} : vector<32x32xf32>, vector<32x64xf32>, vector<32x64xf32> -> vector<32x64xf32>
    %26 = arith.addf %23, %25 : vector<32x64xf32>
    %cst_30 = arith.constant dense<0.000000e+00> : vector<32x64xf32>
    %27 = tpu.matmul %2, %24, %cst_30 {dimension_numbers = #tpu.dot_dimension_numbers<[1], [0], [0], [1], [0, 0, 1, 1], [], []>} : vector<32x32xf32>, vector<32x64xf32>, vector<32x64xf32> -> vector<32x64xf32>
    %28 = arith.addf %26, %27 : vector<32x64xf32>
    %29 = vector.broadcast %21 : vector<1x64xf32> to vector<32x64xf32>
    %30 = arith.addf %28, %29 : vector<32x64xf32>
    %cst_31 = arith.constant 5.000000e-01 : f32
    %31 = vector.broadcast %cst_31 : f32 to vector<32x64xf32>
    %32 = arith.mulf %31, %30 : vector<32x64xf32>
    %33 = math.tanh %32 : vector<32x64xf32>
    %cst_32 = arith.constant 1.000000e+00 : f32
    %34 = vector.broadcast %cst_32 : f32 to vector<32x64xf32>
    %35 = arith.addf %33, %34 : vector<32x64xf32>
    %cst_33 = arith.constant 5.000000e-01 : f32
    %36 = vector.broadcast %cst_33 : f32 to vector<32x64xf32>
    %37 = arith.mulf %36, %35 : vector<32x64xf32>
    %c0_34 = arith.constant 0 : index
    %c0_35 = arith.constant 0 : index
    %38 = vector.load %arg11[%c0_34, %c0_35] : memref<32x64xf32, #tpu.memory_space<vmem>>, vector<32x64xf32>
    tpu.vector_store %arg11[%c0_34, %c0_35], %37 {strides = array<i32>} : memref<32x64xf32, #tpu.memory_space<vmem>>, vector<32x64xf32>,
    return
  }
}

</mosaic_0001>

<llo_original>
// kernel: tile.23
$region0: #{tile.23}
  #allocation0 [shape = 's32[1]{0}', space=sflag, size = 0x4, scoped, tag = 'scoped memory for tile.23']
  %s0 = inlined_call_operand.vmem [shape: f32[8], index: 0, kind: input, shape index: {}]
  %s1 = inlined_call_operand.vmem [shape: f32[16,8], index: 1, kind: output, shape index: {}]
  // Predicated region
  $region2: #{tile.23} parent=0 // pred_check
    _
  $region3: #{tile.23} parent=0 // pred_check_branch
    %3 = sbr.rel (0) target = $region5
  $region4: #{tile.23} parent=0 // pred_region
    _
  $region5: #{tile.23} parent=0 // pred_fallthru
    _
  %v4 = vld [vmem:[%s0] ss:$0 sm:$0xff]
  %5 = vst [vmem:[%s1] sm:$0xff] %v4
  %s6 = scalar_lea.vmem %s1, 8
  %7 = vst [vmem:[%s6] sm:$0xff] %v4

// kernel: tile.24
$region0: #{tile.24}
  %s0 = inlined_call_operand.vmem [shape: f32[16,8], index: 0, kind: input, shape index: {}]
  %s1 = inlined_call_operand.vmem [shape: f32[1,128], index: 1, kind: output, shape index: {}]
  $region1: #{tile.24} parent=0
    #allocation0 [shape = 'u8[4096]{0}', space=vmem, size = 0x1000, scoped, tag = 'scoped mem for output reshape']
    %v2 = vld [vmem:[%s0] sm:$0x1]
    %vm3 = vcmask 64512
    %4 = vst.msk [vmem:[#allocation0] sm:$0x1] %vm3, %v2
    %s5 = scalar_lea.vmem %s0, 15
    %v6 = vld [vmem:[%s5] sm:$0x1]
    %7 = vrot.lane.b32.xlu0 %v6, 120
    %v8 = vpop.permute.xlu0 %7
    %vm9 = vcmask 1048512
    %10 = vst.msk [vmem:[#allocation0] sm:$0x1] %vm9, %v8
    %s11 = scalar_lea.vmem %s0, 14
    %v12 = vld [vmem:[%s11] sm:$0x1]
    %13 = vrot.lane.b32.xlu0 %v12, 112
    %v14 = vpop.permute.xlu0 %13
    %vm15 = vcmask 982912
    %16 = vst.msk [vmem:[#allocation0] sm:$0x1] %vm15, %v14
    %s17 = scalar_lea.vmem %s0, 13
    %v18 = vld [vmem:[%s17] sm:$0x1]
    %19 = vrot.lane.b32.xlu0 %v18, 104
    %v20 = vpop.permute.xlu0 %19
    %vm21 = vcmask 917312
    %22 = vst.msk [vmem:[#allocation0] sm:$0x1] %vm21, %v20
    %s23 = scalar_lea.vmem %s0, 12
    %v24 = vld [vmem:[%s23] sm:$0x1]
    %25 = vrot.lane.b32.xlu0 %v24, 96
    %v26 = vpop.permute.xlu0 %25
    %vm27 = vcmask 851712
    %28 = vst.msk [vmem:[#allocation0] sm:$0x1] %vm27, %v26
    %s29 = scalar_lea.vmem %s0, 11
    %v30 = vld [vmem:[%s29] sm:$0x1]
    %31 = vrot.lane.b32.xlu0 %v30, 88
    %v32 = vpop.permute.xlu0 %31
    %vm33 = vcmask 786112
    %34 = vst.msk [vmem:[#allocation0] sm:$0x1] %vm33, %v32
    %s35 = scalar_lea.vmem %s0, 10
    %v36 = vld [vmem:[%s35] sm:$0x1]
    %37 = vrot.lane.b32.xlu0 %v36, 80
    %v38 = vpop.permute.xlu0 %37
    %vm39 = vcmask 720512
    %40 = vst.msk [vmem:[#allocation0] sm:$0x1] %vm39, %v38
    %s41 = scalar_lea.vmem %s0, 9
    %v42 = vld [vmem:[%s41] sm:$0x1]
    %43 = vrot.lane.b32.xlu0 %v42, 72
    %v44 = vpop.permute.xlu0 %43
    %vm45 = vcmask 654912
    %46 = vst.msk [vmem:[#allocation0] sm:$0x1] %vm45, %v44
    %s47 = scalar_lea.vmem %s0, 8
    %v48 = vld [vmem:[%s47] sm:$0x1]
    %49 = vrot.lane.b32.xlu0 %v48, 64
    %v50 = vpop.permute.xlu0 %49
    %vm51 = vcmask 589312
    %52 = vst.msk [vmem:[#allocation0] sm:$0x1] %vm51, %v50
    %s53 = scalar_lea.vmem %s0, 7
    %v54 = vld [vmem:[%s53] sm:$0x1]
    %55 = vrot.lane.b32.xlu0 %v54, 56
    %v56 = vpop.permute.xlu0 %55
    %vm57 = vcmask 523712
    %58 = vst.msk [vmem:[#allocation0] sm:$0x1] %vm57, %v56
    %s59 = scalar_lea.vmem %s0, 6
    %v60 = vld [vmem:[%s59] sm:$0x1]
    %61 = vrot.lane.b32.xlu0 %v60, 48
    %v62 = vpop.permute.xlu0 %61
    %vm63 = vcmask 458112
    %64 = vst.msk [vmem:[#allocation0] sm:$0x1] %vm63, %v62
    %s65 = scalar_lea.vmem %s0, 5
    %v66 = vld [vmem:[%s65] sm:$0x1]
    %67 = vrot.lane.b32.xlu0 %v66, 40
    %v68 = vpop.permute.xlu0 %67
    %vm69 = vcmask 392512
    %70 = vst.msk [vmem:[#allocation0] sm:$0x1] %vm69, %v68
    %s71 = scalar_lea.vmem %s0, 4
    %v72 = vld [vmem:[%s71] sm:$0x1]
    %73 = vrot.lane.b32.xlu0 %v72, 32
    %v74 = vpop.permute.xlu0 %73
    %vm75 = vcmask 326912
    %76 = vst.msk [vmem:[#allocation0] sm:$0x1] %vm75, %v74
    %s77 = scalar_lea.vmem %s0, 3
    %v78 = vld [vmem:[%s77] sm:$0x1]
    %79 = vrot.lane.b32.xlu0 %v78, 24
    %v80 = vpop.permute.xlu0 %79
    %vm81 = vcmask 261312
    %82 = vst.msk [vmem:[#allocation0] sm:$0x1] %vm81, %v80
    %s83 = scalar_lea.vmem %s0, 2
    %v84 = vld [vmem:[%s83] sm:$0x1]
    %85 = vrot.lane.b32.xlu0 %v84, 16
    %v86 = vpop.permute.xlu0 %85
    %vm87 = vcmask 195712
    %88 = vst.msk [vmem:[#allocation0] sm:$0x1] %vm87, %v86
    %s89 = scalar_lea.vmem %s0, 1
    %v90 = vld [vmem:[%s89] sm:$0x1]
    %91 = vrot.lane.b32.xlu0 %v90, 8
    %v92 = vpop.permute.xlu0 %91
    %vm93 = vcmask 130112
    %94 = vst.msk [vmem:[#allocation0] sm:$0x1] %vm93, %v92
    %s96 = sshllo.u32 0, 1
    %v98 = vld [vmem:[#allocation0] sm:%s96]
    %s99 = sshllo.u32 0, 1
    %100 = vst [vmem:[%s1] sm:%s99] %v98

// kernel: _lambda_.3
$region0: #{_lambda_.3}
  #allocation0 [shape = 'u32[]', space=smem, size = 0x4, offset = 0x4, fixed_abs, tag = 'smem constant byte address 0x4 - core index']
  #allocation1 [shape = 'u32[144,128]{1,0:T(1,128)}', space=vmem, size = 0x12000, scoped, tag = 'internal scratch']
  %s0 = inlined_call_operand.vmem [shape: f32[32,64], index: 0, kind: input, shape index: {}]
  %s1 = inlined_call_operand.vmem [shape: f32[32,32], index: 1, kind: input, shape index: {}]
  %s2 = inlined_call_operand.vmem [shape: f32[32,32], index: 2, kind: input, shape index: {}]
  %s3 = inlined_call_operand.vmem [shape: f32[64,128], index: 3, kind: input, shape index: {}]
  %s4 = inlined_call_operand.vmem [shape: f32[64,128], index: 4, kind: input, shape index: {}]
  %s5 = inlined_call_operand.vmem [shape: f32[64,128], index: 5, kind: input, shape index: {}]
  %s6 = inlined_call_operand.vmem [shape: f32[1,128], index: 6, kind: input, shape index: {}]
  %s7 = inlined_call_operand.vmem [shape: f32[128,128], index: 7, kind: input, shape index: {}]
  %s8 = inlined_call_operand.vmem [shape: f32[128,128], index: 8, kind: input, shape index: {}]
  %s9 = inlined_call_operand.vmem [shape: f32[128,128], index: 9, kind: input, shape index: {}]
  %s10 = inlined_call_operand.vmem [shape: f32[1,128], index: 10, kind: input, shape index: {}]
  %s11 = inlined_call_operand.vmem [shape: f32[32,128], index: 11, kind: output, shape index: {}]
  %s12 = sld [smem:[#allocation0]]
  $region54: #{_lambda_.3} parent=0
    _
  %s14 = ssub.s32 1, %s12
  %s15 = scalar_select 0, %s14, %s12
  // Predicated region
  $region2: #{_lambda_.3} parent=0 // pred_check
    _
  $region3: #{_lambda_.3} parent=0 // pred_check_branch
    %17 = sbr.rel (0) target = $region5
  $region4: #{_lambda_.3} parent=0 // pred_region
    _
  $region5: #{_lambda_.3} parent=0 // pred_fallthru
    _
  // Predicated region
  $region6: #{_lambda_.3} parent=0 // pred_check
    _
  $region7: #{_lambda_.3} parent=0 // pred_check_branch
    %19 = sbr.rel (0) target = $region9
  $region8: #{_lambda_.3} parent=0 // pred_region
    _
  $region9: #{_lambda_.3} parent=0 // pred_fallthru
    _
  // Predicated region
  $region10: #{_lambda_.3} parent=0 // pred_check
    _
  $region11: #{_lambda_.3} parent=0 // pred_check_branch
    %21 = sbr.rel (0) target = $region13
  $region12: #{_lambda_.3} parent=0 // pred_region
    _
  $region13: #{_lambda_.3} parent=0 // pred_fallthru
    _
  // Predicated region
  $region14: #{_lambda_.3} parent=0 // pred_check
    _
  $region15: #{_lambda_.3} parent=0 // pred_check_branch
    %23 = sbr.rel (0) target = $region17
  $region16: #{_lambda_.3} parent=0 // pred_region
    _
  $region17: #{_lambda_.3} parent=0 // pred_fallthru
    _
  // Predicated region
  $region18: #{_lambda_.3} parent=0 // pred_check
    _
  $region19: #{_lambda_.3} parent=0 // pred_check_branch
    %25 = sbr.rel (0) target = $region21
  $region20: #{_lambda_.3} parent=0 // pred_region
    _
  $region21: #{_lambda_.3} parent=0 // pred_fallthru
    _
  // Predicated region
  $region22: #{_lambda_.3} parent=0 // pred_check
    _
  $region23: #{_lambda_.3} parent=0 // pred_check_branch
    %27 = sbr.rel (0) target = $region25
  $region24: #{_lambda_.3} parent=0 // pred_region
    _
  $region25: #{_lambda_.3} parent=0 // pred_fallthru
    _
  // Predicated region
  $region26: #{_lambda_.3} parent=0 // pred_check
    _
  $region27: #{_lambda_.3} parent=0 // pred_check_branch
    %29 = sbr.rel (0) target = $region29
  $region28: #{_lambda_.3} parent=0 // pred_region
    _
  $region29: #{_lambda_.3} parent=0 // pred_fallthru
    _
  // Predicated region
  $region30: #{_lambda_.3} parent=0 // pred_check
    _
  $region31: #{_lambda_.3} parent=0 // pred_check_branch
    %31 = sbr.rel (0) target = $region33
  $region32: #{_lambda_.3} parent=0 // pred_region
    _
  $region33: #{_lambda_.3} parent=0 // pred_fallthru
    _
  // Predicated region
  $region34: #{_lambda_.3} parent=0 // pred_check
    _
  $region35: #{_lambda_.3} parent=0 // pred_check_branch
    %33 = sbr.rel (0) target = $region37
  $region36: #{_lambda_.3} parent=0 // pred_region
    _
  $region37: #{_lambda_.3} parent=0 // pred_fallthru
    _
  // Predicated region
  $region38: #{_lambda_.3} parent=0 // pred_check
    _
  $region39: #{_lambda_.3} parent=0 // pred_check_branch
    %35 = sbr.rel (0) target = $region41
  $region40: #{_lambda_.3} parent=0 // pred_region
    _
  $region41: #{_lambda_.3} parent=0 // pred_fallthru
    _
  // Predicated region
  $region42: #{_lambda_.3} parent=0 // pred_check
    _
  $region43: #{_lambda_.3} parent=0 // pred_check_branch
    %37 = sbr.rel (0) target = $region45
  $region44: #{_lambda_.3} parent=0 // pred_region
    _
  $region45: #{_lambda_.3} parent=0 // pred_fallthru
    _
  %v38 = vld [vmem:[%s0] sm:$0xff]
  %v39 = vld [vmem:[%s0 + $0x8] sm:$0xff]
  %v40 = vld [vmem:[%s0 + $0x10] sm:$0xff]
  %v41 = vld [vmem:[%s0 + $0x18] sm:$0xff]
  %v42 = vld [vmem:[%s1] sm:$0xff]
  %v43 = vld [vmem:[%s1 + $0x8] sm:$0xff]
  %v44 = vld [vmem:[%s1 + $0x10] sm:$0xff]
  %v45 = vld [vmem:[%s1 + $0x18] sm:$0xff]
  %v46 = vld [vmem:[%s2] sm:$0xff]
  %v47 = vld [vmem:[%s2 + $0x8] sm:$0xff]
  %v48 = vld [vmem:[%s2 + $0x10] sm:$0xff]
  %v49 = vld [vmem:[%s2 + $0x18] sm:$0xff]
  %v50 = vld [vmem:[%s3] sm:$0xff]
  %v51 = vld [vmem:[%s3 + $0x8] sm:$0xff]
  %v52 = vld [vmem:[%s3 + $0x10] sm:$0xff]
  %v53 = vld [vmem:[%s3 + $0x18] sm:$0xff]
  %v54 = vld [vmem:[%s3 + $0x20] sm:$0xff]
  %v55 = vld [vmem:[%s3 + $0x28] sm:$0xff]
  %v56 = vld [vmem:[%s3 + $0x30] sm:$0xff]
  %v57 = vld [vmem:[%s3 + $0x38] sm:$0xff]
  %v58 = vld [vmem:[%s4] sm:$0xff]
  %v59 = vld [vmem:[%s4 + $0x8] sm:$0xff]
  %v60 = vld [vmem:[%s4 + $0x10] sm:$0xff]
  %v61 = vld [vmem:[%s4 + $0x18] sm:$0xff]
  %v62 = vld [vmem:[%s4 + $0x20] sm:$0xff]
  %v63 = vld [vmem:[%s4 + $0x28] sm:$0xff]
  %v64 = vld [vmem:[%s4 + $0x30] sm:$0xff]
  %v65 = vld [vmem:[%s4 + $0x38] sm:$0xff]
  %v66 = vld [vmem:[%s5] sm:$0xff]
  %v67 = vld [vmem:[%s5 + $0x8] sm:$0xff]
  %v68 = vld [vmem:[%s5 + $0x10] sm:$0xff]
  %v69 = vld [vmem:[%s5 + $0x18] sm:$0xff]
  %v70 = vld [vmem:[%s5 + $0x20] sm:$0xff]
  %v71 = vld [vmem:[%s5 + $0x28] sm:$0xff]
  %v72 = vld [vmem:[%s5 + $0x30] sm:$0xff]
  %v73 = vld [vmem:[%s5 + $0x38] sm:$0xff]
  %v74 = vld [vmem:[%s6] sm:$0x1]
  %vm75 = vcmask 523264
  %v77 = vsel %vm75, %v38, 0
  %v80 = vsel %vm75, %v39, 0
  %v83 = vsel %vm75, %v40, 0
  %v86 = vsel %vm75, %v41, 0
  %88 = vmatprep.subr.mxu0 0.0
  %89 = vmatpush1.msra.mxu0 %v50
  %90 = vmatprep.subr.mxu0 0.0
  %91 = vmatpush1.msra.mxu0 %v51
  %92 = vmatprep.subr.mxu0 0.0
  %93 = vmatpush1.msra.mxu0 %v52
  %94 = vmatprep.subr.mxu0 0.0
  %95 = vmatpush1.msra.mxu0 %v53
  %96 = vmatprep.subr.mxu0 0.0
  %97 = vmatpush1.msra.mxu0 %v54
  %98 = vmatprep.subr.mxu0 0.0
  %99 = vmatpush1.msra.mxu0 %v55
  %100 = vmatprep.subr.mxu0 0.0
  %101 = vmatpush1.msra.mxu0 %v56
  %102 = vmatprep.subr.mxu0 0.0
  %103 = vmatpush1.msra.mxu0 %v57
  %104 = vmatprep.subr.mxu0 0.0
  %105 = vmatpush1.msra.mxu0 0.0
  %106 = vmatprep.subr.mxu0 0.0
  %107 = vmatpush1.msra.mxu0 0.0
  %108 = vmatprep.subr.mxu0 0.0
  %109 = vmatpush1.msra.mxu0 0.0
  %110 = vmatprep.subr.mxu0 0.0
  %111 = vmatpush1.msra.mxu0 0.0
  %112 = vmatprep.subr.mxu0 0.0
  %113 = vmatpush1.msra.mxu0 0.0
  %114 = vmatprep.subr.mxu0 0.0
  %115 = vmatpush1.msra.mxu0 0.0
  %116 = vmatprep.subr.mxu0 0.0
  %117 = vmatpush1.msra.mxu0 0.0
  %118 = vmatprep.subr.mxu0 0.0
  %119 = vmatpush1.msra.mxu0 0.0
  %120 = vmatprep.subr.mxu0 0.0
  %121 = vmatpush1.msra.mxu0 0.0
  %122 = vmatprep.subr.mxu0 0.0
  %123 = vmatpush1.msra.mxu0 0.0
  %124 = vmatprep.subr.mxu0 0.0
  %125 = vmatpush1.msra.mxu0 0.0
  %126 = vmatprep.subr.mxu0 0.0
  %127 = vmatpush1.msra.mxu0 0.0
  %128 = vmatprep.subr.mxu0 0.0
  %129 = vmatpush1.msra.mxu0 0.0
  %130 = vmatprep.subr.mxu0 0.0
  %131 = vmatpush1.msra.mxu0 0.0
  %132 = vmatprep.subr.mxu0 0.0
  %133 = vmatpush1.msra.mxu0 0.0
  %134 = vmatprep.subr.mxu0 0.0
  %135 = vmatpush1.msra.mxu0 0.0
  %136 = vmatprep.subr.mxu0 0.0
  %137 = vmatpush1.msra.mxu0 0.0
  %138 = vmatprep.subr.mxu0 0.0
  %139 = vmatpush1.msra.mxu0 0.0
  %140 = vmatprep.subr.mxu0 0.0
  %141 = vmatpush1.msra.mxu0 0.0
  %142 = vmatprep.subr.mxu0 0.0
  %143 = vmatpush1.msra.mxu0 0.0
  %144 = vmatprep.subr.mxu0 0.0
  %145 = vmatpush1.msra.mxu0 0.0
  %146 = vmatprep.subr.mxu0 0.0
  %147 = vmatpush1.msra.mxu0 0.0
  %148 = vmatprep.subr.mxu0 0.0
  %149 = vmatpush1.msra.mxu0 0.0
  %150 = vmatprep.subr.mxu0 0.0
  %151 = vmatpush1.msra.mxu0 0.0
  %152 = vmatprep.mubr.f32.mxu0 0.0
  %153 = vmatmul.mubr.f32.gmra.mrb[0].mxu0 %v77
  %v154 = vpop.f32.mrb[0].mxu0
  %v155 = vadd.f32 0.0, %v154
  %v156 = vpop.f32.mrb[0].mxu0
  %157 = vmatprep.mubr.f32.mxu0 0.0
  %158 = vmatmul.mubr.f32.gmra.mrb[0].mxu0 %v80
  %v159 = vpop.f32.mrb[0].mxu0
  %v160 = vadd.f32 0.0, %v159
  %v161 = vpop.f32.mrb[0].mxu0
  %162 = vmatprep.mubr.f32.mxu0 0.0
  %163 = vmatmul.mubr.f32.gmra.mrb[0].mxu0 %v83
  %v164 = vpop.f32.mrb[0].mxu0
  %v165 = vadd.f32 0.0, %v164
  %v166 = vpop.f32.mrb[0].mxu0
  %167 = vmatprep.mubr.f32.mxu0 0.0
  %168 = vmatmul.mubr.f32.gmra.mrb[0].mxu0 %v86
  %v169 = vpop.f32.mrb[0].mxu0
  %v170 = vadd.f32 0.0, %v169
  %v171 = vpop.f32.mrb[0].mxu0
  %172 = vdwg.mxu0
  %173 = vmatprep.subr.mxu0 0.0
  %174 = vmatpush1.msra.mxu0 %v66
  %175 = vmatprep.subr.mxu0 0.0
  %176 = vmatpush1.msra.mxu0 %v67
  %177 = vmatprep.subr.mxu0 0.0
  %178 = vmatpush1.msra.mxu0 %v68
  %179 = vmatprep.subr.mxu0 0.0
  %180 = vmatpush1.msra.mxu0 %v69
  %181 = vmatprep.subr.mxu0 0.0
  %182 = vmatpush1.msra.mxu0 %v70
  %183 = vmatprep.subr.mxu0 0.0
  %184 = vmatpush1.msra.mxu0 %v71
  %185 = vmatprep.subr.mxu0 0.0
  %186 = vmatpush1.msra.mxu0 %v72
  %187 = vmatprep.subr.mxu0 0.0
  %188 = vmatpush1.msra.mxu0 %v73
  %189 = vmatprep.subr.mxu0 0.0
  %190 = vmatpush1.msra.mxu0 0.0
  %191 = vmatprep.subr.mxu0 0.0
  %192 = vmatpush1.msra.mxu0 0.0
  %193 = vmatprep.subr.mxu0 0.0
  %194 = vmatpush1.msra.mxu0 0.0
  %195 = vmatprep.subr.mxu0 0.0
  %196 = vmatpush1.msra.mxu0 0.0
  %197 = vmatprep.subr.mxu0 0.0
  %198 = vmatpush1.msra.mxu0 0.0
  %199 = vmatprep.subr.mxu0 0.0
  %200 = vmatpush1.msra.mxu0 0.0
  %201 = vmatprep.subr.mxu0 0.0
  %202 = vmatpush1.msra.mxu0 0.0
  %203 = vmatprep.subr.mxu0 0.0
  %204 = vmatpush1.msra.mxu0 0.0
  %205 = vmatprep.subr.mxu0 0.0
  %206 = vmatpush1.msra.mxu0 0.0
  %207 = vmatprep.subr.mxu0 0.0
  %208 = vmatpush1.msra.mxu0 0.0
  %209 = vmatprep.subr.mxu0 0.0
  %210 = vmatpush1.msra.mxu0 0.0
  %211 = vmatprep.subr.mxu0 0.0
  %212 = vmatpush1.msra.mxu0 0.0
  %213 = vmatprep.subr.mxu0 0.0
  %214 = vmatpush1.msra.mxu0 0.0
  %215 = vmatprep.subr.mxu0 0.0
  %216 = vmatpush1.msra.mxu0 0.0
  %217 = vmatprep.subr.mxu0 0.0
  %218 = vmatpush1.msra.mxu0 0.0
  %219 = vmatprep.subr.mxu0 0.0
  %220 = vmatpush1.msra.mxu0 0.0
  %221 = vmatprep.subr.mxu0 0.0
  %222 = vmatpush1.msra.mxu0 0.0
  %223 = vmatprep.subr.mxu0 0.0
  %224 = vmatpush1.msra.mxu0 0.0
  %225 = vmatprep.subr.mxu0 0.0
  %226 = vmatpush1.msra.mxu0 0.0
  %227 = vmatprep.subr.mxu0 0.0
  %228 = vmatpush1.msra.mxu0 0.0
  %229 = vmatprep.subr.mxu0 0.0
  %230 = vmatpush1.msra.mxu0 0.0
  %231 = vmatprep.subr.mxu0 0.0
  %232 = vmatpush1.msra.mxu0 0.0
  %233 = vmatprep.subr.mxu0 0.0
  %234 = vmatpush1.msra.mxu0 0.0
  %235 = vmatprep.subr.mxu0 0.0
  %236 = vmatpush1.msra.mxu0 0.0
  %237 = vmatprep.mubr.f32.mxu0 0.0
  %238 = vmatmul.mubr.f32.gmra.mrb[0].mxu0 %v77
  %v239 = vpop.f32.mrb[0].mxu0
  %v240 = vadd.f32 0.0, %v239
  %v241 = vpop.f32.mrb[0].mxu0
  %242 = vmatprep.mubr.f32.mxu0 0.0
  %243 = vmatmul.mubr.f32.gmra.mrb[0].mxu0 %v80
  %v244 = vpop.f32.mrb[0].mxu0
  %v245 = vadd.f32 0.0, %v244
  %v246 = vpop.f32.mrb[0].mxu0
  %247 = vmatprep.mubr.f32.mxu0 0.0
  %248 = vmatmul.mubr.f32.gmra.mrb[0].mxu0 %v83
  %v249 = vpop.f32.mrb[0].mxu0
  %v250 = vadd.f32 0.0, %v249
  %v251 = vpop.f32.mrb[0].mxu0
  %252 = vmatprep.mubr.f32.mxu0 0.0
  %253 = vmatmul.mubr.f32.gmra.mrb[0].mxu0 %v86
  %v254 = vpop.f32.mrb[0].mxu0
  %v255 = vadd.f32 0.0, %v254
  %v256 = vpop.f32.mrb[0].mxu0
  %257 = vdwg.mxu0
  %vm258 = vcmask 261120
  %v260 = vsel %vm258, %v42, 0
  %v263 = vsel %vm258, %v43, 0
  %v266 = vsel %vm258, %v44, 0
  %v269 = vsel %vm258, %v45, 0
  %271 = vmatprep.subr.mxu0 0.0
  %272 = vmatpush1.msra.mxu0 %v155
  %273 = vmatprep.subr.mxu0 0.0
  %274 = vmatpush1.msra.mxu0 %v160
  %275 = vmatprep.subr.mxu0 0.0
  %276 = vmatpush1.msra.mxu0 %v165
  %277 = vmatprep.subr.mxu0 0.0
  %278 = vmatpush1.msra.mxu0 %v170
  %279 = vmatprep.subr.mxu0 0.0
  %280 = vmatpush1.msra.mxu0 0.0
  %281 = vmatprep.subr.mxu0 0.0
  %282 = vmatpush1.msra.mxu0 0.0
  %283 = vmatprep.subr.mxu0 0.0
  %284 = vmatpush1.msra.mxu0 0.0
  %285 = vmatprep.subr.mxu0 0.0
  %286 = vmatpush1.msra.mxu0 0.0
  %287 = vmatprep.subr.mxu0 0.0
  %288 = vmatpush1.msra.mxu0 0.0
  %289 = vmatprep.subr.mxu0 0.0
  %290 = vmatpush1.msra.mxu0 0.0
  %291 = vmatprep.subr.mxu0 0.0
  %292 = vmatpush1.msra.mxu0 0.0
  %293 = vmatprep.subr.mxu0 0.0
  %294 = vmatpush1.msra.mxu0 0.0
  %295 = vmatprep.subr.mxu0 0.0
  %296 = vmatpush1.msra.mxu0 0.0
  %297 = vmatprep.subr.mxu0 0.0
  %298 = vmatpush1.msra.mxu0 0.0
  %299 = vmatprep.subr.mxu0 0.0
  %300 = vmatpush1.msra.mxu0 0.0
  %301 = vmatprep.subr.mxu0 0.0
  %302 = vmatpush1.msra.mxu0 0.0
  %303 = vmatprep.subr.mxu0 0.0
  %304 = vmatpush1.msra.mxu0 0.0
  %305 = vmatprep.subr.mxu0 0.0
  %306 = vmatpush1.msra.mxu0 0.0
  %307 = vmatprep.subr.mxu0 0.0
  %308 = vmatpush1.msra.mxu0 0.0
  %309 = vmatprep.subr.mxu0 0.0
  %310 = vmatpush1.msra.mxu0 0.0
  %311 = vmatprep.subr.mxu0 0.0
  %312 = vmatpush1.msra.mxu0 0.0
  %313 = vmatprep.subr.mxu0 0.0
  %314 = vmatpush1.msra.mxu0 0.0
  %315 = vmatprep.subr.mxu0 0.0
  %316 = vmatpush1.msra.mxu0 0.0
  %317 = vmatprep.subr.mxu0 0.0
  %318 = vmatpush1.msra.mxu0 0.0
  %319 = vmatprep.subr.mxu0 0.0
  %320 = vmatpush1.msra.mxu0 0.0
  %321 = vmatprep.subr.mxu0 0.0
  %322 = vmatpush1.msra.mxu0 0.0
  %323 = vmatprep.subr.mxu0 0.0
  %324 = vmatpush1.msra.mxu0 0.0
  %325 = vmatprep.subr.mxu0 0.0
  %326 = vmatpush1.msra.mxu0 0.0
  %327 = vmatprep.subr.mxu0 0.0
  %328 = vmatpush1.msra.mxu0 0.0
  %329 = vmatprep.subr.mxu0 0.0
  %330 = vmatpush1.msra.mxu0 0.0
  %331 = vmatprep.subr.mxu0 0.0
  %332 = vmatpush1.msra.mxu0 0.0
  %333 = vmatprep.subr.mxu0 0.0
  %334 = vmatpush1.msra.mxu0 0.0
  %335 = vmatprep.mubr.f32.mxu0 0.0
  %336 = vmatmul.mubr.f32.gmra.mrb[0].mxu0 %v260
  %v337 = vpop.f32.mrb[0].mxu0
  %v338 = vadd.f32 0.0, %v337
  %v339 = vpop.f32.mrb[0].mxu0
  %340 = vmatprep.mubr.f32.mxu0 0.0
  %341 = vmatmul.mubr.f32.gmra.mrb[0].mxu0 %v263
  %v342 = vpop.f32.mrb[0].mxu0
  %v343 = vadd.f32 0.0, %v342
  %v344 = vpop.f32.mrb[0].mxu0
  %345 = vmatprep.mubr.f32.mxu0 0.0
  %346 = vmatmul.mubr.f32.gmra.mrb[0].mxu0 %v266
  %v347 = vpop.f32.mrb[0].mxu0
  %v348 = vadd.f32 0.0, %v347
  %v349 = vpop.f32.mrb[0].mxu0
  %350 = vmatprep.mubr.f32.mxu0 0.0
  %351 = vmatmul.mubr.f32.gmra.mrb[0].mxu0 %v269
  %v352 = vpop.f32.mrb[0].mxu0
  %v353 = vadd.f32 0.0, %v352
  %v354 = vpop.f32.mrb[0].mxu0
  %355 = vdwg.mxu0
  %356 = vmatprep.subr.mxu0 0.0
  %357 = vmatpush1.msra.mxu0 %v58
  %358 = vmatprep.subr.mxu0 0.0
  %359 = vmatpush1.msra.mxu0 %v59
  %360 = vmatprep.subr.mxu0 0.0
  %361 = vmatpush1.msra.mxu0 %v60
  %362 = vmatprep.subr.mxu0 0.0
  %363 = vmatpush1.msra.mxu0 %v61
  %364 = vmatprep.subr.mxu0 0.0
  %365 = vmatpush1.msra.mxu0 %v62
  %366 = vmatprep.subr.mxu0 0.0
  %367 = vmatpush1.msra.mxu0 %v63
  %368 = vmatprep.subr.mxu0 0.0
  %369 = vmatpush1.msra.mxu0 %v64
  %370 = vmatprep.subr.mxu0 0.0
  %371 = vmatpush1.msra.mxu0 %v65
  %372 = vmatprep.subr.mxu0 0.0
  %373 = vmatpush1.msra.mxu0 0.0
  %374 = vmatprep.subr.mxu0 0.0
  %375 = vmatpush1.msra.mxu0 0.0
  %376 = vmatprep.subr.mxu0 0.0
  %377 = vmatpush1.msra.mxu0 0.0
  %378 = vmatprep.subr.mxu0 0.0
  %379 = vmatpush1.msra.mxu0 0.0
  %380 = vmatprep.subr.mxu0 0.0
  %381 = vmatpush1.msra.mxu0 0.0
  %382 = vmatprep.subr.mxu0 0.0
  %383 = vmatpush1.msra.mxu0 0.0
  %384 = vmatprep.subr.mxu0 0.0
  %385 = vmatpush1.msra.mxu0 0.0
  %386 = vmatprep.subr.mxu0 0.0
  %387 = vmatpush1.msra.mxu0 0.0
  %388 = vmatprep.subr.mxu0 0.0
  %389 = vmatpush1.msra.mxu0 0.0
  %390 = vmatprep.subr.mxu0 0.0
  %391 = vmatpush1.msra.mxu0 0.0
  %392 = vmatprep.subr.mxu0 0.0
  %393 = vmatpush1.msra.mxu0 0.0
  %394 = vmatprep.subr.mxu0 0.0
  %395 = vmatpush1.msra.mxu0 0.0
  %396 = vmatprep.subr.mxu0 0.0
  %397 = vmatpush1.msra.mxu0 0.0
  %398 = vmatprep.subr.mxu0 0.0
  %399 = vmatpush1.msra.mxu0 0.0
  %400 = vmatprep.subr.mxu0 0.0
  %401 = vmatpush1.msra.mxu0 0.0
  %402 = vmatprep.subr.mxu0 0.0
  %403 = vmatpush1.msra.mxu0 0.0
  %404 = vmatprep.subr.mxu0 0.0
  %405 = vmatpush1.msra.mxu0 0.0
  %406 = vmatprep.subr.mxu0 0.0
  %407 = vmatpush1.msra.mxu0 0.0
  %408 = vmatprep.subr.mxu0 0.0
  %409 = vmatpush1.msra.mxu0 0.0
  %410 = vmatprep.subr.mxu0 0.0
  %411 = vmatpush1.msra.mxu0 0.0
  %412 = vmatprep.subr.mxu0 0.0
  %413 = vmatpush1.msra.mxu0 0.0
  %414 = vmatprep.subr.mxu0 0.0
  %415 = vmatpush1.msra.mxu0 0.0
  %416 = vmatprep.subr.mxu0 0.0
  %417 = vmatpush1.msra.mxu0 0.0
  %418 = vmatprep.subr.mxu0 0.0
  %419 = vmatpush1.msra.mxu0 0.0
  %420 = vmatprep.mubr.f32.mxu0 0.0
  %421 = vmatmul.mubr.f32.gmra.mrb[0].mxu0 %v77
  %v422 = vpop.f32.mrb[0].mxu0
  %v423 = vadd.f32 %v338, %v422
  %v424 = vpop.f32.mrb[0].mxu0
  %425 = vmatprep.mubr.f32.mxu0 0.0
  %426 = vmatmul.mubr.f32.gmra.mrb[0].mxu0 %v80
  %v427 = vpop.f32.mrb[0].mxu0
  %v428 = vadd.f32 %v343, %v427
  %v429 = vpop.f32.mrb[0].mxu0
  %430 = vmatprep.mubr.f32.mxu0 0.0
  %431 = vmatmul.mubr.f32.gmra.mrb[0].mxu0 %v83
  %v432 = vpop.f32.mrb[0].mxu0
  %v433 = vadd.f32 %v348, %v432
  %v434 = vpop.f32.mrb[0].mxu0
  %435 = vmatprep.mubr.f32.mxu0 0.0
  %436 = vmatmul.mubr.f32.gmra.mrb[0].mxu0 %v86
  %v437 = vpop.f32.mrb[0].mxu0
  %v438 = vadd.f32 %v353, %v437
  %v439 = vpop.f32.mrb[0].mxu0
  %440 = vdwg.mxu0
  %v442 = vsel %vm258, %v46, 0
  %v445 = vsel %vm258, %v47, 0
  %v448 = vsel %vm258, %v48, 0
  %v451 = vsel %vm258, %v49, 0
  %453 = vmatprep.subr.mxu0 0.0
  %454 = vmatpush1.msra.mxu0 %v240
  %455 = vmatprep.subr.mxu0 0.0
  %456 = vmatpush1.msra.mxu0 %v245
  %457 = vmatprep.subr.mxu0 0.0
  %458 = vmatpush1.msra.mxu0 %v250
  %459 = vmatprep.subr.mxu0 0.0
  %460 = vmatpush1.msra.mxu0 %v255
  %461 = vmatprep.subr.mxu0 0.0
  %462 = vmatpush1.msra.mxu0 0.0
  %463 = vmatprep.subr.mxu0 0.0
  %464 = vmatpush1.msra.mxu0 0.0
  %465 = vmatprep.subr.mxu0 0.0
  %466 = vmatpush1.msra.mxu0 0.0
  %467 = vmatprep.subr.mxu0 0.0
  %468 = vmatpush1.msra.mxu0 0.0
  %469 = vmatprep.subr.mxu0 0.0
  %470 = vmatpush1.msra.mxu0 0.0
  %471 = vmatprep.subr.mxu0 0.0
  %472 = vmatpush1.msra.mxu0 0.0
  %473 = vmatprep.subr.mxu0 0.0
  %474 = vmatpush1.msra.mxu0 0.0
  %475 = vmatprep.subr.mxu0 0.0
  %476 = vmatpush1.msra.mxu0 0.0
  %477 = vmatprep.subr.mxu0 0.0
  %478 = vmatpush1.msra.mxu0 0.0
  %479 = vmatprep.subr.mxu0 0.0
  %480 = vmatpush1.msra.mxu0 0.0
  %481 = vmatprep.subr.mxu0 0.0
  %482 = vmatpush1.msra.mxu0 0.0
  %483 = vmatprep.subr.mxu0 0.0
  %484 = vmatpush1.msra.mxu0 0.0
  %485 = vmatprep.subr.mxu0 0.0
  %486 = vmatpush1.msra.mxu0 0.0
  %487 = vmatprep.subr.mxu0 0.0
  %488 = vmatpush1.msra.mxu0 0.0
  %489 = vmatprep.subr.mxu0 0.0
  %490 = vmatpush1.msra.mxu0 0.0
  %491 = vmatprep.subr.mxu0 0.0
  %492 = vmatpush1.msra.mxu0 0.0
  %493 = vmatprep.subr.mxu0 0.0
  %494 = vmatpush1.msra.mxu0 0.0
  %495 = vmatprep.subr.mxu0 0.0
  %496 = vmatpush1.msra.mxu0 0.0
  %497 = vmatprep.subr.mxu0 0.0
  %498 = vmatpush1.msra.mxu0 0.0
  %499 = vmatprep.subr.mxu0 0.0
  %500 = vmatpush1.msra.mxu0 0.0
  %501 = vmatprep.subr.mxu0 0.0
  %502 = vmatpush1.msra.mxu0 0.0
  %503 = vmatprep.subr.mxu0 0.0
  %504 = vmatpush1.msra.mxu0 0.0
  %505 = vmatprep.subr.mxu0 0.0
  %506 = vmatpush1.msra.mxu0 0.0
  %507 = vmatprep.subr.mxu0 0.0
  %508 = vmatpush1.msra.mxu0 0.0
  %509 = vmatprep.subr.mxu0 0.0
  %510 = vmatpush1.msra.mxu0 0.0
  %511 = vmatprep.subr.mxu0 0.0
  %512 = vmatpush1.msra.mxu0 0.0
  %513 = vmatprep.subr.mxu0 0.0
  %514 = vmatpush1.msra.mxu0 0.0
  %515 = vmatprep.subr.mxu0 0.0
  %516 = vmatpush1.msra.mxu0 0.0
  %517 = vmatprep.mubr.f32.mxu0 0.0
  %518 = vmatmul.mubr.f32.gmra.mrb[0].mxu0 %v442
  %v519 = vpop.f32.mrb[0].mxu0
  %v520 = vadd.f32 0.0, %v519
  %v521 = vpop.f32.mrb[0].mxu0
  %522 = vmatprep.mubr.f32.mxu0 0.0
  %523 = vmatmul.mubr.f32.gmra.mrb[0].mxu0 %v445
  %v524 = vpop.f32.mrb[0].mxu0
  %v525 = vadd.f32 0.0, %v524
  %v526 = vpop.f32.mrb[0].mxu0
  %527 = vmatprep.mubr.f32.mxu0 0.0
  %528 = vmatmul.mubr.f32.gmra.mrb[0].mxu0 %v448
  %v529 = vpop.f32.mrb[0].mxu0
  %v530 = vadd.f32 0.0, %v529
  %v531 = vpop.f32.mrb[0].mxu0
  %532 = vmatprep.mubr.f32.mxu0 0.0
  %533 = vmatmul.mubr.f32.gmra.mrb[0].mxu0 %v451
  %v534 = vpop.f32.mrb[0].mxu0
  %v535 = vadd.f32 0.0, %v534
  %v536 = vpop.f32.mrb[0].mxu0
  %537 = vdwg.mxu0
  %v538 = vadd.f32 %v423, %v520
  %v539 = vadd.f32 %v428, %v525
  %v540 = vadd.f32 %v433, %v530
  %v541 = vadd.f32 %v438, %v535
  %v543 = vlaneseq
  %v544 = vshrl.u32 %v543, 7
  %v545 = vsub.s32 0, %v544
  %v546 = vrot.slane %v74, %v545
  %v548 = vadd.f32 %v538, %v546
  %v549 = vadd.f32 %v539, %v546
  %v550 = vadd.f32 %v540, %v546
  %v551 = vadd.f32 %v541, %v546
  %v552 = vmax.f32 %v548, 0.0
  %v553 = vmax.f32 %v549, 0.0
  %v554 = vmax.f32 %v550, 0.0
  %v555 = vmax.f32 %v551, 0.0
  %v556 = vld [vmem:[%s7] sm:$0xff]
  %v557 = vld [vmem:[%s7 + $0x8] sm:$0xff]
  %v558 = vld [vmem:[%s7 + $0x10] sm:$0xff]
  %v559 = vld [vmem:[%s7 + $0x18] sm:$0xff]
  %v560 = vld [vmem:[%s7 + $0x20] sm:$0xff]
  %v561 = vld [vmem:[%s7 + $0x28] sm:$0xff]
  %v562 = vld [vmem:[%s7 + $0x30] sm:$0xff]
  %v563 = vld [vmem:[%s7 + $0x38] sm:$0xff]
  %v564 = vld [vmem:[%s7 + $0x40] sm:$0xff]
  %v565 = vld [vmem:[%s7 + $0x48] sm:$0xff]
  %v566 = vld [vmem:[%s7 + $0x50] sm:$0xff]
  %v567 = vld [vmem:[%s7 + $0x58] sm:$0xff]
  %v568 = vld [vmem:[%s7 + $0x60] sm:$0xff]
  %v569 = vld [vmem:[%s7 + $0x68] sm:$0xff]
  %v570 = vld [vmem:[%s7 + $0x70] sm:$0xff]
  %v571 = vld [vmem:[%s7 + $0x78] sm:$0xff]
  %v572 = vld [vmem:[%s8] sm:$0xff]
  %v573 = vld [vmem:[%s8 + $0x8] sm:$0xff]
  %v574 = vld [vmem:[%s8 + $0x10] sm:$0xff]
  %v575 = vld [vmem:[%s8 + $0x18] sm:$0xff]
  %v576 = vld [vmem:[%s8 + $0x20] sm:$0xff]
  %v577 = vld [vmem:[%s8 + $0x28] sm:$0xff]
  %v578 = vld [vmem:[%s8 + $0x30] sm:$0xff]
  %v579 = vld [vmem:[%s8 + $0x38] sm:$0xff]
  %v580 = vld [vmem:[%s8 + $0x40] sm:$0xff]
  %v581 = vld [vmem:[%s8 + $0x48] sm:$0xff]
  %v582 = vld [vmem:[%s8 + $0x50] sm:$0xff]
  %v583 = vld [vmem:[%s8 + $0x58] sm:$0xff]
  %v584 = vld [vmem:[%s8 + $0x60] sm:$0xff]
  %v585 = vld [vmem:[%s8 + $0x68] sm:$0xff]
  %v586 = vld [vmem:[%s8 + $0x70] sm:$0xff]
  %v587 = vld [vmem:[%s8 + $0x78] sm:$0xff]
  %v588 = vld [vmem:[%s9] sm:$0xff]
  %v589 = vld [vmem:[%s9 + $0x8] sm:$0xff]
  %v590 = vld [vmem:[%s9 + $0x10] sm:$0xff]
  %v591 = vld [vmem:[%s9 + $0x18] sm:$0xff]
  %v592 = vld [vmem:[%s9 + $0x20] sm:$0xff]
  %v593 = vld [vmem:[%s9 + $0x28] sm:$0xff]
  %v594 = vld [vmem:[%s9 + $0x30] sm:$0xff]
  %v595 = vld [vmem:[%s9 + $0x38] sm:$0xff]
  %v596 = vld [vmem:[%s9 + $0x40] sm:$0xff]
  %v597 = vld [vmem:[%s9 + $0x48] sm:$0xff]
  %v598 = vld [vmem:[%s9 + $0x50] sm:$0xff]
  %v599 = vld [vmem:[%s9 + $0x58] sm:$0xff]
  %v600 = vld [vmem:[%s9 + $0x60] sm:$0xff]
  %v601 = vld [vmem:[%s9 + $0x68] sm:$0xff]
  %v602 = vld [vmem:[%s9 + $0x70] sm:$0xff]
  %v603 = vld [vmem:[%s9 + $0x78] sm:$0xff]
  %v604 = vld [vmem:[%s10] sm:$0x1]
  %605 = vmatprep.subr.mxu0 0.0
  %606 = vmatpush1.msra.mxu0 %v556
  %607 = vmatprep.subr.mxu0 0.0
  %608 = vmatpush1.msra.mxu0 %v557
  %609 = vmatprep.subr.mxu0 0.0
  %610 = vmatpush1.msra.mxu0 %v558
  %611 = vmatprep.subr.mxu0 0.0
  %612 = vmatpush1.msra.mxu0 %v559
  %613 = vmatprep.subr.mxu0 0.0
  %614 = vmatpush1.msra.mxu0 %v560
  %615 = vmatprep.subr.mxu0 0.0
  %616 = vmatpush1.msra.mxu0 %v561
  %617 = vmatprep.subr.mxu0 0.0
  %618 = vmatpush1.msra.mxu0 %v562
  %619 = vmatprep.subr.mxu0 0.0
  %620 = vmatpush1.msra.mxu0 %v563
  %621 = vmatprep.subr.mxu0 0.0
  %622 = vmatpush1.msra.mxu0 %v564
  %623 = vmatprep.subr.mxu0 0.0
  %624 = vmatpush1.msra.mxu0 %v565
  %625 = vmatprep.subr.mxu0 0.0
  %626 = vmatpush1.msra.mxu0 %v566
  %627 = vmatprep.subr.mxu0 0.0
  %628 = vmatpush1.msra.mxu0 %v567
  %629 = vmatprep.subr.mxu0 0.0
  %630 = vmatpush1.msra.mxu0 %v568
  %631 = vmatprep.subr.mxu0 0.0
  %632 = vmatpush1.msra.mxu0 %v569
  %633 = vmatprep.subr.mxu0 0.0
  %634 = vmatpush1.msra.mxu0 %v570
  %635 = vmatprep.subr.mxu0 0.0
  %636 = vmatpush1.msra.mxu0 %v571
  %637 = vmatprep.subr.mxu0 0.0
  %638 = vmatpush1.msra.mxu0 0.0
  %639 = vmatprep.subr.mxu0 0.0
  %640 = vmatpush1.msra.mxu0 0.0
  %641 = vmatprep.subr.mxu0 0.0
  %642 = vmatpush1.msra.mxu0 0.0
  %643 = vmatprep.subr.mxu0 0.0
  %644 = vmatpush1.msra.mxu0 0.0
  %645 = vmatprep.subr.mxu0 0.0
  %646 = vmatpush1.msra.mxu0 0.0
  %647 = vmatprep.subr.mxu0 0.0
  %648 = vmatpush1.msra.mxu0 0.0
  %649 = vmatprep.subr.mxu0 0.0
  %650 = vmatpush1.msra.mxu0 0.0
  %651 = vmatprep.subr.mxu0 0.0
  %652 = vmatpush1.msra.mxu0 0.0
  %653 = vmatprep.subr.mxu0 0.0
  %654 = vmatpush1.msra.mxu0 0.0
  %655 = vmatprep.subr.mxu0 0.0
  %656 = vmatpush1.msra.mxu0 0.0
  %657 = vmatprep.subr.mxu0 0.0
  %658 = vmatpush1.msra.mxu0 0.0
  %659 = vmatprep.subr.mxu0 0.0
  %660 = vmatpush1.msra.mxu0 0.0
  %661 = vmatprep.subr.mxu0 0.0
  %662 = vmatpush1.msra.mxu0 0.0
  %663 = vmatprep.subr.mxu0 0.0
  %664 = vmatpush1.msra.mxu0 0.0
  %665 = vmatprep.subr.mxu0 0.0
  %666 = vmatpush1.msra.mxu0 0.0
  %667 = vmatprep.subr.mxu0 0.0
  %668 = vmatpush1.msra.mxu0 0.0
  %669 = vmatprep.mubr.f32.mxu0 0.0
  %670 = vmatmul.mubr.f32.gmra.mrb[0].mxu0 %v552
  %v671 = vpop.f32.mrb[0].mxu0
  %v672 = vadd.f32 0.0, %v671
  %v673 = vpop.f32.mrb[0].mxu0
  %674 = vmatprep.mubr.f32.mxu0 0.0
  %675 = vmatmul.mubr.f32.gmra.mrb[0].mxu0 %v553
  %v676 = vpop.f32.mrb[0].mxu0
  %v677 = vadd.f32 0.0, %v676
  %v678 = vpop.f32.mrb[0].mxu0
  %679 = vmatprep.mubr.f32.mxu0 0.0
  %680 = vmatmul.mubr.f32.gmra.mrb[0].mxu0 %v554
  %v681 = vpop.f32.mrb[0].mxu0
  %v682 = vadd.f32 0.0, %v681
  %v683 = vpop.f32.mrb[0].mxu0
  %684 = vmatprep.mubr.f32.mxu0 0.0
  %685 = vmatmul.mubr.f32.gmra.mrb[0].mxu0 %v555
  %v686 = vpop.f32.mrb[0].mxu0
  %v687 = vadd.f32 0.0, %v686
  %v688 = vpop.f32.mrb[0].mxu0
  %689 = vdwg.mxu0
  %690 = vmatprep.subr.mxu0 0.0
  %691 = vmatpush1.msra.mxu0 %v588
  %692 = vmatprep.subr.mxu0 0.0
  %693 = vmatpush1.msra.mxu0 %v589
  %694 = vmatprep.subr.mxu0 0.0
  %695 = vmatpush1.msra.mxu0 %v590
  %696 = vmatprep.subr.mxu0 0.0
  %697 = vmatpush1.msra.mxu0 %v591
  %698 = vmatprep.subr.mxu0 0.0
  %699 = vmatpush1.msra.mxu0 %v592
  %700 = vmatprep.subr.mxu0 0.0
  %701 = vmatpush1.msra.mxu0 %v593
  %702 = vmatprep.subr.mxu0 0.0
  %703 = vmatpush1.msra.mxu0 %v594
  %704 = vmatprep.subr.mxu0 0.0
  %705 = vmatpush1.msra.mxu0 %v595
  %706 = vmatprep.subr.mxu0 0.0
  %707 = vmatpush1.msra.mxu0 %v596
  %708 = vmatprep.subr.mxu0 0.0
  %709 = vmatpush1.msra.mxu0 %v597
  %710 = vmatprep.subr.mxu0 0.0
  %711 = vmatpush1.msra.mxu0 %v598
  %712 = vmatprep.subr.mxu0 0.0
  %713 = vmatpush1.msra.mxu0 %v599
  %714 = vmatprep.subr.mxu0 0.0
  %715 = vmatpush1.msra.mxu0 %v600
  %716 = vmatprep.subr.mxu0 0.0
  %717 = vmatpush1.msra.mxu0 %v601
  %718 = vmatprep.subr.mxu0 0.0
  %719 = vmatpush1.msra.mxu0 %v602
  %720 = vmatprep.subr.mxu0 0.0
  %721 = vmatpush1.msra.mxu0 %v603
  %722 = vmatprep.subr.mxu0 0.0
  %723 = vmatpush1.msra.mxu0 0.0
  %724 = vmatprep.subr.mxu0 0.0
  %725 = vmatpush1.msra.mxu0 0.0
  %726 = vmatprep.subr.mxu0 0.0
  %727 = vmatpush1.msra.mxu0 0.0
  %728 = vmatprep.subr.mxu0 0.0
  %729 = vmatpush1.msra.mxu0 0.0
  %730 = vmatprep.subr.mxu0 0.0
  %731 = vmatpush1.msra.mxu0 0.0
  %732 = vmatprep.subr.mxu0 0.0
  %733 = vmatpush1.msra.mxu0 0.0
  %734 = vmatprep.subr.mxu0 0.0
  %735 = vmatpush1.msra.mxu0 0.0
  %736 = vmatprep.subr.mxu0 0.0
  %737 = vmatpush1.msra.mxu0 0.0
  %738 = vmatprep.subr.mxu0 0.0
  %739 = vmatpush1.msra.mxu0 0.0
  %740 = vmatprep.subr.mxu0 0.0
  %741 = vmatpush1.msra.mxu0 0.0
  %742 = vmatprep.subr.mxu0 0.0
  %743 = vmatpush1.msra.mxu0 0.0
  %744 = vmatprep.subr.mxu0 0.0
  %745 = vmatpush1.msra.mxu0 0.0
  %746 = vmatprep.subr.mxu0 0.0
  %747 = vmatpush1.msra.mxu0 0.0
  %748 = vmatprep.subr.mxu0 0.0
  %749 = vmatpush1.msra.mxu0 0.0
  %750 = vmatprep.subr.mxu0 0.0
  %751 = vmatpush1.msra.mxu0 0.0
  %752 = vmatprep.subr.mxu0 0.0
  %753 = vmatpush1.msra.mxu0 0.0
  %754 = vmatprep.mubr.f32.mxu0 0.0
  %755 = vmatmul.mubr.f32.gmra.mrb[0].mxu0 %v552
  %v756 = vpop.f32.mrb[0].mxu0
  %v757 = vadd.f32 0.0, %v756
  %v758 = vpop.f32.mrb[0].mxu0
  %759 = vmatprep.mubr.f32.mxu0 0.0
  %760 = vmatmul.mubr.f32.gmra.mrb[0].mxu0 %v553
  %v761 = vpop.f32.mrb[0].mxu0
  %v762 = vadd.f32 0.0, %v761
  %v763 = vpop.f32.mrb[0].mxu0
  %764 = vmatprep.mubr.f32.mxu0 0.0
  %765 = vmatmul.mubr.f32.gmra.mrb[0].mxu0 %v554
  %v766 = vpop.f32.mrb[0].mxu0
  %v767 = vadd.f32 0.0, %v766
  %v768 = vpop.f32.mrb[0].mxu0
  %769 = vmatprep.mubr.f32.mxu0 0.0
  %770 = vmatmul.mubr.f32.gmra.mrb[0].mxu0 %v555
  %v771 = vpop.f32.mrb[0].mxu0
  %v772 = vadd.f32 0.0, %v771
  %v773 = vpop.f32.mrb[0].mxu0
  %774 = vdwg.mxu0
  %775 = vmatprep.subr.mxu0 0.0
  %776 = vmatpush1.msra.mxu0 %v672
  %777 = vmatprep.subr.mxu0 0.0
  %778 = vmatpush1.msra.mxu0 %v677
  %779 = vmatprep.subr.mxu0 0.0
  %780 = vmatpush1.msra.mxu0 %v682
  %781 = vmatprep.subr.mxu0 0.0
  %782 = vmatpush1.msra.mxu0 %v687
  %783 = vmatprep.subr.mxu0 0.0
  %784 = vmatpush1.msra.mxu0 0.0
  %785 = vmatprep.subr.mxu0 0.0
  %786 = vmatpush1.msra.mxu0 0.0
  %787 = vmatprep.subr.mxu0 0.0
  %788 = vmatpush1.msra.mxu0 0.0
  %789 = vmatprep.subr.mxu0 0.0
  %790 = vmatpush1.msra.mxu0 0.0
  %791 = vmatprep.subr.mxu0 0.0
  %792 = vmatpush1.msra.mxu0 0.0
  %793 = vmatprep.subr.mxu0 0.0
  %794 = vmatpush1.msra.mxu0 0.0
  %795 = vmatprep.subr.mxu0 0.0
  %796 = vmatpush1.msra.mxu0 0.0
  %797 = vmatprep.subr.mxu0 0.0
  %798 = vmatpush1.msra.mxu0 0.0
  %799 = vmatprep.subr.mxu0 0.0
  %800 = vmatpush1.msra.mxu0 0.0
  %801 = vmatprep.subr.mxu0 0.0
  %802 = vmatpush1.msra.mxu0 0.0
  %803 = vmatprep.subr.mxu0 0.0
  %804 = vmatpush1.msra.mxu0 0.0
  %805 = vmatprep.subr.mxu0 0.0
  %806 = vmatpush1.msra.mxu0 0.0
  %807 = vmatprep.subr.mxu0 0.0
  %808 = vmatpush1.msra.mxu0 0.0
  %809 = vmatprep.subr.mxu0 0.0
  %810 = vmatpush1.msra.mxu0 0.0
  %811 = vmatprep.subr.mxu0 0.0
  %812 = vmatpush1.msra.mxu0 0.0
  %813 = vmatprep.subr.mxu0 0.0
  %814 = vmatpush1.msra.mxu0 0.0
  %815 = vmatprep.subr.mxu0 0.0
  %816 = vmatpush1.msra.mxu0 0.0
  %817 = vmatprep.subr.mxu0 0.0
  %818 = vmatpush1.msra.mxu0 0.0
  %819 = vmatprep.subr.mxu0 0.0
  %820 = vmatpush1.msra.mxu0 0.0
  %821 = vmatprep.subr.mxu0 0.0
  %822 = vmatpush1.msra.mxu0 0.0
  %823 = vmatprep.subr.mxu0 0.0
  %824 = vmatpush1.msra.mxu0 0.0
  %825 = vmatprep.subr.mxu0 0.0
  %826 = vmatpush1.msra.mxu0 0.0
  %827 = vmatprep.subr.mxu0 0.0
  %828 = vmatpush1.msra.mxu0 0.0
  %829 = vmatprep.subr.mxu0 0.0
  %830 = vmatpush1.msra.mxu0 0.0
  %831 = vmatprep.subr.mxu0 0.0
  %832 = vmatpush1.msra.mxu0 0.0
  %833 = vmatprep.subr.mxu0 0.0
  %834 = vmatpush1.msra.mxu0 0.0
  %835 = vmatprep.subr.mxu0 0.0
  %836 = vmatpush1.msra.mxu0 0.0
  %837 = vmatprep.subr.mxu0 0.0
  %838 = vmatpush1.msra.mxu0 0.0
  %839 = vmatprep.mubr.f32.mxu0 0.0
  %840 = vmatmul.mubr.f32.gmra.mrb[0].mxu0 %v260
  %v841 = vpop.f32.mrb[0].mxu0
  %v842 = vadd.f32 0.0, %v841
  %v843 = vpop.f32.mrb[0].mxu0
  %844 = vmatprep.mubr.f32.mxu0 0.0
  %845 = vmatmul.mubr.f32.gmra.mrb[0].mxu0 %v263
  %v846 = vpop.f32.mrb[0].mxu0
  %v847 = vadd.f32 0.0, %v846
  %v848 = vpop.f32.mrb[0].mxu0
  %849 = vmatprep.mubr.f32.mxu0 0.0
  %850 = vmatmul.mubr.f32.gmra.mrb[0].mxu0 %v266
  %v851 = vpop.f32.mrb[0].mxu0
  %v852 = vadd.f32 0.0, %v851
  %v853 = vpop.f32.mrb[0].mxu0
  %854 = vmatprep.mubr.f32.mxu0 0.0
  %855 = vmatmul.mubr.f32.gmra.mrb[0].mxu0 %v269
  %v856 = vpop.f32.mrb[0].mxu0
  %v857 = vadd.f32 0.0, %v856
  %v858 = vpop.f32.mrb[0].mxu0
  %859 = vdwg.mxu0
  %860 = vmatprep.subr.mxu0 0.0
  %861 = vmatpush1.msra.mxu0 %v572
  %862 = vmatprep.subr.mxu0 0.0
  %863 = vmatpush1.msra.mxu0 %v573
  %864 = vmatprep.subr.mxu0 0.0
  %865 = vmatpush1.msra.mxu0 %v574
  %866 = vmatprep.subr.mxu0 0.0
  %867 = vmatpush1.msra.mxu0 %v575
  %868 = vmatprep.subr.mxu0 0.0
  %869 = vmatpush1.msra.mxu0 %v576
  %870 = vmatprep.subr.mxu0 0.0
  %871 = vmatpush1.msra.mxu0 %v577
  %872 = vmatprep.subr.mxu0 0.0
  %873 = vmatpush1.msra.mxu0 %v578
  %874 = vmatprep.subr.mxu0 0.0
  %875 = vmatpush1.msra.mxu0 %v579
  %876 = vmatprep.subr.mxu0 0.0
  %877 = vmatpush1.msra.mxu0 %v580
  %878 = vmatprep.subr.mxu0 0.0
  %879 = vmatpush1.msra.mxu0 %v581
  %880 = vmatprep.subr.mxu0 0.0
  %881 = vmatpush1.msra.mxu0 %v582
  %882 = vmatprep.subr.mxu0 0.0
  %883 = vmatpush1.msra.mxu0 %v583
  %884 = vmatprep.subr.mxu0 0.0
  %885 = vmatpush1.msra.mxu0 %v584
  %886 = vmatprep.subr.mxu0 0.0
  %887 = vmatpush1.msra.mxu0 %v585
  %888 = vmatprep.subr.mxu0 0.0
  %889 = vmatpush1.msra.mxu0 %v586
  %890 = vmatprep.subr.mxu0 0.0
  %891 = vmatpush1.msra.mxu0 %v587
  %892 = vmatprep.subr.mxu0 0.0
  %893 = vmatpush1.msra.mxu0 0.0
  %894 = vmatprep.subr.mxu0 0.0
  %895 = vmatpush1.msra.mxu0 0.0
  %896 = vmatprep.subr.mxu0 0.0
  %897 = vmatpush1.msra.mxu0 0.0
  %898 = vmatprep.subr.mxu0 0.0
  %899 = vmatpush1.msra.mxu0 0.0
  %900 = vmatprep.subr.mxu0 0.0
  %901 = vmatpush1.msra.mxu0 0.0
  %902 = vmatprep.subr.mxu0 0.0
  %903 = vmatpush1.msra.mxu0 0.0
  %904 = vmatprep.subr.mxu0 0.0
  %905 = vmatpush1.msra.mxu0 0.0
  %906 = vmatprep.subr.mxu0 0.0
  %907 = vmatpush1.msra.mxu0 0.0
  %908 = vmatprep.subr.mxu0 0.0
  %909 = vmatpush1.msra.mxu0 0.0
  %910 = vmatprep.subr.mxu0 0.0
  %911 = vmatpush1.msra.mxu0 0.0
  %912 = vmatprep.subr.mxu0 0.0
  %913 = vmatpush1.msra.mxu0 0.0
  %914 = vmatprep.subr.mxu0 0.0
  %915 = vmatpush1.msra.mxu0 0.0
  %916 = vmatprep.subr.mxu0 0.0
  %917 = vmatpush1.msra.mxu0 0.0
  %918 = vmatprep.subr.mxu0 0.0
  %919 = vmatpush1.msra.mxu0 0.0
  %920 = vmatprep.subr.mxu0 0.0
  %921 = vmatpush1.msra.mxu0 0.0
  %922 = vmatprep.subr.mxu0 0.0
  %923 = vmatpush1.msra.mxu0 0.0
  %924 = vmatprep.mubr.f32.mxu0 0.0
  %925 = vmatmul.mubr.f32.gmra.mrb[0].mxu0 %v552
  %v926 = vpop.f32.mrb[0].mxu0
  %v927 = vadd.f32 %v842, %v926
  %v928 = vpop.f32.mrb[0].mxu0
  %929 = vmatprep.mubr.f32.mxu0 0.0
  %930 = vmatmul.mubr.f32.gmra.mrb[0].mxu0 %v553
  %v931 = vpop.f32.mrb[0].mxu0
  %v932 = vadd.f32 %v847, %v931
  %v933 = vpop.f32.mrb[0].mxu0
  %934 = vmatprep.mubr.f32.mxu0 0.0
  %935 = vmatmul.mubr.f32.gmra.mrb[0].mxu0 %v554
  %v936 = vpop.f32.mrb[0].mxu0
  %v937 = vadd.f32 %v852, %v936
  %v938 = vpop.f32.mrb[0].mxu0
  %939 = vmatprep.mubr.f32.mxu0 0.0
  %940 = vmatmul.mubr.f32.gmra.mrb[0].mxu0 %v555
  %v941 = vpop.f32.mrb[0].mxu0
  %v942 = vadd.f32 %v857, %v941
  %v943 = vpop.f32.mrb[0].mxu0
  %944 = vdwg.mxu0
  %945 = vmatprep.subr.mxu0 0.0
  %946 = vmatpush1.msra.mxu0 %v757
  %947 = vmatprep.subr.mxu0 0.0
  %948 = vmatpush1.msra.mxu0 %v762
  %949 = vmatprep.subr.mxu0 0.0
  %950 = vmatpush1.msra.mxu0 %v767
  %951 = vmatprep.subr.mxu0 0.0
  %952 = vmatpush1.msra.mxu0 %v772
  %953 = vmatprep.subr.mxu0 0.0
  %954 = vmatpush1.msra.mxu0 0.0
  %955 = vmatprep.subr.mxu0 0.0
  %956 = vmatpush1.msra.mxu0 0.0
  %957 = vmatprep.subr.mxu0 0.0
  %958 = vmatpush1.msra.mxu0 0.0
  %959 = vmatprep.subr.mxu0 0.0
  %960 = vmatpush1.msra.mxu0 0.0
  %961 = vmatprep.subr.mxu0 0.0
  %962 = vmatpush1.msra.mxu0 0.0
  %963 = vmatprep.subr.mxu0 0.0
  %964 = vmatpush1.msra.mxu0 0.0
  %965 = vmatprep.subr.mxu0 0.0
  %966 = vmatpush1.msra.mxu0 0.0
  %967 = vmatprep.subr.mxu0 0.0
  %968 = vmatpush1.msra.mxu0 0.0
  %969 = vmatprep.subr.mxu0 0.0
  %970 = vmatpush1.msra.mxu0 0.0
  %971 = vmatprep.subr.mxu0 0.0
  %972 = vmatpush1.msra.mxu0 0.0
  %973 = vmatprep.subr.mxu0 0.0
  %974 = vmatpush1.msra.mxu0 0.0
  %975 = vmatprep.subr.mxu0 0.0
  %976 = vmatpush1.msra.mxu0 0.0
  %977 = vmatprep.subr.mxu0 0.0
  %978 = vmatpush1.msra.mxu0 0.0
  %979 = vmatprep.subr.mxu0 0.0
  %980 = vmatpush1.msra.mxu0 0.0
  %981 = vmatprep.subr.mxu0 0.0
  %982 = vmatpush1.msra.mxu0 0.0
  %983 = vmatprep.subr.mxu0 0.0
  %984 = vmatpush1.msra.mxu0 0.0
  %985 = vmatprep.subr.mxu0 0.0
  %986 = vmatpush1.msra.mxu0 0.0
  %987 = vmatprep.subr.mxu0 0.0
  %988 = vmatpush1.msra.mxu0 0.0
  %989 = vmatprep.subr.mxu0 0.0
  %990 = vmatpush1.msra.mxu0 0.0
  %991 = vmatprep.subr.mxu0 0.0
  %992 = vmatpush1.msra.mxu0 0.0
  %993 = vmatprep.subr.mxu0 0.0
  %994 = vmatpush1.msra.mxu0 0.0
  %995 = vmatprep.subr.mxu0 0.0
  %996 = vmatpush1.msra.mxu0 0.0
  %997 = vmatprep.subr.mxu0 0.0
  %998 = vmatpush1.msra.mxu0 0.0
  %999 = vmatprep.subr.mxu0 0.0
  %1000 = vmatpush1.msra.mxu0 0.0
  %1001 = vmatprep.subr.mxu0 0.0
  %1002 = vmatpush1.msra.mxu0 0.0
  %1003 = vmatprep.subr.mxu0 0.0
  %1004 = vmatpush1.msra.mxu0 0.0
  %1005 = vmatprep.subr.mxu0 0.0
  %1006 = vmatpush1.msra.mxu0 0.0
  %1007 = vmatprep.subr.mxu0 0.0
  %1008 = vmatpush1.msra.mxu0 0.0
  %1009 = vmatprep.mubr.f32.mxu0 0.0
  %1010 = vmatmul.mubr.f32.gmra.mrb[0].mxu0 %v442
  %v1011 = vpop.f32.mrb[0].mxu0
  %v1012 = vadd.f32 0.0, %v1011
  %v1013 = vpop.f32.mrb[0].mxu0
  %1014 = vmatprep.mubr.f32.mxu0 0.0
  %1015 = vmatmul.mubr.f32.gmra.mrb[0].mxu0 %v445
  %v1016 = vpop.f32.mrb[0].mxu0
  %v1017 = vadd.f32 0.0, %v1016
  %v1018 = vpop.f32.mrb[0].mxu0
  %1019 = vmatprep.mubr.f32.mxu0 0.0
  %1020 = vmatmul.mubr.f32.gmra.mrb[0].mxu0 %v448
  %v1021 = vpop.f32.mrb[0].mxu0
  %v1022 = vadd.f32 0.0, %v1021
  %v1023 = vpop.f32.mrb[0].mxu0
  %1024 = vmatprep.mubr.f32.mxu0 0.0
  %1025 = vmatmul.mubr.f32.gmra.mrb[0].mxu0 %v451
  %v1026 = vpop.f32.mrb[0].mxu0
  %v1027 = vadd.f32 0.0, %v1026
  %v1028 = vpop.f32.mrb[0].mxu0
  %1029 = vdwg.mxu0
  %v1030 = vadd.f32 %v927, %v1012
  %v1031 = vadd.f32 %v932, %v1017
  %v1032 = vadd.f32 %v937, %v1022
  %v1033 = vadd.f32 %v942, %v1027
  %v1035 = vlaneseq
  %v1036 = vshrl.u32 %v1035, 7
  %v1037 = vsub.s32 0, %v1036
  %v1038 = vrot.slane %v604, %v1037
  %v1040 = vadd.f32 %v1030, %v1038
  %v1041 = vadd.f32 %v1031, %v1038
  %v1042 = vadd.f32 %v1032, %v1038
  %v1043 = vadd.f32 %v1033, %v1038
  %v1044 = vmax.f32 %v1040, 0.0
  %v1045 = vmax.f32 %v1041, 0.0
  %v1046 = vmax.f32 %v1042, 0.0
  %v1047 = vmax.f32 %v1043, 0.0
  %1048 = vst [vmem:[%s11] sm:$0xff] %v1044
  %1049 = vst [vmem:[%s11 + $0x8] sm:$0xff] %v1045
  %1050 = vst [vmem:[%s11 + $0x10] sm:$0xff] %v1046
  %1051 = vst [vmem:[%s11 + $0x18] sm:$0xff] %v1047
  // Predicated region
  $region46: #{_lambda_.3} parent=0 // pred_check
    _
  $region47: #{_lambda_.3} parent=0 // pred_check_branch
    %1053 = sbr.rel (0) target = $region49
  $region48: #{_lambda_.3} parent=0 // pred_region
    _
  $region49: #{_lambda_.3} parent=0 // pred_fallthru
    _
  // Predicated region
  $region50: #{_lambda_.3} parent=0 // pred_check
    _
  $region51: #{_lambda_.3} parent=0 // pred_check_branch
    %1055 = sbr.rel (0) target = $region53
  $region52: #{_lambda_.3} parent=0 // pred_region
    _
  $region53: #{_lambda_.3} parent=0 // pred_fallthru
    _

// kernel: _lambda_.4
$region0: #{_lambda_.4}
  #allocation0 [shape = 'u32[]', space=smem, size = 0x4, offset = 0x4, fixed_abs, tag = 'smem constant byte address 0x4 - core index']
  #allocation1 [shape = 'u32[144,128]{1,0:T(1,128)}', space=vmem, size = 0x12000, scoped, tag = 'internal scratch']
  %s0 = inlined_call_operand.vmem [shape: f32[2,2048], index: 0, kind: input, shape index: {}]
  %s1 = inlined_call_operand.vmem [shape: f32[2,8], index: 1, kind: input, shape index: {}]
  %s2 = inlined_call_operand.vmem [shape: f32[2048,32], index: 2, kind: input, shape index: {}]
  %s3 = inlined_call_operand.vmem [shape: f32[1,32], index: 3, kind: input, shape index: {}]
  %s4 = inlined_call_operand.vmem [shape: f32[32,32], index: 4, kind: input, shape index: {}]
  %s5 = inlined_call_operand.vmem [shape: f32[1,32], index: 5, kind: input, shape index: {}]
  %s6 = inlined_call_operand.vmem [shape: f32[32,8], index: 6, kind: input, shape index: {}]
  %s7 = inlined_call_operand.vmem [shape: f32[1,8], index: 7, kind: input, shape index: {}]
  %s8 = inlined_call_operand.vmem [shape: f32[32,8], index: 8, kind: input, shape index: {}]
  %s9 = inlined_call_operand.vmem [shape: f32[1,8], index: 9, kind: input, shape index: {}]
  %s10 = inlined_call_operand.vmem [shape: f32[8,32], index: 10, kind: input, shape index: {}]
  %s11 = inlined_call_operand.vmem [shape: f32[1,32], index: 11, kind: input, shape index: {}]
  %s12 = inlined_call_operand.vmem [shape: f32[32,32], index: 12, kind: input, shape index: {}]
  %s13 = inlined_call_operand.vmem [shape: f32[1,32], index: 13, kind: input, shape index: {}]
  %s14 = inlined_call_operand.vmem [shape: f32[32,2048], index: 14, kind: input, shape index: {}]
  %s15 = inlined_call_operand.vmem [shape: f32[1,2048], index: 15, kind: input, shape index: {}]
  %s16 = inlined_call_operand.vmem [shape: f32[2,2048], index: 16, kind: output, shape index: {}]
  %s17 = sld [smem:[#allocation0]]
  $region74: #{_lambda_.4} parent=0
    _
  %s19 = ssub.s32 1, %s17
  %s20 = scalar_select 0, %s19, %s17
  // Predicated region
  $region2: #{_lambda_.4} parent=0 // pred_check
    _
  $region3: #{_lambda_.4} parent=0 // pred_check_branch
    %22 = sbr.rel (0) target = $region5
  $region4: #{_lambda_.4} parent=0 // pred_region
    _
  $region5: #{_lambda_.4} parent=0 // pred_fallthru
    _
  // Predicated region
  $region6: #{_lambda_.4} parent=0 // pred_check
    _
  $region7: #{_lambda_.4} parent=0 // pred_check_branch
    %24 = sbr.rel (0) target = $region9
  $region8: #{_lambda_.4} parent=0 // pred_region
    _
  $region9: #{_lambda_.4} parent=0 // pred_fallthru
    _
  // Predicated region
  $region10: #{_lambda_.4} parent=0 // pred_check
    _
  $region11: #{_lambda_.4} parent=0 // pred_check_branch
    %26 = sbr.rel (0) target = $region13
  $region12: #{_lambda_.4} parent=0 // pred_region
    _
  $region13: #{_lambda_.4} parent=0 // pred_fallthru
    _
  // Predicated region
  $region14: #{_lambda_.4} parent=0 // pred_check
    _
  $region15: #{_lambda_.4} parent=0 // pred_check_branch
    %28 = sbr.rel (0) target = $region17
  $region16: #{_lambda_.4} parent=0 // pred_region
    _
  $region17: #{_lambda_.4} parent=0 // pred_fallthru
    _
  // Predicated region
  $region18: #{_lambda_.4} parent=0 // pred_check
    _
  $region19: #{_lambda_.4} parent=0 // pred_check_branch
    %30 = sbr.rel (0) target = $region21
  $region20: #{_lambda_.4} parent=0 // pred_region
    _
  $region21: #{_lambda_.4} parent=0 // pred_fallthru
    _
  // Predicated region
  $region22: #{_lambda_.4} parent=0 // pred_check
    _
  $region23: #{_lambda_.4} parent=0 // pred_check_branch
    %32 = sbr.rel (0) target = $region25
  $region24: #{_lambda_.4} parent=0 // pred_region
    _
  $region25: #{_lambda_.4} parent=0 // pred_fallthru
    _
  // Predicated region
  $region26: #{_lambda_.4} parent=0 // pred_check
    _
  $region27: #{_lambda_.4} parent=0 // pred_check_branch
    %34 = sbr.rel (0) target = $region29
  $region28: #{_lambda_.4} parent=0 // pred_region
    _
  $region29: #{_lambda_.4} parent=0 // pred_fallthru
    _
  // Predicated region
  $region30: #{_lambda_.4} parent=0 // pred_check
    _
  $region31: #{_lambda_.4} parent=0 // pred_check_branch
    %36 = sbr.rel (0) target = $region33
  $region32: #{_lambda_.4} parent=0 // pred_region
    _
  $region33: #{_lambda_.4} parent=0 // pred_fallthru
    _
  // Predicated region
  $region34: #{_lambda_.4} parent=0 // pred_check
    _
  $region35: #{_lambda_.4} parent=0 // pred_check_branch
    %38 = sbr.rel (0) target = $region37
  $region36: #{_lambda_.4} parent=0 // pred_region
    _
  $region37: #{_lambda_.4} parent=0 // pred_fallthru
    _
  // Predicated region
  $region38: #{_lambda_.4} parent=0 // pred_check
    _
  $region39: #{_lambda_.4} parent=0 // pred_check_branch
    %40 = sbr.rel (0) target = $region41
  $region40: #{_lambda_.4} parent=0 // pred_region
    _
  $region41: #{_lambda_.4} parent=0 // pred_fallthru
    _
  // Predicated region
  $region42: #{_lambda_.4} parent=0 // pred_check
    _
  $region43: #{_lambda_.4} parent=0 // pred_check_branch
    %42 = sbr.rel (0) target = $region45
  $region44: #{_lambda_.4} parent=0 // pred_region
    _
  $region45: #{_lambda_.4} parent=0 // pred_fallthru
    _
  // Predicated region
  $region46: #{_lambda_.4} parent=0 // pred_check
    _
  $region47: #{_lambda_.4} parent=0 // pred_check_branch
    %44 = sbr.rel (0) target = $region49
  $region48: #{_lambda_.4} parent=0 // pred_region
    _
  $region49: #{_lambda_.4} parent=0 // pred_fallthru
    _
  // Predicated region
  $region50: #{_lambda_.4} parent=0 // pred_check
    _
  $region51: #{_lambda_.4} parent=0 // pred_check_branch
    %46 = sbr.rel (0) target = $region53
  $region52: #{_lambda_.4} parent=0 // pred_region
    _
  $region53: #{_lambda_.4} parent=0 // pred_fallthru
    _
  // Predicated region
  $region54: #{_lambda_.4} parent=0 // pred_check
    _
  $region55: #{_lambda_.4} parent=0 // pred_check_branch
    %48 = sbr.rel (0) target = $region57
  $region56: #{_lambda_.4} parent=0 // pred_region
    _
  $region57: #{_lambda_.4} parent=0 // pred_fallthru
    _
  // Predicated region
  $region58: #{_lambda_.4} parent=0 // pred_check
    _
  $region59: #{_lambda_.4} parent=0 // pred_check_branch
    %50 = sbr.rel (0) target = $region61
  $region60: #{_lambda_.4} parent=0 // pred_region
    _
  $region61: #{_lambda_.4} parent=0 // pred_fallthru
    _
  // Predicated region
  $region62: #{_lambda_.4} parent=0 // pred_check
    _
  $region63: #{_lambda_.4} parent=0 // pred_check_branch
    %52 = sbr.rel (0) target = $region65
  $region64: #{_lambda_.4} parent=0 // pred_region
    _
  $region65: #{_lambda_.4} parent=0 // pred_fallthru
    _
  %v53 = vld [vmem:[%s0] sm:$0xff]
  %v54 = vld [vmem:[%s0 + $0x8] sm:$0xff]
  %v55 = vld [vmem:[%s0 + $0x10] sm:$0xff]
  %v56 = vld [vmem:[%s0 + $0x18] sm:$0xff]
  %v57 = vld [vmem:[%s2] sm:$0xff]
  %v58 = vld [vmem:[%s2 + $0x8] sm:$0xff]
  %v59 = vld [vmem:[%s2 + $0x10] sm:$0xff]
  %v60 = vld [vmem:[%s2 + $0x18] sm:$0xff]
  %v61 = vld [vmem:[%s2 + $0x20] sm:$0xff]
  %v62 = vld [vmem:[%s2 + $0x28] sm:$0xff]
  %v63 = vld [vmem:[%s2 + $0x30] sm:$0xff]
  %v64 = vld [vmem:[%s2 + $0x38] sm:$0xff]
  %v65 = vld [vmem:[%s2 + $0x40] sm:$0xff]
  %v66 = vld [vmem:[%s2 + $0x48] sm:$0xff]
  %v67 = vld [vmem:[%s2 + $0x50] sm:$0xff]
  %v68 = vld [vmem:[%s2 + $0x58] sm:$0xff]
  %v69 = vld [vmem:[%s2 + $0x60] sm:$0xff]
  %v70 = vld [vmem:[%s2 + $0x68] sm:$0xff]
  %v71 = vld [vmem:[%s2 + $0x70] sm:$0xff]
  %v72 = vld [vmem:[%s2 + $0x78] sm:$0xff]
  %v73 = vld [vmem:[%s2 + $0x80] sm:$0xff]
  %v74 = vld [vmem:[%s2 + $0x88] sm:$0xff]
  %v75 = vld [vmem:[%s2 + $0x90] sm:$0xff]
  %v76 = vld [vmem:[%s2 + $0x98] sm:$0xff]
  %v77 = vld [vmem:[%s2 + $0xa0] sm:$0xff]
  %v78 = vld [vmem:[%s2 + $0xa8] sm:$0xff]
  %v79 = vld [vmem:[%s2 + $0xb0] sm:$0xff]
  %v80 = vld [vmem:[%s2 + $0xb8] sm:$0xff]
  %v81 = vld [vmem:[%s2 + $0xc0] sm:$0xff]
  %v82 = vld [vmem:[%s2 + $0xc8] sm:$0xff]
  %v83 = vld [vmem:[%s2 + $0xd0] sm:$0xff]
  %v84 = vld [vmem:[%s2 + $0xd8] sm:$0xff]
  %v85 = vld [vmem:[%s2 + $0xe0] sm:$0xff]
  %v86 = vld [vmem:[%s2 + $0xe8] sm:$0xff]
  %v87 = vld [vmem:[%s2 + $0xf0] sm:$0xff]
  %v88 = vld [vmem:[%s2 + $0xf8] sm:$0xff]
  %v89 = vld [vmem:[%s2 + $0x100] sm:$0xff]
  %v90 = vld [vmem:[%s2 + $0x108] sm:$0xff]
  %v91 = vld [vmem:[%s2 + $0x110] sm:$0xff]
  %v92 = vld [vmem:[%s2 + $0x118] sm:$0xff]
  %v93 = vld [vmem:[%s2 + $0x120] sm:$0xff]
  %v94 = vld [vmem:[%s2 + $0x128] sm:$0xff]
  %v95 = vld [vmem:[%s2 + $0x130] sm:$0xff]
  %v96 = vld [vmem:[%s2 + $0x138] sm:$0xff]
  %v97 = vld [vmem:[%s2 + $0x140] sm:$0xff]
  %v98 = vld [vmem:[%s2 + $0x148] sm:$0xff]
  %v99 = vld [vmem:[%s2 + $0x150] sm:$0xff]
  %v100 = vld [vmem:[%s2 + $0x158] sm:$0xff]
  %v101 = vld [vmem:[%s2 + $0x160] sm:$0xff]
  %v102 = vld [vmem:[%s2 + $0x168] sm:$0xff]
  %v103 = vld [vmem:[%s2 + $0x170] sm:$0xff]
  %v104 = vld [vmem:[%s2 + $0x178] sm:$0xff]
  %v105 = vld [vmem:[%s2 + $0x180] sm:$0xff]
  %v106 = vld [vmem:[%s2 + $0x188] sm:$0xff]
  %v107 = vld [vmem:[%s2 + $0x190] sm:$0xff]
  %v108 = vld [vmem:[%s2 + $0x198] sm:$0xff]
  %v109 = vld [vmem:[%s2 + $0x1a0] sm:$0xff]
  %v110 = vld [vmem:[%s2 + $0x1a8] sm:$0xff]
  %v111 = vld [vmem:[%s2 + $0x1b0] sm:$0xff]
  %v112 = vld [vmem:[%s2 + $0x1b8] sm:$0xff]
  %v113 = vld [vmem:[%s2 + $0x1c0] sm:$0xff]
  %v114 = vld [vmem:[%s2 + $0x1c8] sm:$0xff]
  %v115 = vld [vmem:[%s2 + $0x1d0] sm:$0xff]
  %v116 = vld [vmem:[%s2 + $0x1d8] sm:$0xff]
  %v117 = vld [vmem:[%s2 + $0x1e0] sm:$0xff]
  %v118 = vld [vmem:[%s2 + $0x1e8] sm:$0xff]
  %v119 = vld [vmem:[%s2 + $0x1f0] sm:$0xff]
  %v120 = vld [vmem:[%s2 + $0x1f8] sm:$0xff]
  %v121 = vld [vmem:[%s2 + $0x200] sm:$0xff]
  %v122 = vld [vmem:[%s2 + $0x208] sm:$0xff]
  %v123 = vld [vmem:[%s2 + $0x210] sm:$0xff]
  %v124 = vld [vmem:[%s2 + $0x218] sm:$0xff]
  %v125 = vld [vmem:[%s2 + $0x220] sm:$0xff]
  %v126 = vld [vmem:[%s2 + $0x228] sm:$0xff]
  %v127 = vld [vmem:[%s2 + $0x230] sm:$0xff]
  %v128 = vld [vmem:[%s2 + $0x238] sm:$0xff]
  %v129 = vld [vmem:[%s2 + $0x240] sm:$0xff]
  %v130 = vld [vmem:[%s2 + $0x248] sm:$0xff]
  %v131 = vld [vmem:[%s2 + $0x250] sm:$0xff]
  %v132 = vld [vmem:[%s2 + $0x258] sm:$0xff]
  %v133 = vld [vmem:[%s2 + $0x260] sm:$0xff]
  %v134 = vld [vmem:[%s2 + $0x268] sm:$0xff]
  %v135 = vld [vmem:[%s2 + $0x270] sm:$0xff]
  %v136 = vld [vmem:[%s2 + $0x278] sm:$0xff]
  %v137 = vld [vmem:[%s2 + $0x280] sm:$0xff]
  %v138 = vld [vmem:[%s2 + $0x288] sm:$0xff]
  %v139 = vld [vmem:[%s2 + $0x290] sm:$0xff]
  %v140 = vld [vmem:[%s2 + $0x298] sm:$0xff]
  %v141 = vld [vmem:[%s2 + $0x2a0] sm:$0xff]
  %v142 = vld [vmem:[%s2 + $0x2a8] sm:$0xff]
  %v143 = vld [vmem:[%s2 + $0x2b0] sm:$0xff]
  %v144 = vld [vmem:[%s2 + $0x2b8] sm:$0xff]
  %v145 = vld [vmem:[%s2 + $0x2c0] sm:$0xff]
  %v146 = vld [vmem:[%s2 + $0x2c8] sm:$0xff]
  %v147 = vld [vmem:[%s2 + $0x2d0] sm:$0xff]
  %v148 = vld [vmem:[%s2 + $0x2d8] sm:$0xff]
  %v149 = vld [vmem:[%s2 + $0x2e0] sm:$0xff]
  %v150 = vld [vmem:[%s2 + $0x2e8] sm:$0xff]
  %v151 = vld [vmem:[%s2 + $0x2f0] sm:$0xff]
  %v152 = vld [vmem:[%s2 + $0x2f8] sm:$0xff]
  %v153 = vld [vmem:[%s2 + $0x300] sm:$0xff]
  %v154 = vld [vmem:[%s2 + $0x308] sm:$0xff]
  %v155 = vld [vmem:[%s2 + $0x310] sm:$0xff]
  %v156 = vld [vmem:[%s2 + $0x318] sm:$0xff]
  %v157 = vld [vmem:[%s2 + $0x320] sm:$0xff]
  %v158 = vld [vmem:[%s2 + $0x328] sm:$0xff]
  %v159 = vld [vmem:[%s2 + $0x330] sm:$0xff]
  %v160 = vld [vmem:[%s2 + $0x338] sm:$0xff]
  %v161 = vld [vmem:[%s2 + $0x340] sm:$0xff]
  %v162 = vld [vmem:[%s2 + $0x348] sm:$0xff]
  %v163 = vld [vmem:[%s2 + $0x350] sm:$0xff]
  %v164 = vld [vmem:[%s2 + $0x358] sm:$0xff]
  %v165 = vld [vmem:[%s2 + $0x360] sm:$0xff]
  %v166 = vld [vmem:[%s2 + $0x368] sm:$0xff]
  %v167 = vld [vmem:[%s2 + $0x370] sm:$0xff]
  %v168 = vld [vmem:[%s2 + $0x378] sm:$0xff]
  %v169 = vld [vmem:[%s2 + $0x380] sm:$0xff]
  %v170 = vld [vmem:[%s2 + $0x388] sm:$0xff]
  %v171 = vld [vmem:[%s2 + $0x390] sm:$0xff]
  %v172 = vld [vmem:[%s2 + $0x398] sm:$0xff]
  %v173 = vld [vmem:[%s2 + $0x3a0] sm:$0xff]
  %v174 = vld [vmem:[%s2 + $0x3a8] sm:$0xff]
  %v175 = vld [vmem:[%s2 + $0x3b0] sm:$0xff]
  %v176 = vld [vmem:[%s2 + $0x3b8] sm:$0xff]
  %v177 = vld [vmem:[%s2 + $0x3c0] sm:$0xff]
  %v178 = vld [vmem:[%s2 + $0x3c8] sm:$0xff]
  %v179 = vld [vmem:[%s2 + $0x3d0] sm:$0xff]
  %v180 = vld [vmem:[%s2 + $0x3d8] sm:$0xff]
  %v181 = vld [vmem:[%s2 + $0x3e0] sm:$0xff]
  %v182 = vld [vmem:[%s2 + $0x3e8] sm:$0xff]
  %v183 = vld [vmem:[%s2 + $0x3f0] sm:$0xff]
  %v184 = vld [vmem:[%s2 + $0x3f8] sm:$0xff]
  %v185 = vld [vmem:[%s2 + $0x400] sm:$0xff]
  %v186 = vld [vmem:[%s2 + $0x408] sm:$0xff]
  %v187 = vld [vmem:[%s2 + $0x410] sm:$0xff]
  %v188 = vld [vmem:[%s2 + $0x418] sm:$0xff]
  %v189 = vld [vmem:[%s2 + $0x420] sm:$0xff]
  %v190 = vld [vmem:[%s2 + $0x428] sm:$0xff]
  %v191 = vld [vmem:[%s2 + $0x430] sm:$0xff]
  %v192 = vld [vmem:[%s2 + $0x438] sm:$0xff]
  %v193 = vld [vmem:[%s2 + $0x440] sm:$0xff]
  %v194 = vld [vmem:[%s2 + $0x448] sm:$0xff]
  %v195 = vld [vmem:[%s2 + $0x450] sm:$0xff]
  %v196 = vld [vmem:[%s2 + $0x458] sm:$0xff]
  %v197 = vld [vmem:[%s2 + $0x460] sm:$0xff]
  %v198 = vld [vmem:[%s2 + $0x468] sm:$0xff]
  %v199 = vld [vmem:[%s2 + $0x470] sm:$0xff]
  %v200 = vld [vmem:[%s2 + $0x478] sm:$0xff]
  %v201 = vld [vmem:[%s2 + $0x480] sm:$0xff]
  %v202 = vld [vmem:[%s2 + $0x488] sm:$0xff]
  %v203 = vld [vmem:[%s2 + $0x490] sm:$0xff]
  %v204 = vld [vmem:[%s2 + $0x498] sm:$0xff]
  %v205 = vld [vmem:[%s2 + $0x4a0] sm:$0xff]
  %v206 = vld [vmem:[%s2 + $0x4a8] sm:$0xff]
  %v207 = vld [vmem:[%s2 + $0x4b0] sm:$0xff]
  %v208 = vld [vmem:[%s2 + $0x4b8] sm:$0xff]
  %v209 = vld [vmem:[%s2 + $0x4c0] sm:$0xff]
  %v210 = vld [vmem:[%s2 + $0x4c8] sm:$0xff]
  %v211 = vld [vmem:[%s2 + $0x4d0] sm:$0xff]
  %v212 = vld [vmem:[%s2 + $0x4d8] sm:$0xff]
  %v213 = vld [vmem:[%s2 + $0x4e0] sm:$0xff]
  %v214 = vld [vmem:[%s2 + $0x4e8] sm:$0xff]
  %v215 = vld [vmem:[%s2 + $0x4f0] sm:$0xff]
  %v216 = vld [vmem:[%s2 + $0x4f8] sm:$0xff]
  %v217 = vld [vmem:[%s2 + $0x500] sm:$0xff]
  %v218 = vld [vmem:[%s2 + $0x508] sm:$0xff]
  %v219 = vld [vmem:[%s2 + $0x510] sm:$0xff]
  %v220 = vld [vmem:[%s2 + $0x518] sm:$0xff]
  %v221 = vld [vmem:[%s2 + $0x520] sm:$0xff]
  %v222 = vld [vmem:[%s2 + $0x528] sm:$0xff]
  %v223 = vld [vmem:[%s2 + $0x530] sm:$0xff]
  %v224 = vld [vmem:[%s2 + $0x538] sm:$0xff]
  %v225 = vld [vmem:[%s2 + $0x540] sm:$0xff]
  %v226 = vld [vmem:[%s2 + $0x548] sm:$0xff]
  %v227 = vld [vmem:[%s2 + $0x550] sm:$0xff]
  %v228 = vld [vmem:[%s2 + $0x558] sm:$0xff]
  %v229 = vld [vmem:[%s2 + $0x560] sm:$0xff]
  %v230 = vld [vmem:[%s2 + $0x568] sm:$0xff]
  %v231 = vld [vmem:[%s2 + $0x570] sm:$0xff]
  %v232 = vld [vmem:[%s2 + $0x578] sm:$0xff]
  %v233 = vld [vmem:[%s2 + $0x580] sm:$0xff]
  %v234 = vld [vmem:[%s2 + $0x588] sm:$0xff]
  %v235 = vld [vmem:[%s2 + $0x590] sm:$0xff]
  %v236 = vld [vmem:[%s2 + $0x598] sm:$0xff]
  %v237 = vld [vmem:[%s2 + $0x5a0] sm:$0xff]
  %v238 = vld [vmem:[%s2 + $0x5a8] sm:$0xff]
  %v239 = vld [vmem:[%s2 + $0x5b0] sm:$0xff]
  %v240 = vld [vmem:[%s2 + $0x5b8] sm:$0xff]
  %v241 = vld [vmem:[%s2 + $0x5c0] sm:$0xff]
  %v242 = vld [vmem:[%s2 + $0x5c8] sm:$0xff]
  %v243 = vld [vmem:[%s2 + $0x5d0] sm:$0xff]
  %v244 = vld [vmem:[%s2 + $0x5d8] sm:$0xff]
  %v245 = vld [vmem:[%s2 + $0x5e0] sm:$0xff]
  %v246 = vld [vmem:[%s2 + $0x5e8] sm:$0xff]
  %v247 = vld [vmem:[%s2 + $0x5f0] sm:$0xff]
  %v248 = vld [vmem:[%s2 + $0x5f8] sm:$0xff]
  %v249 = vld [vmem:[%s2 + $0x600] sm:$0xff]
  %v250 = vld [vmem:[%s2 + $0x608] sm:$0xff]
  %v251 = vld [vmem:[%s2 + $0x610] sm:$0xff]
  %v252 = vld [vmem:[%s2 + $0x618] sm:$0xff]
  %v253 = vld [vmem:[%s2 + $0x620] sm:$0xff]
  %v254 = vld [vmem:[%s2 + $0x628] sm:$0xff]
  %v255 = vld [vmem:[%s2 + $0x630] sm:$0xff]
  %v256 = vld [vmem:[%s2 + $0x638] sm:$0xff]
  %v257 = vld [vmem:[%s2 + $0x640] sm:$0xff]
  %v258 = vld [vmem:[%s2 + $0x648] sm:$0xff]
  %v259 = vld [vmem:[%s2 + $0x650] sm:$0xff]
  %v260 = vld [vmem:[%s2 + $0x658] sm:$0xff]
  %v261 = vld [vmem:[%s2 + $0x660] sm:$0xff]
  %v262 = vld [vmem:[%s2 + $0x668] sm:$0xff]
  %v263 = vld [vmem:[%s2 + $0x670] sm:$0xff]
  %v264 = vld [vmem:[%s2 + $0x678] sm:$0xff]
  %v265 = vld [vmem:[%s2 + $0x680] sm:$0xff]
  %v266 = vld [vmem:[%s2 + $0x688] sm:$0xff]
  %v267 = vld [vmem:[%s2 + $0x690] sm:$0xff]
  %v268 = vld [vmem:[%s2 + $0x698] sm:$0xff]
  %v269 = vld [vmem:[%s2 + $0x6a0] sm:$0xff]
  %v270 = vld [vmem:[%s2 + $0x6a8] sm:$0xff]
  %v271 = vld [vmem:[%s2 + $0x6b0] sm:$0xff]
  %v272 = vld [vmem:[%s2 + $0x6b8] sm:$0xff]
  %v273 = vld [vmem:[%s2 + $0x6c0] sm:$0xff]
  %v274 = vld [vmem:[%s2 + $0x6c8] sm:$0xff]
  %v275 = vld [vmem:[%s2 + $0x6d0] sm:$0xff]
  %v276 = vld [vmem:[%s2 + $0x6d8] sm:$0xff]
  %v277 = vld [vmem:[%s2 + $0x6e0] sm:$0xff]
  %v278 = vld [vmem:[%s2 + $0x6e8] sm:$0xff]
  %v279 = vld [vmem:[%s2 + $0x6f0] sm:$0xff]
  %v280 = vld [vmem:[%s2 + $0x6f8] sm:$0xff]
  %v281 = vld [vmem:[%s2 + $0x700] sm:$0xff]
  %v282 = vld [vmem:[%s2 + $0x708] sm:$0xff]
  %v283 = vld [vmem:[%s2 + $0x710] sm:$0xff]
  %v284 = vld [vmem:[%s2 + $0x718] sm:$0xff]
  %v285 = vld [vmem:[%s2 + $0x720] sm:$0xff]
  %v286 = vld [vmem:[%s2 + $0x728] sm:$0xff]
  %v287 = vld [vmem:[%s2 + $0x730] sm:$0xff]
  %v288 = vld [vmem:[%s2 + $0x738] sm:$0xff]
  %v289 = vld [vmem:[%s2 + $0x740] sm:$0xff]
  %v290 = vld [vmem:[%s2 + $0x748] sm:$0xff]
  %v291 = vld [vmem:[%s2 + $0x750] sm:$0xff]
  %v292 = vld [vmem:[%s2 + $0x758] sm:$0xff]
  %v293 = vld [vmem:[%s2 + $0x760] sm:$0xff]
  %v294 = vld [vmem:[%s2 + $0x768] sm:$0xff]
  %v295 = vld [vmem:[%s2 + $0x770] sm:$0xff]
  %v296 = vld [vmem:[%s2 + $0x778] sm:$0xff]
  %v297 = vld [vmem:[%s2 + $0x780] sm:$0xff]
  %v298 = vld [vmem:[%s2 + $0x788] sm:$0xff]
  %v299 = vld [vmem:[%s2 + $0x790] sm:$0xff]
  %v300 = vld [vmem:[%s2 + $0x798] sm:$0xff]
  %v301 = vld [vmem:[%s2 + $0x7a0] sm:$0xff]
  %v302 = vld [vmem:[%s2 + $0x7a8] sm:$0xff]
  %v303 = vld [vmem:[%s2 + $0x7b0] sm:$0xff]
  %v304 = vld [vmem:[%s2 + $0x7b8] sm:$0xff]
  %v305 = vld [vmem:[%s2 + $0x7c0] sm:$0xff]
  %v306 = vld [vmem:[%s2 + $0x7c8] sm:$0xff]
  %v307 = vld [vmem:[%s2 + $0x7d0] sm:$0xff]
  %v308 = vld [vmem:[%s2 + $0x7d8] sm:$0xff]
  %v309 = vld [vmem:[%s2 + $0x7e0] sm:$0xff]
  %v310 = vld [vmem:[%s2 + $0x7e8] sm:$0xff]
  %v311 = vld [vmem:[%s2 + $0x7f0] sm:$0xff]
  %v312 = vld [vmem:[%s2 + $0x7f8] sm:$0xff]
  %v313 = vld [vmem:[%s3] sm:$0x1]
  %v315 = vlaneseq
  %v316 = vshrl.u32 %v315, 7
  %v317 = vsub.s32 0, %v316
  %v318 = vrot.slane %v313, %v317
  %v324 = vcombine.high %v53, %v53
  %v326 = vunpack.c.l.s4 1983009808
  %v327 = vunpack.c.0.s8 %v326
  %v328 = vlaneseq
  %v329 = vshrl.u32 %v328, 7
  %v330 = vsub.s32 %v327, %v329
  %v331 = vrot.slane %v53, %v330
  %v333 = vunpack.c.l.s4 1983009808
  %v334 = vunpack.c.0.s8 %v333
  %v335 = vlaneseq
  %v336 = vshrl.u32 %v335, 7
  %v337 = vsub.s32 %v334, %v336
  %v338 = vrot.slane %v324, %v337
  %v339 = vcombine.high %v331, %v331
  %v340 = vcombine.high %v338, %v338
  %v341 = vcombine.high %v54, %v54
  %v343 = vunpack.c.l.s4 1983009808
  %v344 = vunpack.c.0.s8 %v343
  %v345 = vlaneseq
  %v346 = vshrl.u32 %v345, 7
  %v347 = vsub.s32 %v344, %v346
  %v348 = vrot.slane %v54, %v347
  %v350 = vunpack.c.l.s4 1983009808
  %v351 = vunpack.c.0.s8 %v350
  %v352 = vlaneseq
  %v353 = vshrl.u32 %v352, 7
  %v354 = vsub.s32 %v351, %v353
  %v355 = vrot.slane %v341, %v354
  %v356 = vcombine.high %v348, %v348
  %v357 = vcombine.high %v355, %v355
  %v358 = vcombine.high %v55, %v55
  %v360 = vunpack.c.l.s4 1983009808
  %v361 = vunpack.c.0.s8 %v360
  %v362 = vlaneseq
  %v363 = vshrl.u32 %v362, 7
  %v364 = vsub.s32 %v361, %v363
  %v365 = vrot.slane %v55, %v364
  %v367 = vunpack.c.l.s4 1983009808
  %v368 = vunpack.c.0.s8 %v367
  %v369 = vlaneseq
  %v370 = vshrl.u32 %v369, 7
  %v371 = vsub.s32 %v368, %v370
  %v372 = vrot.slane %v358, %v371
  %v373 = vcombine.high %v365, %v365
  %v374 = vcombine.high %v372, %v372
  %v375 = vcombine.high %v56, %v56
  %v377 = vunpack.c.l.s4 1983009808
  %v378 = vunpack.c.0.s8 %v377
  %v379 = vlaneseq
  %v380 = vshrl.u32 %v379, 7
  %v381 = vsub.s32 %v378, %v380
  %v382 = vrot.slane %v56, %v381
  %v384 = vunpack.c.l.s4 1983009808
  %v385 = vunpack.c.0.s8 %v384
  %v386 = vlaneseq
  %v387 = vshrl.u32 %v386, 7
  %v388 = vsub.s32 %v385, %v387
  %v389 = vrot.slane %v375, %v388
  %v390 = vcombine.high %v382, %v382
  %v391 = vcombine.high %v389, %v389
  %408 = vmatprep.subr.mxu0 0.0
  %409 = vmatpush1.msra.mxu0 %v57
  %410 = vmatprep.subr.mxu0 0.0
  %411 = vmatpush1.msra.mxu0 %v58
  %412 = vmatprep.subr.mxu0 0.0
  %413 = vmatpush1.msra.mxu0 %v59
  %414 = vmatprep.subr.mxu0 0.0
  %415 = vmatpush1.msra.mxu0 %v60
  %416 = vmatprep.subr.mxu0 0.0
  %417 = vmatpush1.msra.mxu0 %v61
  %418 = vmatprep.subr.mxu0 0.0
  %419 = vmatpush1.msra.mxu0 %v62
  %420 = vmatprep.subr.mxu0 0.0
  %421 = vmatpush1.msra.mxu0 %v63
  %422 = vmatprep.subr.mxu0 0.0
  %423 = vmatpush1.msra.mxu0 %v64
  %424 = vmatprep.subr.mxu0 0.0
  %425 = vmatpush1.msra.mxu0 %v65
  %426 = vmatprep.subr.mxu0 0.0
  %427 = vmatpush1.msra.mxu0 %v66
  %428 = vmatprep.subr.mxu0 0.0
  %429 = vmatpush1.msra.mxu0 %v67
  %430 = vmatprep.subr.mxu0 0.0
  %431 = vmatpush1.msra.mxu0 %v68
  %432 = vmatprep.subr.mxu0 0.0
  %433 = vmatpush1.msra.mxu0 %v69
  %434 = vmatprep.subr.mxu0 0.0
  %435 = vmatpush1.msra.mxu0 %v70
  %436 = vmatprep.subr.mxu0 0.0
  %437 = vmatpush1.msra.mxu0 %v71
  %438 = vmatprep.subr.mxu0 0.0
  %439 = vmatpush1.msra.mxu0 %v72
  %440 = vmatprep.subr.mxu0 0.0
  %441 = vmatpush1.msra.mxu0 %v73
  %442 = vmatprep.subr.mxu0 0.0
  %443 = vmatpush1.msra.mxu0 %v74
  %444 = vmatprep.subr.mxu0 0.0
  %445 = vmatpush1.msra.mxu0 %v75
  %446 = vmatprep.subr.mxu0 0.0
  %447 = vmatpush1.msra.mxu0 %v76
  %448 = vmatprep.subr.mxu0 0.0
  %449 = vmatpush1.msra.mxu0 %v77
  %450 = vmatprep.subr.mxu0 0.0
  %451 = vmatpush1.msra.mxu0 %v78
  %452 = vmatprep.subr.mxu0 0.0
  %453 = vmatpush1.msra.mxu0 %v79
  %454 = vmatprep.subr.mxu0 0.0
  %455 = vmatpush1.msra.mxu0 %v80
  %456 = vmatprep.subr.mxu0 0.0
  %457 = vmatpush1.msra.mxu0 %v81
  %458 = vmatprep.subr.mxu0 0.0
  %459 = vmatpush1.msra.mxu0 %v82
  %460 = vmatprep.subr.mxu0 0.0
  %461 = vmatpush1.msra.mxu0 %v83
  %462 = vmatprep.subr.mxu0 0.0
  %463 = vmatpush1.msra.mxu0 %v84
  %464 = vmatprep.subr.mxu0 0.0
  %465 = vmatpush1.msra.mxu0 %v85
  %466 = vmatprep.subr.mxu0 0.0
  %467 = vmatpush1.msra.mxu0 %v86
  %468 = vmatprep.subr.mxu0 0.0
  %469 = vmatpush1.msra.mxu0 %v87
  %470 = vmatprep.subr.mxu0 0.0
  %471 = vmatpush1.msra.mxu0 %v88
  %472 = vmatprep.mubr.f32.mxu0 %v339
  %473 = vmatmul.mubr.f32.gmra.mrb[0].mxu0 %v331
  %v474 = vpop.f32.mrb[0].mxu0
  %v475 = vadd.f32 %v318, %v474
  %v476 = vpop.f32.mrb[0].mxu0
  %477 = vdwg.mxu0
  %478 = vmatprep.subr.mxu0 0.0
  %479 = vmatpush1.msra.mxu0 %v89
  %480 = vmatprep.subr.mxu0 0.0
  %481 = vmatpush1.msra.mxu0 %v90
  %482 = vmatprep.subr.mxu0 0.0
  %483 = vmatpush1.msra.mxu0 %v91
  %484 = vmatprep.subr.mxu0 0.0
  %485 = vmatpush1.msra.mxu0 %v92
  %486 = vmatprep.subr.mxu0 0.0
  %487 = vmatpush1.msra.mxu0 %v93
  %488 = vmatprep.subr.mxu0 0.0
  %489 = vmatpush1.msra.mxu0 %v94
  %490 = vmatprep.subr.mxu0 0.0
  %491 = vmatpush1.msra.mxu0 %v95
  %492 = vmatprep.subr.mxu0 0.0
  %493 = vmatpush1.msra.mxu0 %v96
  %494 = vmatprep.subr.mxu0 0.0
  %495 = vmatpush1.msra.mxu0 %v97
  %496 = vmatprep.subr.mxu0 0.0
  %497 = vmatpush1.msra.mxu0 %v98
  %498 = vmatprep.subr.mxu0 0.0
  %499 = vmatpush1.msra.mxu0 %v99
  %500 = vmatprep.subr.mxu0 0.0
  %501 = vmatpush1.msra.mxu0 %v100
  %502 = vmatprep.subr.mxu0 0.0
  %503 = vmatpush1.msra.mxu0 %v101
  %504 = vmatprep.subr.mxu0 0.0
  %505 = vmatpush1.msra.mxu0 %v102
  %506 = vmatprep.subr.mxu0 0.0
  %507 = vmatpush1.msra.mxu0 %v103
  %508 = vmatprep.subr.mxu0 0.0
  %509 = vmatpush1.msra.mxu0 %v104
  %510 = vmatprep.subr.mxu0 0.0
  %511 = vmatpush1.msra.mxu0 %v105
  %512 = vmatprep.subr.mxu0 0.0
  %513 = vmatpush1.msra.mxu0 %v106
  %514 = vmatprep.subr.mxu0 0.0
  %515 = vmatpush1.msra.mxu0 %v107
  %516 = vmatprep.subr.mxu0 0.0
  %517 = vmatpush1.msra.mxu0 %v108
  %518 = vmatprep.subr.mxu0 0.0
  %519 = vmatpush1.msra.mxu0 %v109
  %520 = vmatprep.subr.mxu0 0.0
  %521 = vmatpush1.msra.mxu0 %v110
  %522 = vmatprep.subr.mxu0 0.0
  %523 = vmatpush1.msra.mxu0 %v111
  %524 = vmatprep.subr.mxu0 0.0
  %525 = vmatpush1.msra.mxu0 %v112
  %526 = vmatprep.subr.mxu0 0.0
  %527 = vmatpush1.msra.mxu0 %v113
  %528 = vmatprep.subr.mxu0 0.0
  %529 = vmatpush1.msra.mxu0 %v114
  %530 = vmatprep.subr.mxu0 0.0
  %531 = vmatpush1.msra.mxu0 %v115
  %532 = vmatprep.subr.mxu0 0.0
  %533 = vmatpush1.msra.mxu0 %v116
  %534 = vmatprep.subr.mxu0 0.0
  %535 = vmatpush1.msra.mxu0 %v117
  %536 = vmatprep.subr.mxu0 0.0
  %537 = vmatpush1.msra.mxu0 %v118
  %538 = vmatprep.subr.mxu0 0.0
  %539 = vmatpush1.msra.mxu0 %v119
  %540 = vmatprep.subr.mxu0 0.0
  %541 = vmatpush1.msra.mxu0 %v120
  %542 = vmatprep.mubr.f32.mxu0 %v340
  %543 = vmatmul.mubr.f32.gmra.mrb[0].mxu0 %v338
  %v544 = vpop.f32.mrb[0].mxu0
  %v545 = vadd.f32 %v475, %v544
  %v546 = vpop.f32.mrb[0].mxu0
  %547 = vdwg.mxu0
  %548 = vmatprep.subr.mxu0 0.0
  %549 = vmatpush1.msra.mxu0 %v121
  %550 = vmatprep.subr.mxu0 0.0
  %551 = vmatpush1.msra.mxu0 %v122
  %552 = vmatprep.subr.mxu0 0.0
  %553 = vmatpush1.msra.mxu0 %v123
  %554 = vmatprep.subr.mxu0 0.0
  %555 = vmatpush1.msra.mxu0 %v124
  %556 = vmatprep.subr.mxu0 0.0
  %557 = vmatpush1.msra.mxu0 %v125
  %558 = vmatprep.subr.mxu0 0.0
  %559 = vmatpush1.msra.mxu0 %v126
  %560 = vmatprep.subr.mxu0 0.0
  %561 = vmatpush1.msra.mxu0 %v127
  %562 = vmatprep.subr.mxu0 0.0
  %563 = vmatpush1.msra.mxu0 %v128
  %564 = vmatprep.subr.mxu0 0.0
  %565 = vmatpush1.msra.mxu0 %v129
  %566 = vmatprep.subr.mxu0 0.0
  %567 = vmatpush1.msra.mxu0 %v130
  %568 = vmatprep.subr.mxu0 0.0
  %569 = vmatpush1.msra.mxu0 %v131
  %570 = vmatprep.subr.mxu0 0.0
  %571 = vmatpush1.msra.mxu0 %v132
  %572 = vmatprep.subr.mxu0 0.0
  %573 = vmatpush1.msra.mxu0 %v133
  %574 = vmatprep.subr.mxu0 0.0
  %575 = vmatpush1.msra.mxu0 %v134
  %576 = vmatprep.subr.mxu0 0.0
  %577 = vmatpush1.msra.mxu0 %v135
  %578 = vmatprep.subr.mxu0 0.0
  %579 = vmatpush1.msra.mxu0 %v136
  %580 = vmatprep.subr.mxu0 0.0
  %581 = vmatpush1.msra.mxu0 %v137
  %582 = vmatprep.subr.mxu0 0.0
  %583 = vmatpush1.msra.mxu0 %v138
  %584 = vmatprep.subr.mxu0 0.0
  %585 = vmatpush1.msra.mxu0 %v139
  %586 = vmatprep.subr.mxu0 0.0
  %587 = vmatpush1.msra.mxu0 %v140
  %588 = vmatprep.subr.mxu0 0.0
  %589 = vmatpush1.msra.mxu0 %v141
  %590 = vmatprep.subr.mxu0 0.0
  %591 = vmatpush1.msra.mxu0 %v142
  %592 = vmatprep.subr.mxu0 0.0
  %593 = vmatpush1.msra.mxu0 %v143
  %594 = vmatprep.subr.mxu0 0.0
  %595 = vmatpush1.msra.mxu0 %v144
  %596 = vmatprep.subr.mxu0 0.0
  %597 = vmatpush1.msra.mxu0 %v145
  %598 = vmatprep.subr.mxu0 0.0
  %599 = vmatpush1.msra.mxu0 %v146
  %600 = vmatprep.subr.mxu0 0.0
  %601 = vmatpush1.msra.mxu0 %v147
  %602 = vmatprep.subr.mxu0 0.0
  %603 = vmatpush1.msra.mxu0 %v148
  %604 = vmatprep.subr.mxu0 0.0
  %605 = vmatpush1.msra.mxu0 %v149
  %606 = vmatprep.subr.mxu0 0.0
  %607 = vmatpush1.msra.mxu0 %v150
  %608 = vmatprep.subr.mxu0 0.0
  %609 = vmatpush1.msra.mxu0 %v151
  %610 = vmatprep.subr.mxu0 0.0
  %611 = vmatpush1.msra.mxu0 %v152
  %612 = vmatprep.mubr.f32.mxu0 %v356
  %613 = vmatmul.mubr.f32.gmra.mrb[0].mxu0 %v348
  %v614 = vpop.f32.mrb[0].mxu0
  %v615 = vadd.f32 %v545, %v614
  %v616 = vpop.f32.mrb[0].mxu0
  %617 = vdwg.mxu0
  %618 = vmatprep.subr.mxu0 0.0
  %619 = vmatpush1.msra.mxu0 %v153
  %620 = vmatprep.subr.mxu0 0.0
  %621 = vmatpush1.msra.mxu0 %v154
  %622 = vmatprep.subr.mxu0 0.0
  %623 = vmatpush1.msra.mxu0 %v155
  %624 = vmatprep.subr.mxu0 0.0
  %625 = vmatpush1.msra.mxu0 %v156
  %626 = vmatprep.subr.mxu0 0.0
  %627 = vmatpush1.msra.mxu0 %v157
  %628 = vmatprep.subr.mxu0 0.0
  %629 = vmatpush1.msra.mxu0 %v158
  %630 = vmatprep.subr.mxu0 0.0
  %631 = vmatpush1.msra.mxu0 %v159
  %632 = vmatprep.subr.mxu0 0.0
  %633 = vmatpush1.msra.mxu0 %v160
  %634 = vmatprep.subr.mxu0 0.0
  %635 = vmatpush1.msra.mxu0 %v161
  %636 = vmatprep.subr.mxu0 0.0
  %637 = vmatpush1.msra.mxu0 %v162
  %638 = vmatprep.subr.mxu0 0.0
  %639 = vmatpush1.msra.mxu0 %v163
  %640 = vmatprep.subr.mxu0 0.0
  %641 = vmatpush1.msra.mxu0 %v164
  %642 = vmatprep.subr.mxu0 0.0
  %643 = vmatpush1.msra.mxu0 %v165
  %644 = vmatprep.subr.mxu0 0.0
  %645 = vmatpush1.msra.mxu0 %v166
  %646 = vmatprep.subr.mxu0 0.0
  %647 = vmatpush1.msra.mxu0 %v167
  %648 = vmatprep.subr.mxu0 0.0
  %649 = vmatpush1.msra.mxu0 %v168
  %650 = vmatprep.subr.mxu0 0.0
  %651 = vmatpush1.msra.mxu0 %v169
  %652 = vmatprep.subr.mxu0 0.0
  %653 = vmatpush1.msra.mxu0 %v170
  %654 = vmatprep.subr.mxu0 0.0
  %655 = vmatpush1.msra.mxu0 %v171
  %656 = vmatprep.subr.mxu0 0.0
  %657 = vmatpush1.msra.mxu0 %v172
  %658 = vmatprep.subr.mxu0 0.0
  %659 = vmatpush1.msra.mxu0 %v173
  %660 = vmatprep.subr.mxu0 0.0
  %661 = vmatpush1.msra.mxu0 %v174
  %662 = vmatprep.subr.mxu0 0.0
  %663 = vmatpush1.msra.mxu0 %v175
  %664 = vmatprep.subr.mxu0 0.0
  %665 = vmatpush1.msra.mxu0 %v176
  %666 = vmatprep.subr.mxu0 0.0
  %667 = vmatpush1.msra.mxu0 %v177
  %668 = vmatprep.subr.mxu0 0.0
  %669 = vmatpush1.msra.mxu0 %v178
  %670 = vmatprep.subr.mxu0 0.0
  %671 = vmatpush1.msra.mxu0 %v179
  %672 = vmatprep.subr.mxu0 0.0
  %673 = vmatpush1.msra.mxu0 %v180
  %674 = vmatprep.subr.mxu0 0.0
  %675 = vmatpush1.msra.mxu0 %v181
  %676 = vmatprep.subr.mxu0 0.0
  %677 = vmatpush1.msra.mxu0 %v182
  %678 = vmatprep.subr.mxu0 0.0
  %679 = vmatpush1.msra.mxu0 %v183
  %680 = vmatprep.subr.mxu0 0.0
  %681 = vmatpush1.msra.mxu0 %v184
  %682 = vmatprep.mubr.f32.mxu0 %v357
  %683 = vmatmul.mubr.f32.gmra.mrb[0].mxu0 %v355
  %v684 = vpop.f32.mrb[0].mxu0
  %v685 = vadd.f32 %v615, %v684
  %v686 = vpop.f32.mrb[0].mxu0
  %687 = vdwg.mxu0
  %688 = vmatprep.subr.mxu0 0.0
  %689 = vmatpush1.msra.mxu0 %v185
  %690 = vmatprep.subr.mxu0 0.0
  %691 = vmatpush1.msra.mxu0 %v186
  %692 = vmatprep.subr.mxu0 0.0
  %693 = vmatpush1.msra.mxu0 %v187
  %694 = vmatprep.subr.mxu0 0.0
  %695 = vmatpush1.msra.mxu0 %v188
  %696 = vmatprep.subr.mxu0 0.0
  %697 = vmatpush1.msra.mxu0 %v189
  %698 = vmatprep.subr.mxu0 0.0
  %699 = vmatpush1.msra.mxu0 %v190
  %700 = vmatprep.subr.mxu0 0.0
  %701 = vmatpush1.msra.mxu0 %v191
  %702 = vmatprep.subr.mxu0 0.0
  %703 = vmatpush1.msra.mxu0 %v192
  %704 = vmatprep.subr.mxu0 0.0
  %705 = vmatpush1.msra.mxu0 %v193
  %706 = vmatprep.subr.mxu0 0.0
  %707 = vmatpush1.msra.mxu0 %v194
  %708 = vmatprep.subr.mxu0 0.0
  %709 = vmatpush1.msra.mxu0 %v195
  %710 = vmatprep.subr.mxu0 0.0
  %711 = vmatpush1.msra.mxu0 %v196
  %712 = vmatprep.subr.mxu0 0.0
  %713 = vmatpush1.msra.mxu0 %v197
  %714 = vmatprep.subr.mxu0 0.0
  %715 = vmatpush1.msra.mxu0 %v198
  %716 = vmatprep.subr.mxu0 0.0
  %717 = vmatpush1.msra.mxu0 %v199
  %718 = vmatprep.subr.mxu0 0.0
  %719 = vmatpush1.msra.mxu0 %v200
  %720 = vmatprep.subr.mxu0 0.0
  %721 = vmatpush1.msra.mxu0 %v201
  %722 = vmatprep.subr.mxu0 0.0
  %723 = vmatpush1.msra.mxu0 %v202
  %724 = vmatprep.subr.mxu0 0.0
  %725 = vmatpush1.msra.mxu0 %v203
  %726 = vmatprep.subr.mxu0 0.0
  %727 = vmatpush1.msra.mxu0 %v204
  %728 = vmatprep.subr.mxu0 0.0
  %729 = vmatpush1.msra.mxu0 %v205
  %730 = vmatprep.subr.mxu0 0.0
  %731 = vmatpush1.msra.mxu0 %v206
  %732 = vmatprep.subr.mxu0 0.0
  %733 = vmatpush1.msra.mxu0 %v207
  %734 = vmatprep.subr.mxu0 0.0
  %735 = vmatpush1.msra.mxu0 %v208
  %736 = vmatprep.subr.mxu0 0.0
  %737 = vmatpush1.msra.mxu0 %v209
  %738 = vmatprep.subr.mxu0 0.0
  %739 = vmatpush1.msra.mxu0 %v210
  %740 = vmatprep.subr.mxu0 0.0
  %741 = vmatpush1.msra.mxu0 %v211
  %742 = vmatprep.subr.mxu0 0.0
  %743 = vmatpush1.msra.mxu0 %v212
  %744 = vmatprep.subr.mxu0 0.0
  %745 = vmatpush1.msra.mxu0 %v213
  %746 = vmatprep.subr.mxu0 0.0
  %747 = vmatpush1.msra.mxu0 %v214
  %748 = vmatprep.subr.mxu0 0.0
  %749 = vmatpush1.msra.mxu0 %v215
  %750 = vmatprep.subr.mxu0 0.0
  %751 = vmatpush1.msra.mxu0 %v216
  %752 = vmatprep.mubr.f32.mxu0 %v373
  %753 = vmatmul.mubr.f32.gmra.mrb[0].mxu0 %v365
  %v754 = vpop.f32.mrb[0].mxu0
  %v755 = vadd.f32 %v685, %v754
  %v756 = vpop.f32.mrb[0].mxu0
  %757 = vdwg.mxu0
  %758 = vmatprep.subr.mxu0 0.0
  %759 = vmatpush1.msra.mxu0 %v217
  %760 = vmatprep.subr.mxu0 0.0
  %761 = vmatpush1.msra.mxu0 %v218
  %762 = vmatprep.subr.mxu0 0.0
  %763 = vmatpush1.msra.mxu0 %v219
  %764 = vmatprep.subr.mxu0 0.0
  %765 = vmatpush1.msra.mxu0 %v220
  %766 = vmatprep.subr.mxu0 0.0
  %767 = vmatpush1.msra.mxu0 %v221
  %768 = vmatprep.subr.mxu0 0.0
  %769 = vmatpush1.msra.mxu0 %v222
  %770 = vmatprep.subr.mxu0 0.0
  %771 = vmatpush1.msra.mxu0 %v223
  %772 = vmatprep.subr.mxu0 0.0
  %773 = vmatpush1.msra.mxu0 %v224
  %774 = vmatprep.subr.mxu0 0.0
  %775 = vmatpush1.msra.mxu0 %v225
  %776 = vmatprep.subr.mxu0 0.0
  %777 = vmatpush1.msra.mxu0 %v226
  %778 = vmatprep.subr.mxu0 0.0
  %779 = vmatpush1.msra.mxu0 %v227
  %780 = vmatprep.subr.mxu0 0.0
  %781 = vmatpush1.msra.mxu0 %v228
  %782 = vmatprep.subr.mxu0 0.0
  %783 = vmatpush1.msra.mxu0 %v229
  %784 = vmatprep.subr.mxu0 0.0
  %785 = vmatpush1.msra.mxu0 %v230
  %786 = vmatprep.subr.mxu0 0.0
  %787 = vmatpush1.msra.mxu0 %v231
  %788 = vmatprep.subr.mxu0 0.0
  %789 = vmatpush1.msra.mxu0 %v232
  %790 = vmatprep.subr.mxu0 0.0
  %791 = vmatpush1.msra.mxu0 %v233
  %792 = vmatprep.subr.mxu0 0.0
  %793 = vmatpush1.msra.mxu0 %v234
  %794 = vmatprep.subr.mxu0 0.0
  %795 = vmatpush1.msra.mxu0 %v235
  %796 = vmatprep.subr.mxu0 0.0
  %797 = vmatpush1.msra.mxu0 %v236
  %798 = vmatprep.subr.mxu0 0.0
  %799 = vmatpush1.msra.mxu0 %v237
  %800 = vmatprep.subr.mxu0 0.0
  %801 = vmatpush1.msra.mxu0 %v238
  %802 = vmatprep.subr.mxu0 0.0
  %803 = vmatpush1.msra.mxu0 %v239
  %804 = vmatprep.subr.mxu0 0.0
  %805 = vmatpush1.msra.mxu0 %v240
  %806 = vmatprep.subr.mxu0 0.0
  %807 = vmatpush1.msra.mxu0 %v241
  %808 = vmatprep.subr.mxu0 0.0
  %809 = vmatpush1.msra.mxu0 %v242
  %810 = vmatprep.subr.mxu0 0.0
  %811 = vmatpush1.msra.mxu0 %v243
  %812 = vmatprep.subr.mxu0 0.0
  %813 = vmatpush1.msra.mxu0 %v244
  %814 = vmatprep.subr.mxu0 0.0
  %815 = vmatpush1.msra.mxu0 %v245
  %816 = vmatprep.subr.mxu0 0.0
  %817 = vmatpush1.msra.mxu0 %v246
  %818 = vmatprep.subr.mxu0 0.0
  %819 = vmatpush1.msra.mxu0 %v247
  %820 = vmatprep.subr.mxu0 0.0
  %821 = vmatpush1.msra.mxu0 %v248
  %822 = vmatprep.mubr.f32.mxu0 %v374
  %823 = vmatmul.mubr.f32.gmra.mrb[0].mxu0 %v372
  %v824 = vpop.f32.mrb[0].mxu0
  %v825 = vadd.f32 %v755, %v824
  %v826 = vpop.f32.mrb[0].mxu0
  %827 = vdwg.mxu0
  %828 = vmatprep.subr.mxu0 0.0
  %829 = vmatpush1.msra.mxu0 %v249
  %830 = vmatprep.subr.mxu0 0.0
  %831 = vmatpush1.msra.mxu0 %v250
  %832 = vmatprep.subr.mxu0 0.0
  %833 = vmatpush1.msra.mxu0 %v251
  %834 = vmatprep.subr.mxu0 0.0
  %835 = vmatpush1.msra.mxu0 %v252
  %836 = vmatprep.subr.mxu0 0.0
  %837 = vmatpush1.msra.mxu0 %v253
  %838 = vmatprep.subr.mxu0 0.0
  %839 = vmatpush1.msra.mxu0 %v254
  %840 = vmatprep.subr.mxu0 0.0
  %841 = vmatpush1.msra.mxu0 %v255
  %842 = vmatprep.subr.mxu0 0.0
  %843 = vmatpush1.msra.mxu0 %v256
  %844 = vmatprep.subr.mxu0 0.0
  %845 = vmatpush1.msra.mxu0 %v257
  %846 = vmatprep.subr.mxu0 0.0
  %847 = vmatpush1.msra.mxu0 %v258
  %848 = vmatprep.subr.mxu0 0.0
  %849 = vmatpush1.msra.mxu0 %v259
  %850 = vmatprep.subr.mxu0 0.0
  %851 = vmatpush1.msra.mxu0 %v260
  %852 = vmatprep.subr.mxu0 0.0
  %853 = vmatpush1.msra.mxu0 %v261
  %854 = vmatprep.subr.mxu0 0.0
  %855 = vmatpush1.msra.mxu0 %v262
  %856 = vmatprep.subr.mxu0 0.0
  %857 = vmatpush1.msra.mxu0 %v263
  %858 = vmatprep.subr.mxu0 0.0
  %859 = vmatpush1.msra.mxu0 %v264
  %860 = vmatprep.subr.mxu0 0.0
  %861 = vmatpush1.msra.mxu0 %v265
  %862 = vmatprep.subr.mxu0 0.0
  %863 = vmatpush1.msra.mxu0 %v266
  %864 = vmatprep.subr.mxu0 0.0
  %865 = vmatpush1.msra.mxu0 %v267
  %866 = vmatprep.subr.mxu0 0.0
  %867 = vmatpush1.msra.mxu0 %v268
  %868 = vmatprep.subr.mxu0 0.0
  %869 = vmatpush1.msra.mxu0 %v269
  %870 = vmatprep.subr.mxu0 0.0
  %871 = vmatpush1.msra.mxu0 %v270
  %872 = vmatprep.subr.mxu0 0.0
  %873 = vmatpush1.msra.mxu0 %v271
  %874 = vmatprep.subr.mxu0 0.0
  %875 = vmatpush1.msra.mxu0 %v272
  %876 = vmatprep.subr.mxu0 0.0
  %877 = vmatpush1.msra.mxu0 %v273
  %878 = vmatprep.subr.mxu0 0.0
  %879 = vmatpush1.msra.mxu0 %v274
  %880 = vmatprep.subr.mxu0 0.0
  %881 = vmatpush1.msra.mxu0 %v275
  %882 = vmatprep.subr.mxu0 0.0
  %883 = vmatpush1.msra.mxu0 %v276
  %884 = vmatprep.subr.mxu0 0.0
  %885 = vmatpush1.msra.mxu0 %v277
  %886 = vmatprep.subr.mxu0 0.0
  %887 = vmatpush1.msra.mxu0 %v278
  %888 = vmatprep.subr.mxu0 0.0
  %889 = vmatpush1.msra.mxu0 %v279
  %890 = vmatprep.subr.mxu0 0.0
  %891 = vmatpush1.msra.mxu0 %v280
  %892 = vmatprep.mubr.f32.mxu0 %v390
  %893 = vmatmul.mubr.f32.gmra.mrb[0].mxu0 %v382
  %v894 = vpop.f32.mrb[0].mxu0
  %v895 = vadd.f32 %v825, %v894
  %v896 = vpop.f32.mrb[0].mxu0
  %897 = vdwg.mxu0
  %898 = vmatprep.subr.mxu0 0.0
  %899 = vmatpush1.msra.mxu0 %v281
  %900 = vmatprep.subr.mxu0 0.0
  %901 = vmatpush1.msra.mxu0 %v282
  %902 = vmatprep.subr.mxu0 0.0
  %903 = vmatpush1.msra.mxu0 %v283
  %904 = vmatprep.subr.mxu0 0.0
  %905 = vmatpush1.msra.mxu0 %v284
  %906 = vmatprep.subr.mxu0 0.0
  %907 = vmatpush1.msra.mxu0 %v285
  %908 = vmatprep.subr.mxu0 0.0
  %909 = vmatpush1.msra.mxu0 %v286
  %910 = vmatprep.subr.mxu0 0.0
  %911 = vmatpush1.msra.mxu0 %v287
  %912 = vmatprep.subr.mxu0 0.0
  %913 = vmatpush1.msra.mxu0 %v288
  %914 = vmatprep.subr.mxu0 0.0
  %915 = vmatpush1.msra.mxu0 %v289
  %916 = vmatprep.subr.mxu0 0.0
  %917 = vmatpush1.msra.mxu0 %v290
  %918 = vmatprep.subr.mxu0 0.0
  %919 = vmatpush1.msra.mxu0 %v291
  %920 = vmatprep.subr.mxu0 0.0
  %921 = vmatpush1.msra.mxu0 %v292
  %922 = vmatprep.subr.mxu0 0.0
  %923 = vmatpush1.msra.mxu0 %v293
  %924 = vmatprep.subr.mxu0 0.0
  %925 = vmatpush1.msra.mxu0 %v294
  %926 = vmatprep.subr.mxu0 0.0
  %927 = vmatpush1.msra.mxu0 %v295
  %928 = vmatprep.subr.mxu0 0.0
  %929 = vmatpush1.msra.mxu0 %v296
  %930 = vmatprep.subr.mxu0 0.0
  %931 = vmatpush1.msra.mxu0 %v297
  %932 = vmatprep.subr.mxu0 0.0
  %933 = vmatpush1.msra.mxu0 %v298
  %934 = vmatprep.subr.mxu0 0.0
  %935 = vmatpush1.msra.mxu0 %v299
  %936 = vmatprep.subr.mxu0 0.0
  %937 = vmatpush1.msra.mxu0 %v300
  %938 = vmatprep.subr.mxu0 0.0
  %939 = vmatpush1.msra.mxu0 %v301
  %940 = vmatprep.subr.mxu0 0.0
  %941 = vmatpush1.msra.mxu0 %v302
  %942 = vmatprep.subr.mxu0 0.0
  %943 = vmatpush1.msra.mxu0 %v303
  %944 = vmatprep.subr.mxu0 0.0
  %945 = vmatpush1.msra.mxu0 %v304
  %946 = vmatprep.subr.mxu0 0.0
  %947 = vmatpush1.msra.mxu0 %v305
  %948 = vmatprep.subr.mxu0 0.0
  %949 = vmatpush1.msra.mxu0 %v306
  %950 = vmatprep.subr.mxu0 0.0
  %951 = vmatpush1.msra.mxu0 %v307
  %952 = vmatprep.subr.mxu0 0.0
  %953 = vmatpush1.msra.mxu0 %v308
  %954 = vmatprep.subr.mxu0 0.0
  %955 = vmatpush1.msra.mxu0 %v309
  %956 = vmatprep.subr.mxu0 0.0
  %957 = vmatpush1.msra.mxu0 %v310
  %958 = vmatprep.subr.mxu0 0.0
  %959 = vmatpush1.msra.mxu0 %v311
  %960 = vmatprep.subr.mxu0 0.0
  %961 = vmatpush1.msra.mxu0 %v312
  %962 = vmatprep.mubr.f32.mxu0 %v391
  %963 = vmatmul.mubr.f32.gmra.mrb[0].mxu0 %v389
  %v964 = vpop.f32.mrb[0].mxu0
  %v965 = vadd.f32 %v895, %v964
  %v966 = vpop.f32.mrb[0].mxu0
  %967 = vdwg.mxu0
  %v968 = vmax.f32 %v965, 0.0
  %v969 = vld [vmem:[%s4] sm:$0xff]
  %v970 = vld [vmem:[%s4 + $0x8] sm:$0xff]
  %v971 = vld [vmem:[%s4 + $0x10] sm:$0xff]
  %v972 = vld [vmem:[%s4 + $0x18] sm:$0xff]
  %v973 = vld [vmem:[%s5] sm:$0x1]
  %v975 = vlaneseq
  %v976 = vshrl.u32 %v975, 7
  %v977 = vsub.s32 0, %v976
  %v978 = vrot.slane %v973, %v977
  %vm980 = vcmask 261120
  %v982 = vsel %vm980, %v968, 0
  %984 = vmatprep.subr.mxu0 0.0
  %985 = vmatpush1.msra.mxu0 %v969
  %986 = vmatprep.subr.mxu0 0.0
  %987 = vmatpush1.msra.mxu0 %v970
  %988 = vmatprep.subr.mxu0 0.0
  %989 = vmatpush1.msra.mxu0 %v971
  %990 = vmatprep.subr.mxu0 0.0
  %991 = vmatpush1.msra.mxu0 %v972
  %992 = vmatprep.subr.mxu0 0.0
  %993 = vmatpush1.msra.mxu0 0.0
  %994 = vmatprep.subr.mxu0 0.0
  %995 = vmatpush1.msra.mxu0 0.0
  %996 = vmatprep.subr.mxu0 0.0
  %997 = vmatpush1.msra.mxu0 0.0
  %998 = vmatprep.subr.mxu0 0.0
  %999 = vmatpush1.msra.mxu0 0.0
  %1000 = vmatprep.subr.mxu0 0.0
  %1001 = vmatpush1.msra.mxu0 0.0
  %1002 = vmatprep.subr.mxu0 0.0
  %1003 = vmatpush1.msra.mxu0 0.0
  %1004 = vmatprep.subr.mxu0 0.0
  %1005 = vmatpush1.msra.mxu0 0.0
  %1006 = vmatprep.subr.mxu0 0.0
  %1007 = vmatpush1.msra.mxu0 0.0
  %1008 = vmatprep.subr.mxu0 0.0
  %1009 = vmatpush1.msra.mxu0 0.0
  %1010 = vmatprep.subr.mxu0 0.0
  %1011 = vmatpush1.msra.mxu0 0.0
  %1012 = vmatprep.subr.mxu0 0.0
  %1013 = vmatpush1.msra.mxu0 0.0
  %1014 = vmatprep.subr.mxu0 0.0
  %1015 = vmatpush1.msra.mxu0 0.0
  %1016 = vmatprep.subr.mxu0 0.0
  %1017 = vmatpush1.msra.mxu0 0.0
  %1018 = vmatprep.subr.mxu0 0.0
  %1019 = vmatpush1.msra.mxu0 0.0
  %1020 = vmatprep.subr.mxu0 0.0
  %1021 = vmatpush1.msra.mxu0 0.0
  %1022 = vmatprep.subr.mxu0 0.0
  %1023 = vmatpush1.msra.mxu0 0.0
  %1024 = vmatprep.subr.mxu0 0.0
  %1025 = vmatpush1.msra.mxu0 0.0
  %1026 = vmatprep.subr.mxu0 0.0
  %1027 = vmatpush1.msra.mxu0 0.0
  %1028 = vmatprep.subr.mxu0 0.0
  %1029 = vmatpush1.msra.mxu0 0.0
  %1030 = vmatprep.subr.mxu0 0.0
  %1031 = vmatpush1.msra.mxu0 0.0
  %1032 = vmatprep.subr.mxu0 0.0
  %1033 = vmatpush1.msra.mxu0 0.0
  %1034 = vmatprep.subr.mxu0 0.0
  %1035 = vmatpush1.msra.mxu0 0.0
  %1036 = vmatprep.subr.mxu0 0.0
  %1037 = vmatpush1.msra.mxu0 0.0
  %1038 = vmatprep.subr.mxu0 0.0
  %1039 = vmatpush1.msra.mxu0 0.0
  %1040 = vmatprep.subr.mxu0 0.0
  %1041 = vmatpush1.msra.mxu0 0.0
  %1042 = vmatprep.subr.mxu0 0.0
  %1043 = vmatpush1.msra.mxu0 0.0
  %1044 = vmatprep.subr.mxu0 0.0
  %1045 = vmatpush1.msra.mxu0 0.0
  %1046 = vmatprep.subr.mxu0 0.0
  %1047 = vmatpush1.msra.mxu0 0.0
  %1048 = vmatprep.mubr.f32.mxu0 0.0
  %1049 = vmatmul.mubr.f32.gmra.mrb[0].mxu0 %v982
  %v1050 = vpop.f32.mrb[0].mxu0
  %v1051 = vadd.f32 %v978, %v1050
  %v1052 = vpop.f32.mrb[0].mxu0
  %1053 = vdwg.mxu0
  %v1054 = vmax.f32 %v1051, 0.0
  %v1055 = vld [vmem:[%s6] sm:$0xff]
  %v1056 = vld [vmem:[%s6 + $0x8] sm:$0xff]
  %v1057 = vld [vmem:[%s6 + $0x10] sm:$0xff]
  %v1058 = vld [vmem:[%s6 + $0x18] sm:$0xff]
  %v1059 = vld [vmem:[%s7] sm:$0x1]
  %v1060 = vld [vmem:[%s8] sm:$0xff]
  %v1061 = vld [vmem:[%s8 + $0x8] sm:$0xff]
  %v1062 = vld [vmem:[%s8 + $0x10] sm:$0xff]
  %v1063 = vld [vmem:[%s8 + $0x18] sm:$0xff]
  %v1064 = vld [vmem:[%s9] sm:$0x1]
  %v1066 = vlaneseq
  %v1067 = vshrl.u32 %v1066, 7
  %v1068 = vsub.s32 0, %v1067
  %v1069 = vrot.slane %v1059, %v1068
  %v1072 = vsel %vm980, %v1054, 0
  %1074 = vmatprep.subr.mxu0 0.0
  %1075 = vmatpush1.msra.mxu0 %v1055
  %1076 = vmatprep.subr.mxu0 0.0
  %1077 = vmatpush1.msra.mxu0 %v1056
  %1078 = vmatprep.subr.mxu0 0.0
  %1079 = vmatpush1.msra.mxu0 %v1057
  %1080 = vmatprep.subr.mxu0 0.0
  %1081 = vmatpush1.msra.mxu0 %v1058
  %1082 = vmatprep.subr.mxu0 0.0
  %1083 = vmatpush1.msra.mxu0 0.0
  %1084 = vmatprep.subr.mxu0 0.0
  %1085 = vmatpush1.msra.mxu0 0.0
  %1086 = vmatprep.subr.mxu0 0.0
  %1087 = vmatpush1.msra.mxu0 0.0
  %1088 = vmatprep.subr.mxu0 0.0
  %1089 = vmatpush1.msra.mxu0 0.0
  %1090 = vmatprep.subr.mxu0 0.0
  %1091 = vmatpush1.msra.mxu0 0.0
  %1092 = vmatprep.subr.mxu0 0.0
  %1093 = vmatpush1.msra.mxu0 0.0
  %1094 = vmatprep.subr.mxu0 0.0
  %1095 = vmatpush1.msra.mxu0 0.0
  %1096 = vmatprep.subr.mxu0 0.0
  %1097 = vmatpush1.msra.mxu0 0.0
  %1098 = vmatprep.subr.mxu0 0.0
  %1099 = vmatpush1.msra.mxu0 0.0
  %1100 = vmatprep.subr.mxu0 0.0
  %1101 = vmatpush1.msra.mxu0 0.0
  %1102 = vmatprep.subr.mxu0 0.0
  %1103 = vmatpush1.msra.mxu0 0.0
  %1104 = vmatprep.subr.mxu0 0.0
  %1105 = vmatpush1.msra.mxu0 0.0
  %1106 = vmatprep.subr.mxu0 0.0
  %1107 = vmatpush1.msra.mxu0 0.0
  %1108 = vmatprep.subr.mxu0 0.0
  %1109 = vmatpush1.msra.mxu0 0.0
  %1110 = vmatprep.subr.mxu0 0.0
  %1111 = vmatpush1.msra.mxu0 0.0
  %1112 = vmatprep.subr.mxu0 0.0
  %1113 = vmatpush1.msra.mxu0 0.0
  %1114 = vmatprep.subr.mxu0 0.0
  %1115 = vmatpush1.msra.mxu0 0.0
  %1116 = vmatprep.subr.mxu0 0.0
  %1117 = vmatpush1.msra.mxu0 0.0
  %1118 = vmatprep.subr.mxu0 0.0
  %1119 = vmatpush1.msra.mxu0 0.0
  %1120 = vmatprep.subr.mxu0 0.0
  %1121 = vmatpush1.msra.mxu0 0.0
  %1122 = vmatprep.subr.mxu0 0.0
  %1123 = vmatpush1.msra.mxu0 0.0
  %1124 = vmatprep.subr.mxu0 0.0
  %1125 = vmatpush1.msra.mxu0 0.0
  %1126 = vmatprep.subr.mxu0 0.0
  %1127 = vmatpush1.msra.mxu0 0.0
  %1128 = vmatprep.subr.mxu0 0.0
  %1129 = vmatpush1.msra.mxu0 0.0
  %1130 = vmatprep.subr.mxu0 0.0
  %1131 = vmatpush1.msra.mxu0 0.0
  %1132 = vmatprep.subr.mxu0 0.0
  %1133 = vmatpush1.msra.mxu0 0.0
  %1134 = vmatprep.subr.mxu0 0.0
  %1135 = vmatpush1.msra.mxu0 0.0
  %1136 = vmatprep.subr.mxu0 0.0
  %1137 = vmatpush1.msra.mxu0 0.0
  %1138 = vmatprep.mubr.f32.mxu0 0.0
  %1139 = vmatmul.mubr.f32.gmra.mrb[0].mxu0 %v1072
  %v1140 = vpop.f32.mrb[0].mxu0
  %v1141 = vadd.f32 %v1069, %v1140
  %v1142 = vpop.f32.mrb[0].mxu0
  %1143 = vdwg.mxu0
  %v1145 = vlaneseq
  %v1146 = vshrl.u32 %v1145, 7
  %v1147 = vsub.s32 0, %v1146
  %v1148 = vrot.slane %v1064, %v1147
  %1150 = vmatprep.subr.mxu0 0.0
  %1151 = vmatpush1.msra.mxu0 %v1060
  %1152 = vmatprep.subr.mxu0 0.0
  %1153 = vmatpush1.msra.mxu0 %v1061
  %1154 = vmatprep.subr.mxu0 0.0
  %1155 = vmatpush1.msra.mxu0 %v1062
  %1156 = vmatprep.subr.mxu0 0.0
  %1157 = vmatpush1.msra.mxu0 %v1063
  %1158 = vmatprep.subr.mxu0 0.0
  %1159 = vmatpush1.msra.mxu0 0.0
  %1160 = vmatprep.subr.mxu0 0.0
  %1161 = vmatpush1.msra.mxu0 0.0
  %1162 = vmatprep.subr.mxu0 0.0
  %1163 = vmatpush1.msra.mxu0 0.0
  %1164 = vmatprep.subr.mxu0 0.0
  %1165 = vmatpush1.msra.mxu0 0.0
  %1166 = vmatprep.subr.mxu0 0.0
  %1167 = vmatpush1.msra.mxu0 0.0
  %1168 = vmatprep.subr.mxu0 0.0
  %1169 = vmatpush1.msra.mxu0 0.0
  %1170 = vmatprep.subr.mxu0 0.0
  %1171 = vmatpush1.msra.mxu0 0.0
  %1172 = vmatprep.subr.mxu0 0.0
  %1173 = vmatpush1.msra.mxu0 0.0
  %1174 = vmatprep.subr.mxu0 0.0
  %1175 = vmatpush1.msra.mxu0 0.0
  %1176 = vmatprep.subr.mxu0 0.0
  %1177 = vmatpush1.msra.mxu0 0.0
  %1178 = vmatprep.subr.mxu0 0.0
  %1179 = vmatpush1.msra.mxu0 0.0
  %1180 = vmatprep.subr.mxu0 0.0
  %1181 = vmatpush1.msra.mxu0 0.0
  %1182 = vmatprep.subr.mxu0 0.0
  %1183 = vmatpush1.msra.mxu0 0.0
  %1184 = vmatprep.subr.mxu0 0.0
  %1185 = vmatpush1.msra.mxu0 0.0
  %1186 = vmatprep.subr.mxu0 0.0
  %1187 = vmatpush1.msra.mxu0 0.0
  %1188 = vmatprep.subr.mxu0 0.0
  %1189 = vmatpush1.msra.mxu0 0.0
  %1190 = vmatprep.subr.mxu0 0.0
  %1191 = vmatpush1.msra.mxu0 0.0
  %1192 = vmatprep.subr.mxu0 0.0
  %1193 = vmatpush1.msra.mxu0 0.0
  %1194 = vmatprep.subr.mxu0 0.0
  %1195 = vmatpush1.msra.mxu0 0.0
  %1196 = vmatprep.subr.mxu0 0.0
  %1197 = vmatpush1.msra.mxu0 0.0
  %1198 = vmatprep.subr.mxu0 0.0
  %1199 = vmatpush1.msra.mxu0 0.0
  %1200 = vmatprep.subr.mxu0 0.0
  %1201 = vmatpush1.msra.mxu0 0.0
  %1202 = vmatprep.subr.mxu0 0.0
  %1203 = vmatpush1.msra.mxu0 0.0
  %1204 = vmatprep.subr.mxu0 0.0
  %1205 = vmatpush1.msra.mxu0 0.0
  %1206 = vmatprep.subr.mxu0 0.0
  %1207 = vmatpush1.msra.mxu0 0.0
  %1208 = vmatprep.subr.mxu0 0.0
  %1209 = vmatpush1.msra.mxu0 0.0
  %1210 = vmatprep.subr.mxu0 0.0
  %1211 = vmatpush1.msra.mxu0 0.0
  %1212 = vmatprep.subr.mxu0 0.0
  %1213 = vmatpush1.msra.mxu0 0.0
  %1214 = vmatprep.mubr.f32.mxu0 0.0
  %1215 = vmatmul.mubr.f32.gmra.mrb[0].mxu0 %v1072
  %v1216 = vpop.f32.mrb[0].mxu0
  %v1217 = vadd.f32 %v1148, %v1216
  %v1218 = vpop.f32.mrb[0].mxu0
  %1219 = vdwg.mxu0
  %v1220 = vmul.f32 %v1217, 0.5
  %v1221 = vmul.f32 %v1220, 1.442695
  %v1222 = vpow.pop %v1221
  %v1223 = vld [vmem:[%s1] sm:$0x3]
  %v1224 = vmul.f32 %v1222, %v1223
  %v1225 = vadd.f32 %v1141, %v1224
  %v1226 = vld [vmem:[%s10] sm:$0xff]
  %v1227 = vld [vmem:[%s11] sm:$0x1]
  %v1229 = vlaneseq
  %v1230 = vshrl.u32 %v1229, 7
  %v1231 = vsub.s32 0, %v1230
  %v1232 = vrot.slane %v1227, %v1231
  %vm1234 = vcmask 64512
  %v1236 = vsel %vm1234, %v1225, 0
  %1238 = vmatprep.subr.mxu0 0.0
  %1239 = vmatpush1.msra.mxu0 %v1226
  %1240 = vmatprep.subr.mxu0 0.0
  %1241 = vmatpush1.msra.mxu0 0.0
  %1242 = vmatprep.subr.mxu0 0.0
  %1243 = vmatpush1.msra.mxu0 0.0
  %1244 = vmatprep.subr.mxu0 0.0
  %1245 = vmatpush1.msra.mxu0 0.0
  %1246 = vmatprep.subr.mxu0 0.0
  %1247 = vmatpush1.msra.mxu0 0.0
  %1248 = vmatprep.subr.mxu0 0.0
  %1249 = vmatpush1.msra.mxu0 0.0
  %1250 = vmatprep.subr.mxu0 0.0
  %1251 = vmatpush1.msra.mxu0 0.0
  %1252 = vmatprep.subr.mxu0 0.0
  %1253 = vmatpush1.msra.mxu0 0.0
  %1254 = vmatprep.subr.mxu0 0.0
  %1255 = vmatpush1.msra.mxu0 0.0
  %1256 = vmatprep.subr.mxu0 0.0
  %1257 = vmatpush1.msra.mxu0 0.0
  %1258 = vmatprep.subr.mxu0 0.0
  %1259 = vmatpush1.msra.mxu0 0.0
  %1260 = vmatprep.subr.mxu0 0.0
  %1261 = vmatpush1.msra.mxu0 0.0
  %1262 = vmatprep.subr.mxu0 0.0
  %1263 = vmatpush1.msra.mxu0 0.0
  %1264 = vmatprep.subr.mxu0 0.0
  %1265 = vmatpush1.msra.mxu0 0.0
  %1266 = vmatprep.subr.mxu0 0.0
  %1267 = vmatpush1.msra.mxu0 0.0
  %1268 = vmatprep.subr.mxu0 0.0
  %1269 = vmatpush1.msra.mxu0 0.0
  %1270 = vmatprep.subr.mxu0 0.0
  %1271 = vmatpush1.msra.mxu0 0.0
  %1272 = vmatprep.subr.mxu0 0.0
  %1273 = vmatpush1.msra.mxu0 0.0
  %1274 = vmatprep.subr.mxu0 0.0
  %1275 = vmatpush1.msra.mxu0 0.0
  %1276 = vmatprep.subr.mxu0 0.0
  %1277 = vmatpush1.msra.mxu0 0.0
  %1278 = vmatprep.subr.mxu0 0.0
  %1279 = vmatpush1.msra.mxu0 0.0
  %1280 = vmatprep.subr.mxu0 0.0
  %1281 = vmatpush1.msra.mxu0 0.0
  %1282 = vmatprep.subr.mxu0 0.0
  %1283 = vmatpush1.msra.mxu0 0.0
  %1284 = vmatprep.subr.mxu0 0.0
  %1285 = vmatpush1.msra.mxu0 0.0
  %1286 = vmatprep.subr.mxu0 0.0
  %1287 = vmatpush1.msra.mxu0 0.0
  %1288 = vmatprep.subr.mxu0 0.0
  %1289 = vmatpush1.msra.mxu0 0.0
  %1290 = vmatprep.subr.mxu0 0.0
  %1291 = vmatpush1.msra.mxu0 0.0
  %1292 = vmatprep.subr.mxu0 0.0
  %1293 = vmatpush1.msra.mxu0 0.0
  %1294 = vmatprep.subr.mxu0 0.0
  %1295 = vmatpush1.msra.mxu0 0.0
  %1296 = vmatprep.subr.mxu0 0.0
  %1297 = vmatpush1.msra.mxu0 0.0
  %1298 = vmatprep.subr.mxu0 0.0
  %1299 = vmatpush1.msra.mxu0 0.0
  %1300 = vmatprep.subr.mxu0 0.0
  %1301 = vmatpush1.msra.mxu0 0.0
  %1302 = vmatprep.mubr.f32.mxu0 0.0
  %1303 = vmatmul.mubr.f32.gmra.mrb[0].mxu0 %v1236
  %v1304 = vpop.f32.mrb[0].mxu0
  %v1305 = vadd.f32 %v1232, %v1304
  %v1306 = vpop.f32.mrb[0].mxu0
  %1307 = vdwg.mxu0
  %v1308 = vmax.f32 %v1305, 0.0
  %v1309 = vld [vmem:[%s12] sm:$0xff]
  %v1310 = vld [vmem:[%s12 + $0x8] sm:$0xff]
  %v1311 = vld [vmem:[%s12 + $0x10] sm:$0xff]
  %v1312 = vld [vmem:[%s12 + $0x18] sm:$0xff]
  %v1313 = vld [vmem:[%s13] sm:$0x1]
  %v1315 = vlaneseq
  %v1316 = vshrl.u32 %v1315, 7
  %v1317 = vsub.s32 0, %v1316
  %v1318 = vrot.slane %v1313, %v1317
  %v1321 = vsel %vm980, %v1308, 0
  %1323 = vmatprep.subr.mxu0 0.0
  %1324 = vmatpush1.msra.mxu0 %v1309
  %1325 = vmatprep.subr.mxu0 0.0
  %1326 = vmatpush1.msra.mxu0 %v1310
  %1327 = vmatprep.subr.mxu0 0.0
  %1328 = vmatpush1.msra.mxu0 %v1311
  %1329 = vmatprep.subr.mxu0 0.0
  %1330 = vmatpush1.msra.mxu0 %v1312
  %1331 = vmatprep.subr.mxu0 0.0
  %1332 = vmatpush1.msra.mxu0 0.0
  %1333 = vmatprep.subr.mxu0 0.0
  %1334 = vmatpush1.msra.mxu0 0.0
  %1335 = vmatprep.subr.mxu0 0.0
  %1336 = vmatpush1.msra.mxu0 0.0
  %1337 = vmatprep.subr.mxu0 0.0
  %1338 = vmatpush1.msra.mxu0 0.0
  %1339 = vmatprep.subr.mxu0 0.0
  %1340 = vmatpush1.msra.mxu0 0.0
  %1341 = vmatprep.subr.mxu0 0.0
  %1342 = vmatpush1.msra.mxu0 0.0
  %1343 = vmatprep.subr.mxu0 0.0
  %1344 = vmatpush1.msra.mxu0 0.0
  %1345 = vmatprep.subr.mxu0 0.0
  %1346 = vmatpush1.msra.mxu0 0.0
  %1347 = vmatprep.subr.mxu0 0.0
  %1348 = vmatpush1.msra.mxu0 0.0
  %1349 = vmatprep.subr.mxu0 0.0
  %1350 = vmatpush1.msra.mxu0 0.0
  %1351 = vmatprep.subr.mxu0 0.0
  %1352 = vmatpush1.msra.mxu0 0.0
  %1353 = vmatprep.subr.mxu0 0.0
  %1354 = vmatpush1.msra.mxu0 0.0
  %1355 = vmatprep.subr.mxu0 0.0
  %1356 = vmatpush1.msra.mxu0 0.0
  %1357 = vmatprep.subr.mxu0 0.0
  %1358 = vmatpush1.msra.mxu0 0.0
  %1359 = vmatprep.subr.mxu0 0.0
  %1360 = vmatpush1.msra.mxu0 0.0
  %1361 = vmatprep.subr.mxu0 0.0
  %1362 = vmatpush1.msra.mxu0 0.0
  %1363 = vmatprep.subr.mxu0 0.0
  %1364 = vmatpush1.msra.mxu0 0.0
  %1365 = vmatprep.subr.mxu0 0.0
  %1366 = vmatpush1.msra.mxu0 0.0
  %1367 = vmatprep.subr.mxu0 0.0
  %1368 = vmatpush1.msra.mxu0 0.0
  %1369 = vmatprep.subr.mxu0 0.0
  %1370 = vmatpush1.msra.mxu0 0.0
  %1371 = vmatprep.subr.mxu0 0.0
  %1372 = vmatpush1.msra.mxu0 0.0
  %1373 = vmatprep.subr.mxu0 0.0
  %1374 = vmatpush1.msra.mxu0 0.0
  %1375 = vmatprep.subr.mxu0 0.0
  %1376 = vmatpush1.msra.mxu0 0.0
  %1377 = vmatprep.subr.mxu0 0.0
  %1378 = vmatpush1.msra.mxu0 0.0
  %1379 = vmatprep.subr.mxu0 0.0
  %1380 = vmatpush1.msra.mxu0 0.0
  %1381 = vmatprep.subr.mxu0 0.0
  %1382 = vmatpush1.msra.mxu0 0.0
  %1383 = vmatprep.subr.mxu0 0.0
  %1384 = vmatpush1.msra.mxu0 0.0
  %1385 = vmatprep.subr.mxu0 0.0
  %1386 = vmatpush1.msra.mxu0 0.0
  %1387 = vmatprep.mubr.f32.mxu0 0.0
  %1388 = vmatmul.mubr.f32.gmra.mrb[0].mxu0 %v1321
  %v1389 = vpop.f32.mrb[0].mxu0
  %v1390 = vadd.f32 %v1318, %v1389
  %v1391 = vpop.f32.mrb[0].mxu0
  %1392 = vdwg.mxu0
  %v1393 = vmax.f32 %v1390, 0.0
  %v1394 = vld [vmem:[%s14] sm:$0xff]
  %v1395 = vld [vmem:[%s14 + $0x8] sm:$0xff]
  %v1396 = vld [vmem:[%s14 + $0x10] sm:$0xff]
  %v1397 = vld [vmem:[%s14 + $0x18] sm:$0xff]
  %v1398 = vld [vmem:[%s14 + $0x20] sm:$0xff]
  %v1399 = vld [vmem:[%s14 + $0x28] sm:$0xff]
  %v1400 = vld [vmem:[%s14 + $0x30] sm:$0xff]
  %v1401 = vld [vmem:[%s14 + $0x38] sm:$0xff]
  %v1402 = vld [vmem:[%s14 + $0x40] sm:$0xff]
  %v1403 = vld [vmem:[%s14 + $0x48] sm:$0xff]
  %v1404 = vld [vmem:[%s14 + $0x50] sm:$0xff]
  %v1405 = vld [vmem:[%s14 + $0x58] sm:$0xff]
  %v1406 = vld [vmem:[%s14 + $0x60] sm:$0xff]
  %v1407 = vld [vmem:[%s14 + $0x68] sm:$0xff]
  %v1408 = vld [vmem:[%s14 + $0x70] sm:$0xff]
  %v1409 = vld [vmem:[%s14 + $0x78] sm:$0xff]
  %v1410 = vld [vmem:[%s14 + $0x80] sm:$0xff]
  %v1411 = vld [vmem:[%s14 + $0x88] sm:$0xff]
  %v1412 = vld [vmem:[%s14 + $0x90] sm:$0xff]
  %v1413 = vld [vmem:[%s14 + $0x98] sm:$0xff]
  %v1414 = vld [vmem:[%s14 + $0xa0] sm:$0xff]
  %v1415 = vld [vmem:[%s14 + $0xa8] sm:$0xff]
  %v1416 = vld [vmem:[%s14 + $0xb0] sm:$0xff]
  %v1417 = vld [vmem:[%s14 + $0xb8] sm:$0xff]
  %v1418 = vld [vmem:[%s14 + $0xc0] sm:$0xff]
  %v1419 = vld [vmem:[%s14 + $0xc8] sm:$0xff]
  %v1420 = vld [vmem:[%s14 + $0xd0] sm:$0xff]
  %v1421 = vld [vmem:[%s14 + $0xd8] sm:$0xff]
  %v1422 = vld [vmem:[%s14 + $0xe0] sm:$0xff]
  %v1423 = vld [vmem:[%s14 + $0xe8] sm:$0xff]
  %v1424 = vld [vmem:[%s14 + $0xf0] sm:$0xff]
  %v1425 = vld [vmem:[%s14 + $0xf8] sm:$0xff]
  %v1426 = vld [vmem:[%s14 + $0x100] sm:$0xff]
  %v1427 = vld [vmem:[%s14 + $0x108] sm:$0xff]
  %v1428 = vld [vmem:[%s14 + $0x110] sm:$0xff]
  %v1429 = vld [vmem:[%s14 + $0x118] sm:$0xff]
  %v1430 = vld [vmem:[%s14 + $0x120] sm:$0xff]
  %v1431 = vld [vmem:[%s14 + $0x128] sm:$0xff]
  %v1432 = vld [vmem:[%s14 + $0x130] sm:$0xff]
  %v1433 = vld [vmem:[%s14 + $0x138] sm:$0xff]
  %v1434 = vld [vmem:[%s14 + $0x140] sm:$0xff]
  %v1435 = vld [vmem:[%s14 + $0x148] sm:$0xff]
  %v1436 = vld [vmem:[%s14 + $0x150] sm:$0xff]
  %v1437 = vld [vmem:[%s14 + $0x158] sm:$0xff]
  %v1438 = vld [vmem:[%s14 + $0x160] sm:$0xff]
  %v1439 = vld [vmem:[%s14 + $0x168] sm:$0xff]
  %v1440 = vld [vmem:[%s14 + $0x170] sm:$0xff]
  %v1441 = vld [vmem:[%s14 + $0x178] sm:$0xff]
  %v1442 = vld [vmem:[%s14 + $0x180] sm:$0xff]
  %v1443 = vld [vmem:[%s14 + $0x188] sm:$0xff]
  %v1444 = vld [vmem:[%s14 + $0x190] sm:$0xff]
  %v1445 = vld [vmem:[%s14 + $0x198] sm:$0xff]
  %v1446 = vld [vmem:[%s14 + $0x1a0] sm:$0xff]
  %v1447 = vld [vmem:[%s14 + $0x1a8] sm:$0xff]
  %v1448 = vld [vmem:[%s14 + $0x1b0] sm:$0xff]
  %v1449 = vld [vmem:[%s14 + $0x1b8] sm:$0xff]
  %v1450 = vld [vmem:[%s14 + $0x1c0] sm:$0xff]
  %v1451 = vld [vmem:[%s14 + $0x1c8] sm:$0xff]
  %v1452 = vld [vmem:[%s14 + $0x1d0] sm:$0xff]
  %v1453 = vld [vmem:[%s14 + $0x1d8] sm:$0xff]
  %v1454 = vld [vmem:[%s14 + $0x1e0] sm:$0xff]
  %v1455 = vld [vmem:[%s14 + $0x1e8] sm:$0xff]
  %v1456 = vld [vmem:[%s14 + $0x1f0] sm:$0xff]
  %v1457 = vld [vmem:[%s14 + $0x1f8] sm:$0xff]
  %v1458 = vld [vmem:[%s15] sm:$0xff]
  %v1459 = vld [vmem:[%s15 + $0x8] sm:$0xff]
  %v1462 = vlaneseq
  %v1463 = vshrl.u32 %v1462, 7
  %v1464 = vsub.s32 0, %v1463
  %v1465 = vrot.slane %v1458, %v1464
  %v1466 = vlaneseq
  %v1467 = vshrl.u32 %v1466, 7
  %v1468 = vsub.s32 1, %v1467
  %v1469 = vrot.slane %v1458, %v1468
  %v1470 = vlaneseq
  %v1471 = vshrl.u32 %v1470, 7
  %v1472 = vsub.s32 2, %v1471
  %v1473 = vrot.slane %v1458, %v1472
  %v1474 = vlaneseq
  %v1475 = vshrl.u32 %v1474, 7
  %v1476 = vsub.s32 3, %v1475
  %v1477 = vrot.slane %v1458, %v1476
  %v1478 = vlaneseq
  %v1479 = vshrl.u32 %v1478, 7
  %v1480 = vsub.s32 4, %v1479
  %v1481 = vrot.slane %v1458, %v1480
  %v1482 = vlaneseq
  %v1483 = vshrl.u32 %v1482, 7
  %v1484 = vsub.s32 5, %v1483
  %v1485 = vrot.slane %v1458, %v1484
  %v1486 = vlaneseq
  %v1487 = vshrl.u32 %v1486, 7
  %v1488 = vsub.s32 6, %v1487
  %v1489 = vrot.slane %v1458, %v1488
  %v1490 = vlaneseq
  %v1491 = vshrl.u32 %v1490, 7
  %v1492 = vsub.s32 7, %v1491
  %v1493 = vrot.slane %v1458, %v1492
  %v1494 = vlaneseq
  %v1495 = vshrl.u32 %v1494, 7
  %v1496 = vsub.s32 0, %v1495
  %v1497 = vrot.slane %v1459, %v1496
  %v1498 = vlaneseq
  %v1499 = vshrl.u32 %v1498, 7
  %v1500 = vsub.s32 1, %v1499
  %v1501 = vrot.slane %v1459, %v1500
  %v1502 = vlaneseq
  %v1503 = vshrl.u32 %v1502, 7
  %v1504 = vsub.s32 2, %v1503
  %v1505 = vrot.slane %v1459, %v1504
  %v1506 = vlaneseq
  %v1507 = vshrl.u32 %v1506, 7
  %v1508 = vsub.s32 3, %v1507
  %v1509 = vrot.slane %v1459, %v1508
  %v1510 = vlaneseq
  %v1511 = vshrl.u32 %v1510, 7
  %v1512 = vsub.s32 4, %v1511
  %v1513 = vrot.slane %v1459, %v1512
  %v1514 = vlaneseq
  %v1515 = vshrl.u32 %v1514, 7
  %v1516 = vsub.s32 5, %v1515
  %v1517 = vrot.slane %v1459, %v1516
  %v1518 = vlaneseq
  %v1519 = vshrl.u32 %v1518, 7
  %v1520 = vsub.s32 6, %v1519
  %v1521 = vrot.slane %v1459, %v1520
  %v1522 = vlaneseq
  %v1523 = vshrl.u32 %v1522, 7
  %v1524 = vsub.s32 7, %v1523
  %v1525 = vrot.slane %v1459, %v1524
  %v1543 = vsel %vm980, %v1393, 0
  %1545 = vmatprep.subr.mxu0 %v1395
  %1546 = vmatpush1.msra.mxu0 %v1394
  %1547 = vmatprep.subr.mxu0 %v1411
  %1548 = vmatpush1.msra.mxu0 %v1410
  %1549 = vmatprep.subr.mxu0 %v1427
  %1550 = vmatpush1.msra.mxu0 %v1426
  %1551 = vmatprep.subr.mxu0 %v1443
  %1552 = vmatpush1.msra.mxu0 %v1442
  %1553 = vmatprep.subr.mxu0 0.0
  %1554 = vmatpush1.msra.mxu0 0.0
  %1555 = vmatprep.subr.mxu0 0.0
  %1556 = vmatpush1.msra.mxu0 0.0
  %1557 = vmatprep.subr.mxu0 0.0
  %1558 = vmatpush1.msra.mxu0 0.0
  %1559 = vmatprep.subr.mxu0 0.0
  %1560 = vmatpush1.msra.mxu0 0.0
  %1561 = vmatprep.subr.mxu0 0.0
  %1562 = vmatpush1.msra.mxu0 0.0
  %1563 = vmatprep.subr.mxu0 0.0
  %1564 = vmatpush1.msra.mxu0 0.0
  %1565 = vmatprep.subr.mxu0 0.0
  %1566 = vmatpush1.msra.mxu0 0.0
  %1567 = vmatprep.subr.mxu0 0.0
  %1568 = vmatpush1.msra.mxu0 0.0
  %1569 = vmatprep.subr.mxu0 0.0
  %1570 = vmatpush1.msra.mxu0 0.0
  %1571 = vmatprep.subr.mxu0 0.0
  %1572 = vmatpush1.msra.mxu0 0.0
  %1573 = vmatprep.subr.mxu0 0.0
  %1574 = vmatpush1.msra.mxu0 0.0
  %1575 = vmatprep.subr.mxu0 0.0
  %1576 = vmatpush1.msra.mxu0 0.0
  %1577 = vmatprep.subr.mxu0 0.0
  %1578 = vmatpush1.msra.mxu0 0.0
  %1579 = vmatprep.subr.mxu0 0.0
  %1580 = vmatpush1.msra.mxu0 0.0
  %1581 = vmatprep.subr.mxu0 0.0
  %1582 = vmatpush1.msra.mxu0 0.0
  %1583 = vmatprep.subr.mxu0 0.0
  %1584 = vmatpush1.msra.mxu0 0.0
  %1585 = vmatprep.subr.mxu0 0.0
  %1586 = vmatpush1.msra.mxu0 0.0
  %1587 = vmatprep.subr.mxu0 0.0
  %1588 = vmatpush1.msra.mxu0 0.0
  %1589 = vmatprep.subr.mxu0 0.0
  %1590 = vmatpush1.msra.mxu0 0.0
  %1591 = vmatprep.subr.mxu0 0.0
  %1592 = vmatpush1.msra.mxu0 0.0
  %1593 = vmatprep.subr.mxu0 0.0
  %1594 = vmatpush1.msra.mxu0 0.0
  %1595 = vmatprep.subr.mxu0 0.0
  %1596 = vmatpush1.msra.mxu0 0.0
  %1597 = vmatprep.subr.mxu0 0.0
  %1598 = vmatpush1.msra.mxu0 0.0
  %1599 = vmatprep.subr.mxu0 0.0
  %1600 = vmatpush1.msra.mxu0 0.0
  %1601 = vmatprep.subr.mxu0 0.0
  %1602 = vmatpush1.msra.mxu0 0.0
  %1603 = vmatprep.subr.mxu0 0.0
  %1604 = vmatpush1.msra.mxu0 0.0
  %1605 = vmatprep.subr.mxu0 0.0
  %1606 = vmatpush1.msra.mxu0 0.0
  %1607 = vmatprep.subr.mxu0 0.0
  %1608 = vmatpush1.msra.mxu0 0.0
  %1609 = vmatprep.mubr.f32.mxu0 0.0
  %1610 = vmatmul.mubr.f32.gmra.mrb[0].mxu0 %v1543
  %v1611 = vpop.f32.mrb[0].mxu0
  %v1612 = vadd.f32 %v1465, %v1611
  %v1613 = vpop.f32.mrb[0].mxu0
  %v1614 = vadd.f32 %v1469, %v1613
  %1615 = vdwg.mxu0
  %1616 = vmatprep.subr.mxu0 %v1397
  %1617 = vmatpush1.msra.mxu0 %v1396
  %1618 = vmatprep.subr.mxu0 %v1413
  %1619 = vmatpush1.msra.mxu0 %v1412
  %1620 = vmatprep.subr.mxu0 %v1429
  %1621 = vmatpush1.msra.mxu0 %v1428
  %1622 = vmatprep.subr.mxu0 %v1445
  %1623 = vmatpush1.msra.mxu0 %v1444
  %1624 = vmatprep.subr.mxu0 0.0
  %1625 = vmatpush1.msra.mxu0 0.0
  %1626 = vmatprep.subr.mxu0 0.0
  %1627 = vmatpush1.msra.mxu0 0.0
  %1628 = vmatprep.subr.mxu0 0.0
  %1629 = vmatpush1.msra.mxu0 0.0
  %1630 = vmatprep.subr.mxu0 0.0
  %1631 = vmatpush1.msra.mxu0 0.0
  %1632 = vmatprep.subr.mxu0 0.0
  %1633 = vmatpush1.msra.mxu0 0.0
  %1634 = vmatprep.subr.mxu0 0.0
  %1635 = vmatpush1.msra.mxu0 0.0
  %1636 = vmatprep.subr.mxu0 0.0
  %1637 = vmatpush1.msra.mxu0 0.0
  %1638 = vmatprep.subr.mxu0 0.0
  %1639 = vmatpush1.msra.mxu0 0.0
  %1640 = vmatprep.subr.mxu0 0.0
  %1641 = vmatpush1.msra.mxu0 0.0
  %1642 = vmatprep.subr.mxu0 0.0
  %1643 = vmatpush1.msra.mxu0 0.0
  %1644 = vmatprep.subr.mxu0 0.0
  %1645 = vmatpush1.msra.mxu0 0.0
  %1646 = vmatprep.subr.mxu0 0.0
  %1647 = vmatpush1.msra.mxu0 0.0
  %1648 = vmatprep.subr.mxu0 0.0
  %1649 = vmatpush1.msra.mxu0 0.0
  %1650 = vmatprep.subr.mxu0 0.0
  %1651 = vmatpush1.msra.mxu0 0.0
  %1652 = vmatprep.subr.mxu0 0.0
  %1653 = vmatpush1.msra.mxu0 0.0
  %1654 = vmatprep.subr.mxu0 0.0
  %1655 = vmatpush1.msra.mxu0 0.0
  %1656 = vmatprep.subr.mxu0 0.0
  %1657 = vmatpush1.msra.mxu0 0.0
  %1658 = vmatprep.subr.mxu0 0.0
  %1659 = vmatpush1.msra.mxu0 0.0
  %1660 = vmatprep.subr.mxu0 0.0
  %1661 = vmatpush1.msra.mxu0 0.0
  %1662 = vmatprep.subr.mxu0 0.0
  %1663 = vmatpush1.msra.mxu0 0.0
  %1664 = vmatprep.subr.mxu0 0.0
  %1665 = vmatpush1.msra.mxu0 0.0
  %1666 = vmatprep.subr.mxu0 0.0
  %1667 = vmatpush1.msra.mxu0 0.0
  %1668 = vmatprep.subr.mxu0 0.0
  %1669 = vmatpush1.msra.mxu0 0.0
  %1670 = vmatprep.subr.mxu0 0.0
  %1671 = vmatpush1.msra.mxu0 0.0
  %1672 = vmatprep.subr.mxu0 0.0
  %1673 = vmatpush1.msra.mxu0 0.0
  %1674 = vmatprep.subr.mxu0 0.0
  %1675 = vmatpush1.msra.mxu0 0.0
  %1676 = vmatprep.subr.mxu0 0.0
  %1677 = vmatpush1.msra.mxu0 0.0
  %1678 = vmatprep.subr.mxu0 0.0
  %1679 = vmatpush1.msra.mxu0 0.0
  %1680 = vmatprep.mubr.f32.mxu0 0.0
  %1681 = vmatmul.mubr.f32.gmra.mrb[0].mxu0 %v1543
  %v1682 = vpop.f32.mrb[0].mxu0
  %v1683 = vadd.f32 %v1473, %v1682
  %v1684 = vpop.f32.mrb[0].mxu0
  %v1685 = vadd.f32 %v1477, %v1684
  %1686 = vdwg.mxu0
  %1687 = vmatprep.subr.mxu0 %v1399
  %1688 = vmatpush1.msra.mxu0 %v1398
  %1689 = vmatprep.subr.mxu0 %v1415
  %1690 = vmatpush1.msra.mxu0 %v1414
  %1691 = vmatprep.subr.mxu0 %v1431
  %1692 = vmatpush1.msra.mxu0 %v1430
  %1693 = vmatprep.subr.mxu0 %v1447
  %1694 = vmatpush1.msra.mxu0 %v1446
  %1695 = vmatprep.subr.mxu0 0.0
  %1696 = vmatpush1.msra.mxu0 0.0
  %1697 = vmatprep.subr.mxu0 0.0
  %1698 = vmatpush1.msra.mxu0 0.0
  %1699 = vmatprep.subr.mxu0 0.0
  %1700 = vmatpush1.msra.mxu0 0.0
  %1701 = vmatprep.subr.mxu0 0.0
  %1702 = vmatpush1.msra.mxu0 0.0
  %1703 = vmatprep.subr.mxu0 0.0
  %1704 = vmatpush1.msra.mxu0 0.0
  %1705 = vmatprep.subr.mxu0 0.0
  %1706 = vmatpush1.msra.mxu0 0.0
  %1707 = vmatprep.subr.mxu0 0.0
  %1708 = vmatpush1.msra.mxu0 0.0
  %1709 = vmatprep.subr.mxu0 0.0
  %1710 = vmatpush1.msra.mxu0 0.0
  %1711 = vmatprep.subr.mxu0 0.0
  %1712 = vmatpush1.msra.mxu0 0.0
  %1713 = vmatprep.subr.mxu0 0.0
  %1714 = vmatpush1.msra.mxu0 0.0
  %1715 = vmatprep.subr.mxu0 0.0
  %1716 = vmatpush1.msra.mxu0 0.0
  %1717 = vmatprep.subr.mxu0 0.0
  %1718 = vmatpush1.msra.mxu0 0.0
  %1719 = vmatprep.subr.mxu0 0.0
  %1720 = vmatpush1.msra.mxu0 0.0
  %1721 = vmatprep.subr.mxu0 0.0
  %1722 = vmatpush1.msra.mxu0 0.0
  %1723 = vmatprep.subr.mxu0 0.0
  %1724 = vmatpush1.msra.mxu0 0.0
  %1725 = vmatprep.subr.mxu0 0.0
  %1726 = vmatpush1.msra.mxu0 0.0
  %1727 = vmatprep.subr.mxu0 0.0
  %1728 = vmatpush1.msra.mxu0 0.0
  %1729 = vmatprep.subr.mxu0 0.0
  %1730 = vmatpush1.msra.mxu0 0.0
  %1731 = vmatprep.subr.mxu0 0.0
  %1732 = vmatpush1.msra.mxu0 0.0
  %1733 = vmatprep.subr.mxu0 0.0
  %1734 = vmatpush1.msra.mxu0 0.0
  %1735 = vmatprep.subr.mxu0 0.0
  %1736 = vmatpush1.msra.mxu0 0.0
  %1737 = vmatprep.subr.mxu0 0.0
  %1738 = vmatpush1.msra.mxu0 0.0
  %1739 = vmatprep.subr.mxu0 0.0
  %1740 = vmatpush1.msra.mxu0 0.0
  %1741 = vmatprep.subr.mxu0 0.0
  %1742 = vmatpush1.msra.mxu0 0.0
  %1743 = vmatprep.subr.mxu0 0.0
  %1744 = vmatpush1.msra.mxu0 0.0
  %1745 = vmatprep.subr.mxu0 0.0
  %1746 = vmatpush1.msra.mxu0 0.0
  %1747 = vmatprep.subr.mxu0 0.0
  %1748 = vmatpush1.msra.mxu0 0.0
  %1749 = vmatprep.subr.mxu0 0.0
  %1750 = vmatpush1.msra.mxu0 0.0
  %1751 = vmatprep.mubr.f32.mxu0 0.0
  %1752 = vmatmul.mubr.f32.gmra.mrb[0].mxu0 %v1543
  %v1753 = vpop.f32.mrb[0].mxu0
  %v1754 = vadd.f32 %v1481, %v1753
  %v1755 = vpop.f32.mrb[0].mxu0
  %v1756 = vadd.f32 %v1485, %v1755
  %1757 = vdwg.mxu0
  %1758 = vmatprep.subr.mxu0 %v1401
  %1759 = vmatpush1.msra.mxu0 %v1400
  %1760 = vmatprep.subr.mxu0 %v1417
  %1761 = vmatpush1.msra.mxu0 %v1416
  %1762 = vmatprep.subr.mxu0 %v1433
  %1763 = vmatpush1.msra.mxu0 %v1432
  %1764 = vmatprep.subr.mxu0 %v1449
  %1765 = vmatpush1.msra.mxu0 %v1448
  %1766 = vmatprep.subr.mxu0 0.0
  %1767 = vmatpush1.msra.mxu0 0.0
  %1768 = vmatprep.subr.mxu0 0.0
  %1769 = vmatpush1.msra.mxu0 0.0
  %1770 = vmatprep.subr.mxu0 0.0
  %1771 = vmatpush1.msra.mxu0 0.0
  %1772 = vmatprep.subr.mxu0 0.0
  %1773 = vmatpush1.msra.mxu0 0.0
  %1774 = vmatprep.subr.mxu0 0.0
  %1775 = vmatpush1.msra.mxu0 0.0
  %1776 = vmatprep.subr.mxu0 0.0
  %1777 = vmatpush1.msra.mxu0 0.0
  %1778 = vmatprep.subr.mxu0 0.0
  %1779 = vmatpush1.msra.mxu0 0.0
  %1780 = vmatprep.subr.mxu0 0.0
  %1781 = vmatpush1.msra.mxu0 0.0
  %1782 = vmatprep.subr.mxu0 0.0
  %1783 = vmatpush1.msra.mxu0 0.0
  %1784 = vmatprep.subr.mxu0 0.0
  %1785 = vmatpush1.msra.mxu0 0.0
  %1786 = vmatprep.subr.mxu0 0.0
  %1787 = vmatpush1.msra.mxu0 0.0
  %1788 = vmatprep.subr.mxu0 0.0
  %1789 = vmatpush1.msra.mxu0 0.0
  %1790 = vmatprep.subr.mxu0 0.0
  %1791 = vmatpush1.msra.mxu0 0.0
  %1792 = vmatprep.subr.mxu0 0.0
  %1793 = vmatpush1.msra.mxu0 0.0
  %1794 = vmatprep.subr.mxu0 0.0
  %1795 = vmatpush1.msra.mxu0 0.0
  %1796 = vmatprep.subr.mxu0 0.0
  %1797 = vmatpush1.msra.mxu0 0.0
  %1798 = vmatprep.subr.mxu0 0.0
  %1799 = vmatpush1.msra.mxu0 0.0
  %1800 = vmatprep.subr.mxu0 0.0
  %1801 = vmatpush1.msra.mxu0 0.0
  %1802 = vmatprep.subr.mxu0 0.0
  %1803 = vmatpush1.msra.mxu0 0.0
  %1804 = vmatprep.subr.mxu0 0.0
  %1805 = vmatpush1.msra.mxu0 0.0
  %1806 = vmatprep.subr.mxu0 0.0
  %1807 = vmatpush1.msra.mxu0 0.0
  %1808 = vmatprep.subr.mxu0 0.0
  %1809 = vmatpush1.msra.mxu0 0.0
  %1810 = vmatprep.subr.mxu0 0.0
  %1811 = vmatpush1.msra.mxu0 0.0
  %1812 = vmatprep.subr.mxu0 0.0
  %1813 = vmatpush1.msra.mxu0 0.0
  %1814 = vmatprep.subr.mxu0 0.0
  %1815 = vmatpush1.msra.mxu0 0.0
  %1816 = vmatprep.subr.mxu0 0.0
  %1817 = vmatpush1.msra.mxu0 0.0
  %1818 = vmatprep.subr.mxu0 0.0
  %1819 = vmatpush1.msra.mxu0 0.0
  %1820 = vmatprep.subr.mxu0 0.0
  %1821 = vmatpush1.msra.mxu0 0.0
  %1822 = vmatprep.mubr.f32.mxu0 0.0
  %1823 = vmatmul.mubr.f32.gmra.mrb[0].mxu0 %v1543
  %v1824 = vpop.f32.mrb[0].mxu0
  %v1825 = vadd.f32 %v1489, %v1824
  %v1826 = vpop.f32.mrb[0].mxu0
  %v1827 = vadd.f32 %v1493, %v1826
  %1828 = vdwg.mxu0
  %1829 = vmatprep.subr.mxu0 %v1403
  %1830 = vmatpush1.msra.mxu0 %v1402
  %1831 = vmatprep.subr.mxu0 %v1419
  %1832 = vmatpush1.msra.mxu0 %v1418
  %1833 = vmatprep.subr.mxu0 %v1435
  %1834 = vmatpush1.msra.mxu0 %v1434
  %1835 = vmatprep.subr.mxu0 %v1451
  %1836 = vmatpush1.msra.mxu0 %v1450
  %1837 = vmatprep.subr.mxu0 0.0
  %1838 = vmatpush1.msra.mxu0 0.0
  %1839 = vmatprep.subr.mxu0 0.0
  %1840 = vmatpush1.msra.mxu0 0.0
  %1841 = vmatprep.subr.mxu0 0.0
  %1842 = vmatpush1.msra.mxu0 0.0
  %1843 = vmatprep.subr.mxu0 0.0
  %1844 = vmatpush1.msra.mxu0 0.0
  %1845 = vmatprep.subr.mxu0 0.0
  %1846 = vmatpush1.msra.mxu0 0.0
  %1847 = vmatprep.subr.mxu0 0.0
  %1848 = vmatpush1.msra.mxu0 0.0
  %1849 = vmatprep.subr.mxu0 0.0
  %1850 = vmatpush1.msra.mxu0 0.0
  %1851 = vmatprep.subr.mxu0 0.0
  %1852 = vmatpush1.msra.mxu0 0.0
  %1853 = vmatprep.subr.mxu0 0.0
  %1854 = vmatpush1.msra.mxu0 0.0
  %1855 = vmatprep.subr.mxu0 0.0
  %1856 = vmatpush1.msra.mxu0 0.0
  %1857 = vmatprep.subr.mxu0 0.0
  %1858 = vmatpush1.msra.mxu0 0.0
  %1859 = vmatprep.subr.mxu0 0.0
  %1860 = vmatpush1.msra.mxu0 0.0
  %1861 = vmatprep.subr.mxu0 0.0
  %1862 = vmatpush1.msra.mxu0 0.0
  %1863 = vmatprep.subr.mxu0 0.0
  %1864 = vmatpush1.msra.mxu0 0.0
  %1865 = vmatprep.subr.mxu0 0.0
  %1866 = vmatpush1.msra.mxu0 0.0
  %1867 = vmatprep.subr.mxu0 0.0
  %1868 = vmatpush1.msra.mxu0 0.0
  %1869 = vmatprep.subr.mxu0 0.0
  %1870 = vmatpush1.msra.mxu0 0.0
  %1871 = vmatprep.subr.mxu0 0.0
  %1872 = vmatpush1.msra.mxu0 0.0
  %1873 = vmatprep.subr.mxu0 0.0
  %1874 = vmatpush1.msra.mxu0 0.0
  %1875 = vmatprep.subr.mxu0 0.0
  %1876 = vmatpush1.msra.mxu0 0.0
  %1877 = vmatprep.subr.mxu0 0.0
  %1878 = vmatpush1.msra.mxu0 0.0
  %1879 = vmatprep.subr.mxu0 0.0
  %1880 = vmatpush1.msra.mxu0 0.0
  %1881 = vmatprep.subr.mxu0 0.0
  %1882 = vmatpush1.msra.mxu0 0.0
  %1883 = vmatprep.subr.mxu0 0.0
  %1884 = vmatpush1.msra.mxu0 0.0
  %1885 = vmatprep.subr.mxu0 0.0
  %1886 = vmatpush1.msra.mxu0 0.0
  %1887 = vmatprep.subr.mxu0 0.0
  %1888 = vmatpush1.msra.mxu0 0.0
  %1889 = vmatprep.subr.mxu0 0.0
  %1890 = vmatpush1.msra.mxu0 0.0
  %1891 = vmatprep.subr.mxu0 0.0
  %1892 = vmatpush1.msra.mxu0 0.0
  %1893 = vmatprep.mubr.f32.mxu0 0.0
  %1894 = vmatmul.mubr.f32.gmra.mrb[0].mxu0 %v1543
  %v1895 = vpop.f32.mrb[0].mxu0
  %v1896 = vadd.f32 %v1497, %v1895
  %v1897 = vpop.f32.mrb[0].mxu0
  %v1898 = vadd.f32 %v1501, %v1897
  %1899 = vdwg.mxu0
  %1900 = vmatprep.subr.mxu0 %v1405
  %1901 = vmatpush1.msra.mxu0 %v1404
  %1902 = vmatprep.subr.mxu0 %v1421
  %1903 = vmatpush1.msra.mxu0 %v1420
  %1904 = vmatprep.subr.mxu0 %v1437
  %1905 = vmatpush1.msra.mxu0 %v1436
  %1906 = vmatprep.subr.mxu0 %v1453
  %1907 = vmatpush1.msra.mxu0 %v1452
  %1908 = vmatprep.subr.mxu0 0.0
  %1909 = vmatpush1.msra.mxu0 0.0
  %1910 = vmatprep.subr.mxu0 0.0
  %1911 = vmatpush1.msra.mxu0 0.0
  %1912 = vmatprep.subr.mxu0 0.0
  %1913 = vmatpush1.msra.mxu0 0.0
  %1914 = vmatprep.subr.mxu0 0.0
  %1915 = vmatpush1.msra.mxu0 0.0
  %1916 = vmatprep.subr.mxu0 0.0
  %1917 = vmatpush1.msra.mxu0 0.0
  %1918 = vmatprep.subr.mxu0 0.0
  %1919 = vmatpush1.msra.mxu0 0.0
  %1920 = vmatprep.subr.mxu0 0.0
  %1921 = vmatpush1.msra.mxu0 0.0
  %1922 = vmatprep.subr.mxu0 0.0
  %1923 = vmatpush1.msra.mxu0 0.0
  %1924 = vmatprep.subr.mxu0 0.0
  %1925 = vmatpush1.msra.mxu0 0.0
  %1926 = vmatprep.subr.mxu0 0.0
  %1927 = vmatpush1.msra.mxu0 0.0
  %1928 = vmatprep.subr.mxu0 0.0
  %1929 = vmatpush1.msra.mxu0 0.0
  %1930 = vmatprep.subr.mxu0 0.0
  %1931 = vmatpush1.msra.mxu0 0.0
  %1932 = vmatprep.subr.mxu0 0.0
  %1933 = vmatpush1.msra.mxu0 0.0
  %1934 = vmatprep.subr.mxu0 0.0
  %1935 = vmatpush1.msra.mxu0 0.0
  %1936 = vmatprep.subr.mxu0 0.0
  %1937 = vmatpush1.msra.mxu0 0.0
  %1938 = vmatprep.subr.mxu0 0.0
  %1939 = vmatpush1.msra.mxu0 0.0
  %1940 = vmatprep.subr.mxu0 0.0
  %1941 = vmatpush1.msra.mxu0 0.0
  %1942 = vmatprep.subr.mxu0 0.0
  %1943 = vmatpush1.msra.mxu0 0.0
  %1944 = vmatprep.subr.mxu0 0.0
  %1945 = vmatpush1.msra.mxu0 0.0
  %1946 = vmatprep.subr.mxu0 0.0
  %1947 = vmatpush1.msra.mxu0 0.0
  %1948 = vmatprep.subr.mxu0 0.0
  %1949 = vmatpush1.msra.mxu0 0.0
  %1950 = vmatprep.subr.mxu0 0.0
  %1951 = vmatpush1.msra.mxu0 0.0
  %1952 = vmatprep.subr.mxu0 0.0
  %1953 = vmatpush1.msra.mxu0 0.0
  %1954 = vmatprep.subr.mxu0 0.0
  %1955 = vmatpush1.msra.mxu0 0.0
  %1956 = vmatprep.subr.mxu0 0.0
  %1957 = vmatpush1.msra.mxu0 0.0
  %1958 = vmatprep.subr.mxu0 0.0
  %1959 = vmatpush1.msra.mxu0 0.0
  %1960 = vmatprep.subr.mxu0 0.0
  %1961 = vmatpush1.msra.mxu0 0.0
  %1962 = vmatprep.subr.mxu0 0.0
  %1963 = vmatpush1.msra.mxu0 0.0
  %1964 = vmatprep.mubr.f32.mxu0 0.0
  %1965 = vmatmul.mubr.f32.gmra.mrb[0].mxu0 %v1543
  %v1966 = vpop.f32.mrb[0].mxu0
  %v1967 = vadd.f32 %v1505, %v1966
  %v1968 = vpop.f32.mrb[0].mxu0
  %v1969 = vadd.f32 %v1509, %v1968
  %1970 = vdwg.mxu0
  %1971 = vmatprep.subr.mxu0 %v1407
  %1972 = vmatpush1.msra.mxu0 %v1406
  %1973 = vmatprep.subr.mxu0 %v1423
  %1974 = vmatpush1.msra.mxu0 %v1422
  %1975 = vmatprep.subr.mxu0 %v1439
  %1976 = vmatpush1.msra.mxu0 %v1438
  %1977 = vmatprep.subr.mxu0 %v1455
  %1978 = vmatpush1.msra.mxu0 %v1454
  %1979 = vmatprep.subr.mxu0 0.0
  %1980 = vmatpush1.msra.mxu0 0.0
  %1981 = vmatprep.subr.mxu0 0.0
  %1982 = vmatpush1.msra.mxu0 0.0
  %1983 = vmatprep.subr.mxu0 0.0
  %1984 = vmatpush1.msra.mxu0 0.0
  %1985 = vmatprep.subr.mxu0 0.0
  %1986 = vmatpush1.msra.mxu0 0.0
  %1987 = vmatprep.subr.mxu0 0.0
  %1988 = vmatpush1.msra.mxu0 0.0
  %1989 = vmatprep.subr.mxu0 0.0
  %1990 = vmatpush1.msra.mxu0 0.0
  %1991 = vmatprep.subr.mxu0 0.0
  %1992 = vmatpush1.msra.mxu0 0.0
  %1993 = vmatprep.subr.mxu0 0.0
  %1994 = vmatpush1.msra.mxu0 0.0
  %1995 = vmatprep.subr.mxu0 0.0
  %1996 = vmatpush1.msra.mxu0 0.0
  %1997 = vmatprep.subr.mxu0 0.0
  %1998 = vmatpush1.msra.mxu0 0.0
  %1999 = vmatprep.subr.mxu0 0.0
  %2000 = vmatpush1.msra.mxu0 0.0
  %2001 = vmatprep.subr.mxu0 0.0
  %2002 = vmatpush1.msra.mxu0 0.0
  %2003 = vmatprep.subr.mxu0 0.0
  %2004 = vmatpush1.msra.mxu0 0.0
  %2005 = vmatprep.subr.mxu0 0.0
  %2006 = vmatpush1.msra.mxu0 0.0
  %2007 = vmatprep.subr.mxu0 0.0
  %2008 = vmatpush1.msra.mxu0 0.0
  %2009 = vmatprep.subr.mxu0 0.0
  %2010 = vmatpush1.msra.mxu0 0.0
  %2011 = vmatprep.subr.mxu0 0.0
  %2012 = vmatpush1.msra.mxu0 0.0
  %2013 = vmatprep.subr.mxu0 0.0
  %2014 = vmatpush1.msra.mxu0 0.0
  %2015 = vmatprep.subr.mxu0 0.0
  %2016 = vmatpush1.msra.mxu0 0.0
  %2017 = vmatprep.subr.mxu0 0.0
  %2018 = vmatpush1.msra.mxu0 0.0
  %2019 = vmatprep.subr.mxu0 0.0
  %2020 = vmatpush1.msra.mxu0 0.0
  %2021 = vmatprep.subr.mxu0 0.0
  %2022 = vmatpush1.msra.mxu0 0.0
  %2023 = vmatprep.subr.mxu0 0.0
  %2024 = vmatpush1.msra.mxu0 0.0
  %2025 = vmatprep.subr.mxu0 0.0
  %2026 = vmatpush1.msra.mxu0 0.0
  %2027 = vmatprep.subr.mxu0 0.0
  %2028 = vmatpush1.msra.mxu0 0.0
  %2029 = vmatprep.subr.mxu0 0.0
  %2030 = vmatpush1.msra.mxu0 0.0
  %2031 = vmatprep.subr.mxu0 0.0
  %2032 = vmatpush1.msra.mxu0 0.0
  %2033 = vmatprep.subr.mxu0 0.0
  %2034 = vmatpush1.msra.mxu0 0.0
  %2035 = vmatprep.mubr.f32.mxu0 0.0
  %2036 = vmatmul.mubr.f32.gmra.mrb[0].mxu0 %v1543
  %v2037 = vpop.f32.mrb[0].mxu0
  %v2038 = vadd.f32 %v1513, %v2037
  %v2039 = vpop.f32.mrb[0].mxu0
  %v2040 = vadd.f32 %v1517, %v2039
  %2041 = vdwg.mxu0
  %2042 = vmatprep.subr.mxu0 %v1409
  %2043 = vmatpush1.msra.mxu0 %v1408
  %2044 = vmatprep.subr.mxu0 %v1425
  %2045 = vmatpush1.msra.mxu0 %v1424
  %2046 = vmatprep.subr.mxu0 %v1441
  %2047 = vmatpush1.msra.mxu0 %v1440
  %2048 = vmatprep.subr.mxu0 %v1457
  %2049 = vmatpush1.msra.mxu0 %v1456
  %2050 = vmatprep.subr.mxu0 0.0
  %2051 = vmatpush1.msra.mxu0 0.0
  %2052 = vmatprep.subr.mxu0 0.0
  %2053 = vmatpush1.msra.mxu0 0.0
  %2054 = vmatprep.subr.mxu0 0.0
  %2055 = vmatpush1.msra.mxu0 0.0
  %2056 = vmatprep.subr.mxu0 0.0
  %2057 = vmatpush1.msra.mxu0 0.0
  %2058 = vmatprep.subr.mxu0 0.0
  %2059 = vmatpush1.msra.mxu0 0.0
  %2060 = vmatprep.subr.mxu0 0.0
  %2061 = vmatpush1.msra.mxu0 0.0
  %2062 = vmatprep.subr.mxu0 0.0
  %2063 = vmatpush1.msra.mxu0 0.0
  %2064 = vmatprep.subr.mxu0 0.0
  %2065 = vmatpush1.msra.mxu0 0.0
  %2066 = vmatprep.subr.mxu0 0.0
  %2067 = vmatpush1.msra.mxu0 0.0
  %2068 = vmatprep.subr.mxu0 0.0
  %2069 = vmatpush1.msra.mxu0 0.0
  %2070 = vmatprep.subr.mxu0 0.0
  %2071 = vmatpush1.msra.mxu0 0.0
  %2072 = vmatprep.subr.mxu0 0.0
  %2073 = vmatpush1.msra.mxu0 0.0
  %2074 = vmatprep.subr.mxu0 0.0
  %2075 = vmatpush1.msra.mxu0 0.0
  %2076 = vmatprep.subr.mxu0 0.0
  %2077 = vmatpush1.msra.mxu0 0.0
  %2078 = vmatprep.subr.mxu0 0.0
  %2079 = vmatpush1.msra.mxu0 0.0
  %2080 = vmatprep.subr.mxu0 0.0
  %2081 = vmatpush1.msra.mxu0 0.0
  %2082 = vmatprep.subr.mxu0 0.0
  %2083 = vmatpush1.msra.mxu0 0.0
  %2084 = vmatprep.subr.mxu0 0.0
  %2085 = vmatpush1.msra.mxu0 0.0
  %2086 = vmatprep.subr.mxu0 0.0
  %2087 = vmatpush1.msra.mxu0 0.0
  %2088 = vmatprep.subr.mxu0 0.0
  %2089 = vmatpush1.msra.mxu0 0.0
  %2090 = vmatprep.subr.mxu0 0.0
  %2091 = vmatpush1.msra.mxu0 0.0
  %2092 = vmatprep.subr.mxu0 0.0
  %2093 = vmatpush1.msra.mxu0 0.0
  %2094 = vmatprep.subr.mxu0 0.0
  %2095 = vmatpush1.msra.mxu0 0.0
  %2096 = vmatprep.subr.mxu0 0.0
  %2097 = vmatpush1.msra.mxu0 0.0
  %2098 = vmatprep.subr.mxu0 0.0
  %2099 = vmatpush1.msra.mxu0 0.0
  %2100 = vmatprep.subr.mxu0 0.0
  %2101 = vmatpush1.msra.mxu0 0.0
  %2102 = vmatprep.subr.mxu0 0.0
  %2103 = vmatpush1.msra.mxu0 0.0
  %2104 = vmatprep.subr.mxu0 0.0
  %2105 = vmatpush1.msra.mxu0 0.0
  %2106 = vmatprep.mubr.f32.mxu0 0.0
  %2107 = vmatmul.mubr.f32.gmra.mrb[0].mxu0 %v1543
  %v2108 = vpop.f32.mrb[0].mxu0
  %v2109 = vadd.f32 %v1521, %v2108
  %v2110 = vpop.f32.mrb[0].mxu0
  %v2111 = vadd.f32 %v1525, %v2110
  %2112 = vdwg.mxu0
  %v2113 = vmax.f32 %v1612, 0.0
  %v2114 = vmax.f32 %v1614, 0.0
  %v2115 = vmax.f32 %v1683, 0.0
  %v2116 = vmax.f32 %v1685, 0.0
  %v2117 = vmax.f32 %v1754, 0.0
  %v2118 = vmax.f32 %v1756, 0.0
  %v2119 = vmax.f32 %v1825, 0.0
  %v2120 = vmax.f32 %v1827, 0.0
  %v2121 = vmax.f32 %v1896, 0.0
  %v2122 = vmax.f32 %v1898, 0.0
  %v2123 = vmax.f32 %v1967, 0.0
  %v2124 = vmax.f32 %v1969, 0.0
  %v2125 = vmax.f32 %v2038, 0.0
  %v2126 = vmax.f32 %v2040, 0.0
  %v2127 = vmax.f32 %v2109, 0.0
  %v2128 = vmax.f32 %v2111, 0.0
  %v2145 = vcombine.low %v2113, %v2114
  %v2146 = vcombine.low %v2115, %v2116
  %v2148 = vunpack.c.l.s4 1983009808
  %v2149 = vunpack.c.0.s8 %v2148
  %v2150 = vlaneseq
  %v2151 = vshrl.u32 %v2150, 7
  %v2152 = vsub.s32 %v2149, %v2151
  %v2153 = vrot.slane %v2145, %v2152
  %v2155 = vunpack.c.l.s4 1983009808
  %v2156 = vunpack.c.0.s8 %v2155
  %v2157 = vlaneseq
  %v2158 = vshrl.u32 %v2157, 7
  %v2159 = vsub.s32 %v2156, %v2158
  %v2160 = vrot.slane %v2146, %v2159
  %v2161 = vcombine.low %v2153, %v2160
  %v2162 = vcombine.low %v2117, %v2118
  %v2163 = vcombine.low %v2119, %v2120
  %v2165 = vunpack.c.l.s4 1983009808
  %v2166 = vunpack.c.0.s8 %v2165
  %v2167 = vlaneseq
  %v2168 = vshrl.u32 %v2167, 7
  %v2169 = vsub.s32 %v2166, %v2168
  %v2170 = vrot.slane %v2162, %v2169
  %v2172 = vunpack.c.l.s4 1983009808
  %v2173 = vunpack.c.0.s8 %v2172
  %v2174 = vlaneseq
  %v2175 = vshrl.u32 %v2174, 7
  %v2176 = vsub.s32 %v2173, %v2175
  %v2177 = vrot.slane %v2163, %v2176
  %v2178 = vcombine.low %v2170, %v2177
  %v2179 = vcombine.low %v2121, %v2122
  %v2180 = vcombine.low %v2123, %v2124
  %v2182 = vunpack.c.l.s4 1983009808
  %v2183 = vunpack.c.0.s8 %v2182
  %v2184 = vlaneseq
  %v2185 = vshrl.u32 %v2184, 7
  %v2186 = vsub.s32 %v2183, %v2185
  %v2187 = vrot.slane %v2179, %v2186
  %v2189 = vunpack.c.l.s4 1983009808
  %v2190 = vunpack.c.0.s8 %v2189
  %v2191 = vlaneseq
  %v2192 = vshrl.u32 %v2191, 7
  %v2193 = vsub.s32 %v2190, %v2192
  %v2194 = vrot.slane %v2180, %v2193
  %v2195 = vcombine.low %v2187, %v2194
  %v2196 = vcombine.low %v2125, %v2126
  %v2197 = vcombine.low %v2127, %v2128
  %v2199 = vunpack.c.l.s4 1983009808
  %v2200 = vunpack.c.0.s8 %v2199
  %v2201 = vlaneseq
  %v2202 = vshrl.u32 %v2201, 7
  %v2203 = vsub.s32 %v2200, %v2202
  %v2204 = vrot.slane %v2196, %v2203
  %v2206 = vunpack.c.l.s4 1983009808
  %v2207 = vunpack.c.0.s8 %v2206
  %v2208 = vlaneseq
  %v2209 = vshrl.u32 %v2208, 7
  %v2210 = vsub.s32 %v2207, %v2209
  %v2211 = vrot.slane %v2197, %v2210
  %v2212 = vcombine.low %v2204, %v2211
  %2217 = vst [vmem:[%s16] sm:$0xff] %v2161
  %2218 = vst [vmem:[%s16 + $0x8] sm:$0xff] %v2178
  %2219 = vst [vmem:[%s16 + $0x10] sm:$0xff] %v2195
  %2220 = vst [vmem:[%s16 + $0x18] sm:$0xff] %v2212
  // Predicated region
  $region66: #{_lambda_.4} parent=0 // pred_check
    _
  $region67: #{_lambda_.4} parent=0 // pred_check_branch
    %2222 = sbr.rel (0) target = $region69
  $region68: #{_lambda_.4} parent=0 // pred_region
    _
  $region69: #{_lambda_.4} parent=0 // pred_fallthru
    _
  // Predicated region
  $region70: #{_lambda_.4} parent=0 // pred_check
    _
  $region71: #{_lambda_.4} parent=0 // pred_check_branch
    %2224 = sbr.rel (0) target = $region73
  $region72: #{_lambda_.4} parent=0 // pred_region
    _
  $region73: #{_lambda_.4} parent=0 // pred_fallthru
    _

// kernel: tile.38
$region0: #{tile.38}
  #allocation0 [shape = 's32[1]{0}', space=sflag, size = 0x4, scoped, tag = 'scoped memory for tile.38']
  %s0 = inlined_call_operand.vmem [shape: f32[4], index: 0, kind: input, shape index: {}]
  %s1 = inlined_call_operand.vmem [shape: f32[16,4], index: 1, kind: output, shape index: {}]
  // Predicated region
  $region2: #{tile.38} parent=0 // pred_check
    _
  $region3: #{tile.38} parent=0 // pred_check_branch
    %3 = sbr.rel (0) target = $region5
  $region4: #{tile.38} parent=0 // pred_region
    _
  $region5: #{tile.38} parent=0 // pred_fallthru
    _
  %v4 = vld [vmem:[%s0] ss:$0 sm:$0xff]
  %5 = vst [vmem:[%s1] sm:$0xff] %v4
  %s6 = scalar_lea.vmem %s1, 8
  %7 = vst [vmem:[%s6] sm:$0xff] %v4

// kernel: tile.39
$region0: #{tile.39}
  %s0 = inlined_call_operand.vmem [shape: f32[16,4], index: 0, kind: input, shape index: {}]
  %s1 = inlined_call_operand.vmem [shape: f32[1,64], index: 1, kind: output, shape index: {}]
  $region1: #{tile.39} parent=0
    #allocation0 [shape = 'u8[4096]{0}', space=vmem, size = 0x1000, scoped, tag = 'scoped mem for output reshape']
    %v2 = vld [vmem:[%s0] sm:$0x1]
    %vm3 = vcmask 31744
    %4 = vst.msk [vmem:[#allocation0] sm:$0x1] %vm3, %v2
    %s5 = scalar_lea.vmem %s0, 15
    %v6 = vld [vmem:[%s5] sm:$0x1]
    %7 = vrot.lane.b32.xlu0 %v6, 60
    %v8 = vpop.permute.xlu0 %7
    %vm9 = vcmask 523744
    %10 = vst.msk [vmem:[#allocation0] sm:$0x1] %vm9, %v8
    %s11 = scalar_lea.vmem %s0, 14
    %v12 = vld [vmem:[%s11] sm:$0x1]
    %13 = vrot.lane.b32.xlu0 %v12, 56
    %v14 = vpop.permute.xlu0 %13
    %vm15 = vcmask 490944
    %16 = vst.msk [vmem:[#allocation0] sm:$0x1] %vm15, %v14
    %s17 = scalar_lea.vmem %s0, 13
    %v18 = vld [vmem:[%s17] sm:$0x1]
    %19 = vrot.lane.b32.xlu0 %v18, 52
    %v20 = vpop.permute.xlu0 %19
    %vm21 = vcmask 458144
    %22 = vst.msk [vmem:[#allocation0] sm:$0x1] %vm21, %v20
    %s23 = scalar_lea.vmem %s0, 12
    %v24 = vld [vmem:[%s23] sm:$0x1]
    %25 = vrot.lane.b32.xlu0 %v24, 48
    %v26 = vpop.permute.xlu0 %25
    %vm27 = vcmask 425344
    %28 = vst.msk [vmem:[#allocation0] sm:$0x1] %vm27, %v26
    %s29 = scalar_lea.vmem %s0, 11
    %v30 = vld [vmem:[%s29] sm:$0x1]
    %31 = vrot.lane.b32.xlu0 %v30, 44
    %v32 = vpop.permute.xlu0 %31
    %vm33 = vcmask 392544
    %34 = vst.msk [vmem:[#allocation0] sm:$0x1] %vm33, %v32
    %s35 = scalar_lea.vmem %s0, 10
    %v36 = vld [vmem:[%s35] sm:$0x1]
    %37 = vrot.lane.b32.xlu0 %v36, 40
    %v38 = vpop.permute.xlu0 %37
    %vm39 = vcmask 359744
    %40 = vst.msk [vmem:[#allocation0] sm:$0x1] %vm39, %v38
    %s41 = scalar_lea.vmem %s0, 9
    %v42 = vld [vmem:[%s41] sm:$0x1]
    %43 = vrot.lane.b32.xlu0 %v42, 36
    %v44 = vpop.permute.xlu0 %43
    %vm45 = vcmask 326944
    %46 = vst.msk [vmem:[#allocation0] sm:$0x1] %vm45, %v44
    %s47 = scalar_lea.vmem %s0, 8
    %v48 = vld [vmem:[%s47] sm:$0x1]
    %49 = vrot.lane.b32.xlu0 %v48, 32
    %v50 = vpop.permute.xlu0 %49
    %vm51 = vcmask 294144
    %52 = vst.msk [vmem:[#allocation0] sm:$0x1] %vm51, %v50
    %s53 = scalar_lea.vmem %s0, 7
    %v54 = vld [vmem:[%s53] sm:$0x1]
    %55 = vrot.lane.b32.xlu0 %v54, 28
    %v56 = vpop.permute.xlu0 %55
    %vm57 = vcmask 261344
    %58 = vst.msk [vmem:[#allocation0] sm:$0x1] %vm57, %v56
    %s59 = scalar_lea.vmem %s0, 6
    %v60 = vld [vmem:[%s59] sm:$0x1]
    %61 = vrot.lane.b32.xlu0 %v60, 24
    %v62 = vpop.permute.xlu0 %61
    %vm63 = vcmask 228544
    %64 = vst.msk [vmem:[#allocation0] sm:$0x1] %vm63, %v62
    %s65 = scalar_lea.vmem %s0, 5
    %v66 = vld [vmem:[%s65] sm:$0x1]
    %67 = vrot.lane.b32.xlu0 %v66, 20
    %v68 = vpop.permute.xlu0 %67
    %vm69 = vcmask 195744
    %70 = vst.msk [vmem:[#allocation0] sm:$0x1] %vm69, %v68
    %s71 = scalar_lea.vmem %s0, 4
    %v72 = vld [vmem:[%s71] sm:$0x1]
    %73 = vrot.lane.b32.xlu0 %v72, 16
    %v74 = vpop.permute.xlu0 %73
    %vm75 = vcmask 162944
    %76 = vst.msk [vmem:[#allocation0] sm:$0x1] %vm75, %v74
    %s77 = scalar_lea.vmem %s0, 3
    %v78 = vld [vmem:[%s77] sm:$0x1]
    %79 = vrot.lane.b32.xlu0 %v78, 12
    %v80 = vpop.permute.xlu0 %79
    %vm81 = vcmask 130144
    %82 = vst.msk [vmem:[#allocation0] sm:$0x1] %vm81, %v80
    %s83 = scalar_lea.vmem %s0, 2
    %v84 = vld [vmem:[%s83] sm:$0x1]
    %85 = vrot.lane.b32.xlu0 %v84, 8
    %v86 = vpop.permute.xlu0 %85
    %vm87 = vcmask 97344
    %88 = vst.msk [vmem:[#allocation0] sm:$0x1] %vm87, %v86
    %s89 = scalar_lea.vmem %s0, 1
    %v90 = vld [vmem:[%s89] sm:$0x1]
    %91 = vrot.lane.b32.xlu0 %v90, 4
    %v92 = vpop.permute.xlu0 %91
    %vm93 = vcmask 64544
    %94 = vst.msk [vmem:[#allocation0] sm:$0x1] %vm93, %v92
    %s96 = sshllo.u32 0, 1
    %v98 = vld [vmem:[#allocation0] sm:%s96]
    %s99 = sshllo.u32 0, 1
    %100 = vst [vmem:[%s1] sm:%s99] %v98

// kernel: _lambda_.5
$region0: #{_lambda_.5}
  #allocation0 [shape = 'u32[]', space=smem, size = 0x4, offset = 0x4, fixed_abs, tag = 'smem constant byte address 0x4 - core index']
  #allocation1 [shape = 'u32[144,128]{1,0:T(1,128)}', space=vmem, size = 0x12000, scoped, tag = 'internal scratch']
  %s0 = inlined_call_operand.vmem [shape: f32[32,128], index: 0, kind: input, shape index: {}]
  %s1 = inlined_call_operand.vmem [shape: f32[32,32], index: 1, kind: input, shape index: {}]
  %s2 = inlined_call_operand.vmem [shape: f32[32,32], index: 2, kind: input, shape index: {}]
  %s3 = inlined_call_operand.vmem [shape: f32[128,128], index: 3, kind: input, shape index: {}]
  %s4 = inlined_call_operand.vmem [shape: f32[128,128], index: 4, kind: input, shape index: {}]
  %s5 = inlined_call_operand.vmem [shape: f32[128,128], index: 5, kind: input, shape index: {}]
  %s6 = inlined_call_operand.vmem [shape: f32[1,128], index: 6, kind: input, shape index: {}]
  %s7 = inlined_call_operand.vmem [shape: f32[128,64], index: 7, kind: input, shape index: {}]
  %s8 = inlined_call_operand.vmem [shape: f32[128,64], index: 8, kind: input, shape index: {}]
  %s9 = inlined_call_operand.vmem [shape: f32[128,64], index: 9, kind: input, shape index: {}]
  %s10 = inlined_call_operand.vmem [shape: f32[1,64], index: 10, kind: input, shape index: {}]
  %s11 = inlined_call_operand.vmem [shape: f32[32,64], index: 11, kind: output, shape index: {}]
  %s12 = sld [smem:[#allocation0]]
  $region54: #{_lambda_.5} parent=0
    _
  %s14 = ssub.s32 1, %s12
  %s15 = scalar_select 0, %s14, %s12
  // Predicated region
  $region2: #{_lambda_.5} parent=0 // pred_check
    _
  $region3: #{_lambda_.5} parent=0 // pred_check_branch
    %17 = sbr.rel (0) target = $region5
  $region4: #{_lambda_.5} parent=0 // pred_region
    _
  $region5: #{_lambda_.5} parent=0 // pred_fallthru
    _
  // Predicated region
  $region6: #{_lambda_.5} parent=0 // pred_check
    _
  $region7: #{_lambda_.5} parent=0 // pred_check_branch
    %19 = sbr.rel (0) target = $region9
  $region8: #{_lambda_.5} parent=0 // pred_region
    _
  $region9: #{_lambda_.5} parent=0 // pred_fallthru
    _
  // Predicated region
  $region10: #{_lambda_.5} parent=0 // pred_check
    _
  $region11: #{_lambda_.5} parent=0 // pred_check_branch
    %21 = sbr.rel (0) target = $region13
  $region12: #{_lambda_.5} parent=0 // pred_region
    _
  $region13: #{_lambda_.5} parent=0 // pred_fallthru
    _
  // Predicated region
  $region14: #{_lambda_.5} parent=0 // pred_check
    _
  $region15: #{_lambda_.5} parent=0 // pred_check_branch
    %23 = sbr.rel (0) target = $region17
  $region16: #{_lambda_.5} parent=0 // pred_region
    _
  $region17: #{_lambda_.5} parent=0 // pred_fallthru
    _
  // Predicated region
  $region18: #{_lambda_.5} parent=0 // pred_check
    _
  $region19: #{_lambda_.5} parent=0 // pred_check_branch
    %25 = sbr.rel (0) target = $region21
  $region20: #{_lambda_.5} parent=0 // pred_region
    _
  $region21: #{_lambda_.5} parent=0 // pred_fallthru
    _
  // Predicated region
  $region22: #{_lambda_.5} parent=0 // pred_check
    _
  $region23: #{_lambda_.5} parent=0 // pred_check_branch
    %27 = sbr.rel (0) target = $region25
  $region24: #{_lambda_.5} parent=0 // pred_region
    _
  $region25: #{_lambda_.5} parent=0 // pred_fallthru
    _
  // Predicated region
  $region26: #{_lambda_.5} parent=0 // pred_check
    _
  $region27: #{_lambda_.5} parent=0 // pred_check_branch
    %29 = sbr.rel (0) target = $region29
  $region28: #{_lambda_.5} parent=0 // pred_region
    _
  $region29: #{_lambda_.5} parent=0 // pred_fallthru
    _
  // Predicated region
  $region30: #{_lambda_.5} parent=0 // pred_check
    _
  $region31: #{_lambda_.5} parent=0 // pred_check_branch
    %31 = sbr.rel (0) target = $region33
  $region32: #{_lambda_.5} parent=0 // pred_region
    _
  $region33: #{_lambda_.5} parent=0 // pred_fallthru
    _
  // Predicated region
  $region34: #{_lambda_.5} parent=0 // pred_check
    _
  $region35: #{_lambda_.5} parent=0 // pred_check_branch
    %33 = sbr.rel (0) target = $region37
  $region36: #{_lambda_.5} parent=0 // pred_region
    _
  $region37: #{_lambda_.5} parent=0 // pred_fallthru
    _
  // Predicated region
  $region38: #{_lambda_.5} parent=0 // pred_check
    _
  $region39: #{_lambda_.5} parent=0 // pred_check_branch
    %35 = sbr.rel (0) target = $region41
  $region40: #{_lambda_.5} parent=0 // pred_region
    _
  $region41: #{_lambda_.5} parent=0 // pred_fallthru
    _
  // Predicated region
  $region42: #{_lambda_.5} parent=0 // pred_check
    _
  $region43: #{_lambda_.5} parent=0 // pred_check_branch
    %37 = sbr.rel (0) target = $region45
  $region44: #{_lambda_.5} parent=0 // pred_region
    _
  $region45: #{_lambda_.5} parent=0 // pred_fallthru
    _
  %v38 = vld [vmem:[%s0] sm:$0xff]
  %v39 = vld [vmem:[%s0 + $0x8] sm:$0xff]
  %v40 = vld [vmem:[%s0 + $0x10] sm:$0xff]
  %v41 = vld [vmem:[%s0 + $0x18] sm:$0xff]
  %v42 = vld [vmem:[%s1] sm:$0xff]
  %v43 = vld [vmem:[%s1 + $0x8] sm:$0xff]
  %v44 = vld [vmem:[%s1 + $0x10] sm:$0xff]
  %v45 = vld [vmem:[%s1 + $0x18] sm:$0xff]
  %v46 = vld [vmem:[%s2] sm:$0xff]
  %v47 = vld [vmem:[%s2 + $0x8] sm:$0xff]
  %v48 = vld [vmem:[%s2 + $0x10] sm:$0xff]
  %v49 = vld [vmem:[%s2 + $0x18] sm:$0xff]
  %v50 = vld [vmem:[%s3] sm:$0xff]
  %v51 = vld [vmem:[%s3 + $0x8] sm:$0xff]
  %v52 = vld [vmem:[%s3 + $0x10] sm:$0xff]
  %v53 = vld [vmem:[%s3 + $0x18] sm:$0xff]
  %v54 = vld [vmem:[%s3 + $0x20] sm:$0xff]
  %v55 = vld [vmem:[%s3 + $0x28] sm:$0xff]
  %v56 = vld [vmem:[%s3 + $0x30] sm:$0xff]
  %v57 = vld [vmem:[%s3 + $0x38] sm:$0xff]
  %v58 = vld [vmem:[%s3 + $0x40] sm:$0xff]
  %v59 = vld [vmem:[%s3 + $0x48] sm:$0xff]
  %v60 = vld [vmem:[%s3 + $0x50] sm:$0xff]
  %v61 = vld [vmem:[%s3 + $0x58] sm:$0xff]
  %v62 = vld [vmem:[%s3 + $0x60] sm:$0xff]
  %v63 = vld [vmem:[%s3 + $0x68] sm:$0xff]
  %v64 = vld [vmem:[%s3 + $0x70] sm:$0xff]
  %v65 = vld [vmem:[%s3 + $0x78] sm:$0xff]
  %v66 = vld [vmem:[%s4] sm:$0xff]
  %v67 = vld [vmem:[%s4 + $0x8] sm:$0xff]
  %v68 = vld [vmem:[%s4 + $0x10] sm:$0xff]
  %v69 = vld [vmem:[%s4 + $0x18] sm:$0xff]
  %v70 = vld [vmem:[%s4 + $0x20] sm:$0xff]
  %v71 = vld [vmem:[%s4 + $0x28] sm:$0xff]
  %v72 = vld [vmem:[%s4 + $0x30] sm:$0xff]
  %v73 = vld [vmem:[%s4 + $0x38] sm:$0xff]
  %v74 = vld [vmem:[%s4 + $0x40] sm:$0xff]
  %v75 = vld [vmem:[%s4 + $0x48] sm:$0xff]
  %v76 = vld [vmem:[%s4 + $0x50] sm:$0xff]
  %v77 = vld [vmem:[%s4 + $0x58] sm:$0xff]
  %v78 = vld [vmem:[%s4 + $0x60] sm:$0xff]
  %v79 = vld [vmem:[%s4 + $0x68] sm:$0xff]
  %v80 = vld [vmem:[%s4 + $0x70] sm:$0xff]
  %v81 = vld [vmem:[%s4 + $0x78] sm:$0xff]
  %v82 = vld [vmem:[%s5] sm:$0xff]
  %v83 = vld [vmem:[%s5 + $0x8] sm:$0xff]
  %v84 = vld [vmem:[%s5 + $0x10] sm:$0xff]
  %v85 = vld [vmem:[%s5 + $0x18] sm:$0xff]
  %v86 = vld [vmem:[%s5 + $0x20] sm:$0xff]
  %v87 = vld [vmem:[%s5 + $0x28] sm:$0xff]
  %v88 = vld [vmem:[%s5 + $0x30] sm:$0xff]
  %v89 = vld [vmem:[%s5 + $0x38] sm:$0xff]
  %v90 = vld [vmem:[%s5 + $0x40] sm:$0xff]
  %v91 = vld [vmem:[%s5 + $0x48] sm:$0xff]
  %v92 = vld [vmem:[%s5 + $0x50] sm:$0xff]
  %v93 = vld [vmem:[%s5 + $0x58] sm:$0xff]
  %v94 = vld [vmem:[%s5 + $0x60] sm:$0xff]
  %v95 = vld [vmem:[%s5 + $0x68] sm:$0xff]
  %v96 = vld [vmem:[%s5 + $0x70] sm:$0xff]
  %v97 = vld [vmem:[%s5 + $0x78] sm:$0xff]
  %v98 = vld [vmem:[%s6] sm:$0x1]
  %99 = vmatprep.subr.mxu0 0.0
  %100 = vmatpush1.msra.mxu0 %v50
  %101 = vmatprep.subr.mxu0 0.0
  %102 = vmatpush1.msra.mxu0 %v51
  %103 = vmatprep.subr.mxu0 0.0
  %104 = vmatpush1.msra.mxu0 %v52
  %105 = vmatprep.subr.mxu0 0.0
  %106 = vmatpush1.msra.mxu0 %v53
  %107 = vmatprep.subr.mxu0 0.0
  %108 = vmatpush1.msra.mxu0 %v54
  %109 = vmatprep.subr.mxu0 0.0
  %110 = vmatpush1.msra.mxu0 %v55
  %111 = vmatprep.subr.mxu0 0.0
  %112 = vmatpush1.msra.mxu0 %v56
  %113 = vmatprep.subr.mxu0 0.0
  %114 = vmatpush1.msra.mxu0 %v57
  %115 = vmatprep.subr.mxu0 0.0
  %116 = vmatpush1.msra.mxu0 %v58
  %117 = vmatprep.subr.mxu0 0.0
  %118 = vmatpush1.msra.mxu0 %v59
  %119 = vmatprep.subr.mxu0 0.0
  %120 = vmatpush1.msra.mxu0 %v60
  %121 = vmatprep.subr.mxu0 0.0
  %122 = vmatpush1.msra.mxu0 %v61
  %123 = vmatprep.subr.mxu0 0.0
  %124 = vmatpush1.msra.mxu0 %v62
  %125 = vmatprep.subr.mxu0 0.0
  %126 = vmatpush1.msra.mxu0 %v63
  %127 = vmatprep.subr.mxu0 0.0
  %128 = vmatpush1.msra.mxu0 %v64
  %129 = vmatprep.subr.mxu0 0.0
  %130 = vmatpush1.msra.mxu0 %v65
  %131 = vmatprep.subr.mxu0 0.0
  %132 = vmatpush1.msra.mxu0 0.0
  %133 = vmatprep.subr.mxu0 0.0
  %134 = vmatpush1.msra.mxu0 0.0
  %135 = vmatprep.subr.mxu0 0.0
  %136 = vmatpush1.msra.mxu0 0.0
  %137 = vmatprep.subr.mxu0 0.0
  %138 = vmatpush1.msra.mxu0 0.0
  %139 = vmatprep.subr.mxu0 0.0
  %140 = vmatpush1.msra.mxu0 0.0
  %141 = vmatprep.subr.mxu0 0.0
  %142 = vmatpush1.msra.mxu0 0.0
  %143 = vmatprep.subr.mxu0 0.0
  %144 = vmatpush1.msra.mxu0 0.0
  %145 = vmatprep.subr.mxu0 0.0
  %146 = vmatpush1.msra.mxu0 0.0
  %147 = vmatprep.subr.mxu0 0.0
  %148 = vmatpush1.msra.mxu0 0.0
  %149 = vmatprep.subr.mxu0 0.0
  %150 = vmatpush1.msra.mxu0 0.0
  %151 = vmatprep.subr.mxu0 0.0
  %152 = vmatpush1.msra.mxu0 0.0
  %153 = vmatprep.subr.mxu0 0.0
  %154 = vmatpush1.msra.mxu0 0.0
  %155 = vmatprep.subr.mxu0 0.0
  %156 = vmatpush1.msra.mxu0 0.0
  %157 = vmatprep.subr.mxu0 0.0
  %158 = vmatpush1.msra.mxu0 0.0
  %159 = vmatprep.subr.mxu0 0.0
  %160 = vmatpush1.msra.mxu0 0.0
  %161 = vmatprep.subr.mxu0 0.0
  %162 = vmatpush1.msra.mxu0 0.0
  %163 = vmatprep.mubr.f32.mxu0 0.0
  %164 = vmatmul.mubr.f32.gmra.mrb[0].mxu0 %v38
  %v165 = vpop.f32.mrb[0].mxu0
  %v166 = vadd.f32 0.0, %v165
  %v167 = vpop.f32.mrb[0].mxu0
  %168 = vmatprep.mubr.f32.mxu0 0.0
  %169 = vmatmul.mubr.f32.gmra.mrb[0].mxu0 %v39
  %v170 = vpop.f32.mrb[0].mxu0
  %v171 = vadd.f32 0.0, %v170
  %v172 = vpop.f32.mrb[0].mxu0
  %173 = vmatprep.mubr.f32.mxu0 0.0
  %174 = vmatmul.mubr.f32.gmra.mrb[0].mxu0 %v40
  %v175 = vpop.f32.mrb[0].mxu0
  %v176 = vadd.f32 0.0, %v175
  %v177 = vpop.f32.mrb[0].mxu0
  %178 = vmatprep.mubr.f32.mxu0 0.0
  %179 = vmatmul.mubr.f32.gmra.mrb[0].mxu0 %v41
  %v180 = vpop.f32.mrb[0].mxu0
  %v181 = vadd.f32 0.0, %v180
  %v182 = vpop.f32.mrb[0].mxu0
  %183 = vdwg.mxu0
  %184 = vmatprep.subr.mxu0 0.0
  %185 = vmatpush1.msra.mxu0 %v82
  %186 = vmatprep.subr.mxu0 0.0
  %187 = vmatpush1.msra.mxu0 %v83
  %188 = vmatprep.subr.mxu0 0.0
  %189 = vmatpush1.msra.mxu0 %v84
  %190 = vmatprep.subr.mxu0 0.0
  %191 = vmatpush1.msra.mxu0 %v85
  %192 = vmatprep.subr.mxu0 0.0
  %193 = vmatpush1.msra.mxu0 %v86
  %194 = vmatprep.subr.mxu0 0.0
  %195 = vmatpush1.msra.mxu0 %v87
  %196 = vmatprep.subr.mxu0 0.0
  %197 = vmatpush1.msra.mxu0 %v88
  %198 = vmatprep.subr.mxu0 0.0
  %199 = vmatpush1.msra.mxu0 %v89
  %200 = vmatprep.subr.mxu0 0.0
  %201 = vmatpush1.msra.mxu0 %v90
  %202 = vmatprep.subr.mxu0 0.0
  %203 = vmatpush1.msra.mxu0 %v91
  %204 = vmatprep.subr.mxu0 0.0
  %205 = vmatpush1.msra.mxu0 %v92
  %206 = vmatprep.subr.mxu0 0.0
  %207 = vmatpush1.msra.mxu0 %v93
  %208 = vmatprep.subr.mxu0 0.0
  %209 = vmatpush1.msra.mxu0 %v94
  %210 = vmatprep.subr.mxu0 0.0
  %211 = vmatpush1.msra.mxu0 %v95
  %212 = vmatprep.subr.mxu0 0.0
  %213 = vmatpush1.msra.mxu0 %v96
  %214 = vmatprep.subr.mxu0 0.0
  %215 = vmatpush1.msra.mxu0 %v97
  %216 = vmatprep.subr.mxu0 0.0
  %217 = vmatpush1.msra.mxu0 0.0
  %218 = vmatprep.subr.mxu0 0.0
  %219 = vmatpush1.msra.mxu0 0.0
  %220 = vmatprep.subr.mxu0 0.0
  %221 = vmatpush1.msra.mxu0 0.0
  %222 = vmatprep.subr.mxu0 0.0
  %223 = vmatpush1.msra.mxu0 0.0
  %224 = vmatprep.subr.mxu0 0.0
  %225 = vmatpush1.msra.mxu0 0.0
  %226 = vmatprep.subr.mxu0 0.0
  %227 = vmatpush1.msra.mxu0 0.0
  %228 = vmatprep.subr.mxu0 0.0
  %229 = vmatpush1.msra.mxu0 0.0
  %230 = vmatprep.subr.mxu0 0.0
  %231 = vmatpush1.msra.mxu0 0.0
  %232 = vmatprep.subr.mxu0 0.0
  %233 = vmatpush1.msra.mxu0 0.0
  %234 = vmatprep.subr.mxu0 0.0
  %235 = vmatpush1.msra.mxu0 0.0
  %236 = vmatprep.subr.mxu0 0.0
  %237 = vmatpush1.msra.mxu0 0.0
  %238 = vmatprep.subr.mxu0 0.0
  %239 = vmatpush1.msra.mxu0 0.0
  %240 = vmatprep.subr.mxu0 0.0
  %241 = vmatpush1.msra.mxu0 0.0
  %242 = vmatprep.subr.mxu0 0.0
  %243 = vmatpush1.msra.mxu0 0.0
  %244 = vmatprep.subr.mxu0 0.0
  %245 = vmatpush1.msra.mxu0 0.0
  %246 = vmatprep.subr.mxu0 0.0
  %247 = vmatpush1.msra.mxu0 0.0
  %248 = vmatprep.mubr.f32.mxu0 0.0
  %249 = vmatmul.mubr.f32.gmra.mrb[0].mxu0 %v38
  %v250 = vpop.f32.mrb[0].mxu0
  %v251 = vadd.f32 0.0, %v250
  %v252 = vpop.f32.mrb[0].mxu0
  %253 = vmatprep.mubr.f32.mxu0 0.0
  %254 = vmatmul.mubr.f32.gmra.mrb[0].mxu0 %v39
  %v255 = vpop.f32.mrb[0].mxu0
  %v256 = vadd.f32 0.0, %v255
  %v257 = vpop.f32.mrb[0].mxu0
  %258 = vmatprep.mubr.f32.mxu0 0.0
  %259 = vmatmul.mubr.f32.gmra.mrb[0].mxu0 %v40
  %v260 = vpop.f32.mrb[0].mxu0
  %v261 = vadd.f32 0.0, %v260
  %v262 = vpop.f32.mrb[0].mxu0
  %263 = vmatprep.mubr.f32.mxu0 0.0
  %264 = vmatmul.mubr.f32.gmra.mrb[0].mxu0 %v41
  %v265 = vpop.f32.mrb[0].mxu0
  %v266 = vadd.f32 0.0, %v265
  %v267 = vpop.f32.mrb[0].mxu0
  %268 = vdwg.mxu0
  %vm269 = vcmask 261120
  %v271 = vsel %vm269, %v42, 0
  %v274 = vsel %vm269, %v43, 0
  %v277 = vsel %vm269, %v44, 0
  %v280 = vsel %vm269, %v45, 0
  %282 = vmatprep.subr.mxu0 0.0
  %283 = vmatpush1.msra.mxu0 %v166
  %284 = vmatprep.subr.mxu0 0.0
  %285 = vmatpush1.msra.mxu0 %v171
  %286 = vmatprep.subr.mxu0 0.0
  %287 = vmatpush1.msra.mxu0 %v176
  %288 = vmatprep.subr.mxu0 0.0
  %289 = vmatpush1.msra.mxu0 %v181
  %290 = vmatprep.subr.mxu0 0.0
  %291 = vmatpush1.msra.mxu0 0.0
  %292 = vmatprep.subr.mxu0 0.0
  %293 = vmatpush1.msra.mxu0 0.0
  %294 = vmatprep.subr.mxu0 0.0
  %295 = vmatpush1.msra.mxu0 0.0
  %296 = vmatprep.subr.mxu0 0.0
  %297 = vmatpush1.msra.mxu0 0.0
  %298 = vmatprep.subr.mxu0 0.0
  %299 = vmatpush1.msra.mxu0 0.0
  %300 = vmatprep.subr.mxu0 0.0
  %301 = vmatpush1.msra.mxu0 0.0
  %302 = vmatprep.subr.mxu0 0.0
  %303 = vmatpush1.msra.mxu0 0.0
  %304 = vmatprep.subr.mxu0 0.0
  %305 = vmatpush1.msra.mxu0 0.0
  %306 = vmatprep.subr.mxu0 0.0
  %307 = vmatpush1.msra.mxu0 0.0
  %308 = vmatprep.subr.mxu0 0.0
  %309 = vmatpush1.msra.mxu0 0.0
  %310 = vmatprep.subr.mxu0 0.0
  %311 = vmatpush1.msra.mxu0 0.0
  %312 = vmatprep.subr.mxu0 0.0
  %313 = vmatpush1.msra.mxu0 0.0
  %314 = vmatprep.subr.mxu0 0.0
  %315 = vmatpush1.msra.mxu0 0.0
  %316 = vmatprep.subr.mxu0 0.0
  %317 = vmatpush1.msra.mxu0 0.0
  %318 = vmatprep.subr.mxu0 0.0
  %319 = vmatpush1.msra.mxu0 0.0
  %320 = vmatprep.subr.mxu0 0.0
  %321 = vmatpush1.msra.mxu0 0.0
  %322 = vmatprep.subr.mxu0 0.0
  %323 = vmatpush1.msra.mxu0 0.0
  %324 = vmatprep.subr.mxu0 0.0
  %325 = vmatpush1.msra.mxu0 0.0
  %326 = vmatprep.subr.mxu0 0.0
  %327 = vmatpush1.msra.mxu0 0.0
  %328 = vmatprep.subr.mxu0 0.0
  %329 = vmatpush1.msra.mxu0 0.0
  %330 = vmatprep.subr.mxu0 0.0
  %331 = vmatpush1.msra.mxu0 0.0
  %332 = vmatprep.subr.mxu0 0.0
  %333 = vmatpush1.msra.mxu0 0.0
  %334 = vmatprep.subr.mxu0 0.0
  %335 = vmatpush1.msra.mxu0 0.0
  %336 = vmatprep.subr.mxu0 0.0
  %337 = vmatpush1.msra.mxu0 0.0
  %338 = vmatprep.subr.mxu0 0.0
  %339 = vmatpush1.msra.mxu0 0.0
  %340 = vmatprep.subr.mxu0 0.0
  %341 = vmatpush1.msra.mxu0 0.0
  %342 = vmatprep.subr.mxu0 0.0
  %343 = vmatpush1.msra.mxu0 0.0
  %344 = vmatprep.subr.mxu0 0.0
  %345 = vmatpush1.msra.mxu0 0.0
  %346 = vmatprep.mubr.f32.mxu0 0.0
  %347 = vmatmul.mubr.f32.gmra.mrb[0].mxu0 %v271
  %v348 = vpop.f32.mrb[0].mxu0
  %v349 = vadd.f32 0.0, %v348
  %v350 = vpop.f32.mrb[0].mxu0
  %351 = vmatprep.mubr.f32.mxu0 0.0
  %352 = vmatmul.mubr.f32.gmra.mrb[0].mxu0 %v274
  %v353 = vpop.f32.mrb[0].mxu0
  %v354 = vadd.f32 0.0, %v353
  %v355 = vpop.f32.mrb[0].mxu0
  %356 = vmatprep.mubr.f32.mxu0 0.0
  %357 = vmatmul.mubr.f32.gmra.mrb[0].mxu0 %v277
  %v358 = vpop.f32.mrb[0].mxu0
  %v359 = vadd.f32 0.0, %v358
  %v360 = vpop.f32.mrb[0].mxu0
  %361 = vmatprep.mubr.f32.mxu0 0.0
  %362 = vmatmul.mubr.f32.gmra.mrb[0].mxu0 %v280
  %v363 = vpop.f32.mrb[0].mxu0
  %v364 = vadd.f32 0.0, %v363
  %v365 = vpop.f32.mrb[0].mxu0
  %366 = vdwg.mxu0
  %367 = vmatprep.subr.mxu0 0.0
  %368 = vmatpush1.msra.mxu0 %v66
  %369 = vmatprep.subr.mxu0 0.0
  %370 = vmatpush1.msra.mxu0 %v67
  %371 = vmatprep.subr.mxu0 0.0
  %372 = vmatpush1.msra.mxu0 %v68
  %373 = vmatprep.subr.mxu0 0.0
  %374 = vmatpush1.msra.mxu0 %v69
  %375 = vmatprep.subr.mxu0 0.0
  %376 = vmatpush1.msra.mxu0 %v70
  %377 = vmatprep.subr.mxu0 0.0
  %378 = vmatpush1.msra.mxu0 %v71
  %379 = vmatprep.subr.mxu0 0.0
  %380 = vmatpush1.msra.mxu0 %v72
  %381 = vmatprep.subr.mxu0 0.0
  %382 = vmatpush1.msra.mxu0 %v73
  %383 = vmatprep.subr.mxu0 0.0
  %384 = vmatpush1.msra.mxu0 %v74
  %385 = vmatprep.subr.mxu0 0.0
  %386 = vmatpush1.msra.mxu0 %v75
  %387 = vmatprep.subr.mxu0 0.0
  %388 = vmatpush1.msra.mxu0 %v76
  %389 = vmatprep.subr.mxu0 0.0
  %390 = vmatpush1.msra.mxu0 %v77
  %391 = vmatprep.subr.mxu0 0.0
  %392 = vmatpush1.msra.mxu0 %v78
  %393 = vmatprep.subr.mxu0 0.0
  %394 = vmatpush1.msra.mxu0 %v79
  %395 = vmatprep.subr.mxu0 0.0
  %396 = vmatpush1.msra.mxu0 %v80
  %397 = vmatprep.subr.mxu0 0.0
  %398 = vmatpush1.msra.mxu0 %v81
  %399 = vmatprep.subr.mxu0 0.0
  %400 = vmatpush1.msra.mxu0 0.0
  %401 = vmatprep.subr.mxu0 0.0
  %402 = vmatpush1.msra.mxu0 0.0
  %403 = vmatprep.subr.mxu0 0.0
  %404 = vmatpush1.msra.mxu0 0.0
  %405 = vmatprep.subr.mxu0 0.0
  %406 = vmatpush1.msra.mxu0 0.0
  %407 = vmatprep.subr.mxu0 0.0
  %408 = vmatpush1.msra.mxu0 0.0
  %409 = vmatprep.subr.mxu0 0.0
  %410 = vmatpush1.msra.mxu0 0.0
  %411 = vmatprep.subr.mxu0 0.0
  %412 = vmatpush1.msra.mxu0 0.0
  %413 = vmatprep.subr.mxu0 0.0
  %414 = vmatpush1.msra.mxu0 0.0
  %415 = vmatprep.subr.mxu0 0.0
  %416 = vmatpush1.msra.mxu0 0.0
  %417 = vmatprep.subr.mxu0 0.0
  %418 = vmatpush1.msra.mxu0 0.0
  %419 = vmatprep.subr.mxu0 0.0
  %420 = vmatpush1.msra.mxu0 0.0
  %421 = vmatprep.subr.mxu0 0.0
  %422 = vmatpush1.msra.mxu0 0.0
  %423 = vmatprep.subr.mxu0 0.0
  %424 = vmatpush1.msra.mxu0 0.0
  %425 = vmatprep.subr.mxu0 0.0
  %426 = vmatpush1.msra.mxu0 0.0
  %427 = vmatprep.subr.mxu0 0.0
  %428 = vmatpush1.msra.mxu0 0.0
  %429 = vmatprep.subr.mxu0 0.0
  %430 = vmatpush1.msra.mxu0 0.0
  %431 = vmatprep.mubr.f32.mxu0 0.0
  %432 = vmatmul.mubr.f32.gmra.mrb[0].mxu0 %v38
  %v433 = vpop.f32.mrb[0].mxu0
  %v434 = vadd.f32 %v349, %v433
  %v435 = vpop.f32.mrb[0].mxu0
  %436 = vmatprep.mubr.f32.mxu0 0.0
  %437 = vmatmul.mubr.f32.gmra.mrb[0].mxu0 %v39
  %v438 = vpop.f32.mrb[0].mxu0
  %v439 = vadd.f32 %v354, %v438
  %v440 = vpop.f32.mrb[0].mxu0
  %441 = vmatprep.mubr.f32.mxu0 0.0
  %442 = vmatmul.mubr.f32.gmra.mrb[0].mxu0 %v40
  %v443 = vpop.f32.mrb[0].mxu0
  %v444 = vadd.f32 %v359, %v443
  %v445 = vpop.f32.mrb[0].mxu0
  %446 = vmatprep.mubr.f32.mxu0 0.0
  %447 = vmatmul.mubr.f32.gmra.mrb[0].mxu0 %v41
  %v448 = vpop.f32.mrb[0].mxu0
  %v449 = vadd.f32 %v364, %v448
  %v450 = vpop.f32.mrb[0].mxu0
  %451 = vdwg.mxu0
  %v453 = vsel %vm269, %v46, 0
  %v456 = vsel %vm269, %v47, 0
  %v459 = vsel %vm269, %v48, 0
  %v462 = vsel %vm269, %v49, 0
  %464 = vmatprep.subr.mxu0 0.0
  %465 = vmatpush1.msra.mxu0 %v251
  %466 = vmatprep.subr.mxu0 0.0
  %467 = vmatpush1.msra.mxu0 %v256
  %468 = vmatprep.subr.mxu0 0.0
  %469 = vmatpush1.msra.mxu0 %v261
  %470 = vmatprep.subr.mxu0 0.0
  %471 = vmatpush1.msra.mxu0 %v266
  %472 = vmatprep.subr.mxu0 0.0
  %473 = vmatpush1.msra.mxu0 0.0
  %474 = vmatprep.subr.mxu0 0.0
  %475 = vmatpush1.msra.mxu0 0.0
  %476 = vmatprep.subr.mxu0 0.0
  %477 = vmatpush1.msra.mxu0 0.0
  %478 = vmatprep.subr.mxu0 0.0
  %479 = vmatpush1.msra.mxu0 0.0
  %480 = vmatprep.subr.mxu0 0.0
  %481 = vmatpush1.msra.mxu0 0.0
  %482 = vmatprep.subr.mxu0 0.0
  %483 = vmatpush1.msra.mxu0 0.0
  %484 = vmatprep.subr.mxu0 0.0
  %485 = vmatpush1.msra.mxu0 0.0
  %486 = vmatprep.subr.mxu0 0.0
  %487 = vmatpush1.msra.mxu0 0.0
  %488 = vmatprep.subr.mxu0 0.0
  %489 = vmatpush1.msra.mxu0 0.0
  %490 = vmatprep.subr.mxu0 0.0
  %491 = vmatpush1.msra.mxu0 0.0
  %492 = vmatprep.subr.mxu0 0.0
  %493 = vmatpush1.msra.mxu0 0.0
  %494 = vmatprep.subr.mxu0 0.0
  %495 = vmatpush1.msra.mxu0 0.0
  %496 = vmatprep.subr.mxu0 0.0
  %497 = vmatpush1.msra.mxu0 0.0
  %498 = vmatprep.subr.mxu0 0.0
  %499 = vmatpush1.msra.mxu0 0.0
  %500 = vmatprep.subr.mxu0 0.0
  %501 = vmatpush1.msra.mxu0 0.0
  %502 = vmatprep.subr.mxu0 0.0
  %503 = vmatpush1.msra.mxu0 0.0
  %504 = vmatprep.subr.mxu0 0.0
  %505 = vmatpush1.msra.mxu0 0.0
  %506 = vmatprep.subr.mxu0 0.0
  %507 = vmatpush1.msra.mxu0 0.0
  %508 = vmatprep.subr.mxu0 0.0
  %509 = vmatpush1.msra.mxu0 0.0
  %510 = vmatprep.subr.mxu0 0.0
  %511 = vmatpush1.msra.mxu0 0.0
  %512 = vmatprep.subr.mxu0 0.0
  %513 = vmatpush1.msra.mxu0 0.0
  %514 = vmatprep.subr.mxu0 0.0
  %515 = vmatpush1.msra.mxu0 0.0
  %516 = vmatprep.subr.mxu0 0.0
  %517 = vmatpush1.msra.mxu0 0.0
  %518 = vmatprep.subr.mxu0 0.0
  %519 = vmatpush1.msra.mxu0 0.0
  %520 = vmatprep.subr.mxu0 0.0
  %521 = vmatpush1.msra.mxu0 0.0
  %522 = vmatprep.subr.mxu0 0.0
  %523 = vmatpush1.msra.mxu0 0.0
  %524 = vmatprep.subr.mxu0 0.0
  %525 = vmatpush1.msra.mxu0 0.0
  %526 = vmatprep.subr.mxu0 0.0
  %527 = vmatpush1.msra.mxu0 0.0
  %528 = vmatprep.mubr.f32.mxu0 0.0
  %529 = vmatmul.mubr.f32.gmra.mrb[0].mxu0 %v453
  %v530 = vpop.f32.mrb[0].mxu0
  %v531 = vadd.f32 0.0, %v530
  %v532 = vpop.f32.mrb[0].mxu0
  %533 = vmatprep.mubr.f32.mxu0 0.0
  %534 = vmatmul.mubr.f32.gmra.mrb[0].mxu0 %v456
  %v535 = vpop.f32.mrb[0].mxu0
  %v536 = vadd.f32 0.0, %v535
  %v537 = vpop.f32.mrb[0].mxu0
  %538 = vmatprep.mubr.f32.mxu0 0.0
  %539 = vmatmul.mubr.f32.gmra.mrb[0].mxu0 %v459
  %v540 = vpop.f32.mrb[0].mxu0
  %v541 = vadd.f32 0.0, %v540
  %v542 = vpop.f32.mrb[0].mxu0
  %543 = vmatprep.mubr.f32.mxu0 0.0
  %544 = vmatmul.mubr.f32.gmra.mrb[0].mxu0 %v462
  %v545 = vpop.f32.mrb[0].mxu0
  %v546 = vadd.f32 0.0, %v545
  %v547 = vpop.f32.mrb[0].mxu0
  %548 = vdwg.mxu0
  %v549 = vadd.f32 %v434, %v531
  %v550 = vadd.f32 %v439, %v536
  %v551 = vadd.f32 %v444, %v541
  %v552 = vadd.f32 %v449, %v546
  %v554 = vlaneseq
  %v555 = vshrl.u32 %v554, 7
  %v556 = vsub.s32 0, %v555
  %v557 = vrot.slane %v98, %v556
  %v559 = vadd.f32 %v549, %v557
  %v560 = vadd.f32 %v550, %v557
  %v561 = vadd.f32 %v551, %v557
  %v562 = vadd.f32 %v552, %v557
  %v563 = vmax.f32 %v559, 0.0
  %v564 = vmax.f32 %v560, 0.0
  %v565 = vmax.f32 %v561, 0.0
  %v566 = vmax.f32 %v562, 0.0
  %v567 = vld [vmem:[%s7] sm:$0xff]
  %v568 = vld [vmem:[%s7 + $0x8] sm:$0xff]
  %v569 = vld [vmem:[%s7 + $0x10] sm:$0xff]
  %v570 = vld [vmem:[%s7 + $0x18] sm:$0xff]
  %v571 = vld [vmem:[%s7 + $0x20] sm:$0xff]
  %v572 = vld [vmem:[%s7 + $0x28] sm:$0xff]
  %v573 = vld [vmem:[%s7 + $0x30] sm:$0xff]
  %v574 = vld [vmem:[%s7 + $0x38] sm:$0xff]
  %v575 = vld [vmem:[%s7 + $0x40] sm:$0xff]
  %v576 = vld [vmem:[%s7 + $0x48] sm:$0xff]
  %v577 = vld [vmem:[%s7 + $0x50] sm:$0xff]
  %v578 = vld [vmem:[%s7 + $0x58] sm:$0xff]
  %v579 = vld [vmem:[%s7 + $0x60] sm:$0xff]
  %v580 = vld [vmem:[%s7 + $0x68] sm:$0xff]
  %v581 = vld [vmem:[%s7 + $0x70] sm:$0xff]
  %v582 = vld [vmem:[%s7 + $0x78] sm:$0xff]
  %v583 = vld [vmem:[%s8] sm:$0xff]
  %v584 = vld [vmem:[%s8 + $0x8] sm:$0xff]
  %v585 = vld [vmem:[%s8 + $0x10] sm:$0xff]
  %v586 = vld [vmem:[%s8 + $0x18] sm:$0xff]
  %v587 = vld [vmem:[%s8 + $0x20] sm:$0xff]
  %v588 = vld [vmem:[%s8 + $0x28] sm:$0xff]
  %v589 = vld [vmem:[%s8 + $0x30] sm:$0xff]
  %v590 = vld [vmem:[%s8 + $0x38] sm:$0xff]
  %v591 = vld [vmem:[%s8 + $0x40] sm:$0xff]
  %v592 = vld [vmem:[%s8 + $0x48] sm:$0xff]
  %v593 = vld [vmem:[%s8 + $0x50] sm:$0xff]
  %v594 = vld [vmem:[%s8 + $0x58] sm:$0xff]
  %v595 = vld [vmem:[%s8 + $0x60] sm:$0xff]
  %v596 = vld [vmem:[%s8 + $0x68] sm:$0xff]
  %v597 = vld [vmem:[%s8 + $0x70] sm:$0xff]
  %v598 = vld [vmem:[%s8 + $0x78] sm:$0xff]
  %v599 = vld [vmem:[%s9] sm:$0xff]
  %v600 = vld [vmem:[%s9 + $0x8] sm:$0xff]
  %v601 = vld [vmem:[%s9 + $0x10] sm:$0xff]
  %v602 = vld [vmem:[%s9 + $0x18] sm:$0xff]
  %v603 = vld [vmem:[%s9 + $0x20] sm:$0xff]
  %v604 = vld [vmem:[%s9 + $0x28] sm:$0xff]
  %v605 = vld [vmem:[%s9 + $0x30] sm:$0xff]
  %v606 = vld [vmem:[%s9 + $0x38] sm:$0xff]
  %v607 = vld [vmem:[%s9 + $0x40] sm:$0xff]
  %v608 = vld [vmem:[%s9 + $0x48] sm:$0xff]
  %v609 = vld [vmem:[%s9 + $0x50] sm:$0xff]
  %v610 = vld [vmem:[%s9 + $0x58] sm:$0xff]
  %v611 = vld [vmem:[%s9 + $0x60] sm:$0xff]
  %v612 = vld [vmem:[%s9 + $0x68] sm:$0xff]
  %v613 = vld [vmem:[%s9 + $0x70] sm:$0xff]
  %v614 = vld [vmem:[%s9 + $0x78] sm:$0xff]
  %v615 = vld [vmem:[%s10] sm:$0x1]
  %616 = vmatprep.subr.mxu0 0.0
  %617 = vmatpush1.msra.mxu0 %v567
  %618 = vmatprep.subr.mxu0 0.0
  %619 = vmatpush1.msra.mxu0 %v568
  %620 = vmatprep.subr.mxu0 0.0
  %621 = vmatpush1.msra.mxu0 %v569
  %622 = vmatprep.subr.mxu0 0.0
  %623 = vmatpush1.msra.mxu0 %v570
  %624 = vmatprep.subr.mxu0 0.0
  %625 = vmatpush1.msra.mxu0 %v571
  %626 = vmatprep.subr.mxu0 0.0
  %627 = vmatpush1.msra.mxu0 %v572
  %628 = vmatprep.subr.mxu0 0.0
  %629 = vmatpush1.msra.mxu0 %v573
  %630 = vmatprep.subr.mxu0 0.0
  %631 = vmatpush1.msra.mxu0 %v574
  %632 = vmatprep.subr.mxu0 0.0
  %633 = vmatpush1.msra.mxu0 %v575
  %634 = vmatprep.subr.mxu0 0.0
  %635 = vmatpush1.msra.mxu0 %v576
  %636 = vmatprep.subr.mxu0 0.0
  %637 = vmatpush1.msra.mxu0 %v577
  %638 = vmatprep.subr.mxu0 0.0
  %639 = vmatpush1.msra.mxu0 %v578
  %640 = vmatprep.subr.mxu0 0.0
  %641 = vmatpush1.msra.mxu0 %v579
  %642 = vmatprep.subr.mxu0 0.0
  %643 = vmatpush1.msra.mxu0 %v580
  %644 = vmatprep.subr.mxu0 0.0
  %645 = vmatpush1.msra.mxu0 %v581
  %646 = vmatprep.subr.mxu0 0.0
  %647 = vmatpush1.msra.mxu0 %v582
  %648 = vmatprep.subr.mxu0 0.0
  %649 = vmatpush1.msra.mxu0 0.0
  %650 = vmatprep.subr.mxu0 0.0
  %651 = vmatpush1.msra.mxu0 0.0
  %652 = vmatprep.subr.mxu0 0.0
  %653 = vmatpush1.msra.mxu0 0.0
  %654 = vmatprep.subr.mxu0 0.0
  %655 = vmatpush1.msra.mxu0 0.0
  %656 = vmatprep.subr.mxu0 0.0
  %657 = vmatpush1.msra.mxu0 0.0
  %658 = vmatprep.subr.mxu0 0.0
  %659 = vmatpush1.msra.mxu0 0.0
  %660 = vmatprep.subr.mxu0 0.0
  %661 = vmatpush1.msra.mxu0 0.0
  %662 = vmatprep.subr.mxu0 0.0
  %663 = vmatpush1.msra.mxu0 0.0
  %664 = vmatprep.subr.mxu0 0.0
  %665 = vmatpush1.msra.mxu0 0.0
  %666 = vmatprep.subr.mxu0 0.0
  %667 = vmatpush1.msra.mxu0 0.0
  %668 = vmatprep.subr.mxu0 0.0
  %669 = vmatpush1.msra.mxu0 0.0
  %670 = vmatprep.subr.mxu0 0.0
  %671 = vmatpush1.msra.mxu0 0.0
  %672 = vmatprep.subr.mxu0 0.0
  %673 = vmatpush1.msra.mxu0 0.0
  %674 = vmatprep.subr.mxu0 0.0
  %675 = vmatpush1.msra.mxu0 0.0
  %676 = vmatprep.subr.mxu0 0.0
  %677 = vmatpush1.msra.mxu0 0.0
  %678 = vmatprep.subr.mxu0 0.0
  %679 = vmatpush1.msra.mxu0 0.0
  %680 = vmatprep.mubr.f32.mxu0 0.0
  %681 = vmatmul.mubr.f32.gmra.mrb[0].mxu0 %v563
  %v682 = vpop.f32.mrb[0].mxu0
  %v683 = vadd.f32 0.0, %v682
  %v684 = vpop.f32.mrb[0].mxu0
  %685 = vmatprep.mubr.f32.mxu0 0.0
  %686 = vmatmul.mubr.f32.gmra.mrb[0].mxu0 %v564
  %v687 = vpop.f32.mrb[0].mxu0
  %v688 = vadd.f32 0.0, %v687
  %v689 = vpop.f32.mrb[0].mxu0
  %690 = vmatprep.mubr.f32.mxu0 0.0
  %691 = vmatmul.mubr.f32.gmra.mrb[0].mxu0 %v565
  %v692 = vpop.f32.mrb[0].mxu0
  %v693 = vadd.f32 0.0, %v692
  %v694 = vpop.f32.mrb[0].mxu0
  %695 = vmatprep.mubr.f32.mxu0 0.0
  %696 = vmatmul.mubr.f32.gmra.mrb[0].mxu0 %v566
  %v697 = vpop.f32.mrb[0].mxu0
  %v698 = vadd.f32 0.0, %v697
  %v699 = vpop.f32.mrb[0].mxu0
  %700 = vdwg.mxu0
  %701 = vmatprep.subr.mxu0 0.0
  %702 = vmatpush1.msra.mxu0 %v599
  %703 = vmatprep.subr.mxu0 0.0
  %704 = vmatpush1.msra.mxu0 %v600
  %705 = vmatprep.subr.mxu0 0.0
  %706 = vmatpush1.msra.mxu0 %v601
  %707 = vmatprep.subr.mxu0 0.0
  %708 = vmatpush1.msra.mxu0 %v602
  %709 = vmatprep.subr.mxu0 0.0
  %710 = vmatpush1.msra.mxu0 %v603
  %711 = vmatprep.subr.mxu0 0.0
  %712 = vmatpush1.msra.mxu0 %v604
  %713 = vmatprep.subr.mxu0 0.0
  %714 = vmatpush1.msra.mxu0 %v605
  %715 = vmatprep.subr.mxu0 0.0
  %716 = vmatpush1.msra.mxu0 %v606
  %717 = vmatprep.subr.mxu0 0.0
  %718 = vmatpush1.msra.mxu0 %v607
  %719 = vmatprep.subr.mxu0 0.0
  %720 = vmatpush1.msra.mxu0 %v608
  %721 = vmatprep.subr.mxu0 0.0
  %722 = vmatpush1.msra.mxu0 %v609
  %723 = vmatprep.subr.mxu0 0.0
  %724 = vmatpush1.msra.mxu0 %v610
  %725 = vmatprep.subr.mxu0 0.0
  %726 = vmatpush1.msra.mxu0 %v611
  %727 = vmatprep.subr.mxu0 0.0
  %728 = vmatpush1.msra.mxu0 %v612
  %729 = vmatprep.subr.mxu0 0.0
  %730 = vmatpush1.msra.mxu0 %v613
  %731 = vmatprep.subr.mxu0 0.0
  %732 = vmatpush1.msra.mxu0 %v614
  %733 = vmatprep.subr.mxu0 0.0
  %734 = vmatpush1.msra.mxu0 0.0
  %735 = vmatprep.subr.mxu0 0.0
  %736 = vmatpush1.msra.mxu0 0.0
  %737 = vmatprep.subr.mxu0 0.0
  %738 = vmatpush1.msra.mxu0 0.0
  %739 = vmatprep.subr.mxu0 0.0
  %740 = vmatpush1.msra.mxu0 0.0
  %741 = vmatprep.subr.mxu0 0.0
  %742 = vmatpush1.msra.mxu0 0.0
  %743 = vmatprep.subr.mxu0 0.0
  %744 = vmatpush1.msra.mxu0 0.0
  %745 = vmatprep.subr.mxu0 0.0
  %746 = vmatpush1.msra.mxu0 0.0
  %747 = vmatprep.subr.mxu0 0.0
  %748 = vmatpush1.msra.mxu0 0.0
  %749 = vmatprep.subr.mxu0 0.0
  %750 = vmatpush1.msra.mxu0 0.0
  %751 = vmatprep.subr.mxu0 0.0
  %752 = vmatpush1.msra.mxu0 0.0
  %753 = vmatprep.subr.mxu0 0.0
  %754 = vmatpush1.msra.mxu0 0.0
  %755 = vmatprep.subr.mxu0 0.0
  %756 = vmatpush1.msra.mxu0 0.0
  %757 = vmatprep.subr.mxu0 0.0
  %758 = vmatpush1.msra.mxu0 0.0
  %759 = vmatprep.subr.mxu0 0.0
  %760 = vmatpush1.msra.mxu0 0.0
  %761 = vmatprep.subr.mxu0 0.0
  %762 = vmatpush1.msra.mxu0 0.0
  %763 = vmatprep.subr.mxu0 0.0
  %764 = vmatpush1.msra.mxu0 0.0
  %765 = vmatprep.mubr.f32.mxu0 0.0
  %766 = vmatmul.mubr.f32.gmra.mrb[0].mxu0 %v563
  %v767 = vpop.f32.mrb[0].mxu0
  %v768 = vadd.f32 0.0, %v767
  %v769 = vpop.f32.mrb[0].mxu0
  %770 = vmatprep.mubr.f32.mxu0 0.0
  %771 = vmatmul.mubr.f32.gmra.mrb[0].mxu0 %v564
  %v772 = vpop.f32.mrb[0].mxu0
  %v773 = vadd.f32 0.0, %v772
  %v774 = vpop.f32.mrb[0].mxu0
  %775 = vmatprep.mubr.f32.mxu0 0.0
  %776 = vmatmul.mubr.f32.gmra.mrb[0].mxu0 %v565
  %v777 = vpop.f32.mrb[0].mxu0
  %v778 = vadd.f32 0.0, %v777
  %v779 = vpop.f32.mrb[0].mxu0
  %780 = vmatprep.mubr.f32.mxu0 0.0
  %781 = vmatmul.mubr.f32.gmra.mrb[0].mxu0 %v566
  %v782 = vpop.f32.mrb[0].mxu0
  %v783 = vadd.f32 0.0, %v782
  %v784 = vpop.f32.mrb[0].mxu0
  %785 = vdwg.mxu0
  %786 = vmatprep.subr.mxu0 0.0
  %787 = vmatpush1.msra.mxu0 %v683
  %788 = vmatprep.subr.mxu0 0.0
  %789 = vmatpush1.msra.mxu0 %v688
  %790 = vmatprep.subr.mxu0 0.0
  %791 = vmatpush1.msra.mxu0 %v693
  %792 = vmatprep.subr.mxu0 0.0
  %793 = vmatpush1.msra.mxu0 %v698
  %794 = vmatprep.subr.mxu0 0.0
  %795 = vmatpush1.msra.mxu0 0.0
  %796 = vmatprep.subr.mxu0 0.0
  %797 = vmatpush1.msra.mxu0 0.0
  %798 = vmatprep.subr.mxu0 0.0
  %799 = vmatpush1.msra.mxu0 0.0
  %800 = vmatprep.subr.mxu0 0.0
  %801 = vmatpush1.msra.mxu0 0.0
  %802 = vmatprep.subr.mxu0 0.0
  %803 = vmatpush1.msra.mxu0 0.0
  %804 = vmatprep.subr.mxu0 0.0
  %805 = vmatpush1.msra.mxu0 0.0
  %806 = vmatprep.subr.mxu0 0.0
  %807 = vmatpush1.msra.mxu0 0.0
  %808 = vmatprep.subr.mxu0 0.0
  %809 = vmatpush1.msra.mxu0 0.0
  %810 = vmatprep.subr.mxu0 0.0
  %811 = vmatpush1.msra.mxu0 0.0
  %812 = vmatprep.subr.mxu0 0.0
  %813 = vmatpush1.msra.mxu0 0.0
  %814 = vmatprep.subr.mxu0 0.0
  %815 = vmatpush1.msra.mxu0 0.0
  %816 = vmatprep.subr.mxu0 0.0
  %817 = vmatpush1.msra.mxu0 0.0
  %818 = vmatprep.subr.mxu0 0.0
  %819 = vmatpush1.msra.mxu0 0.0
  %820 = vmatprep.subr.mxu0 0.0
  %821 = vmatpush1.msra.mxu0 0.0
  %822 = vmatprep.subr.mxu0 0.0
  %823 = vmatpush1.msra.mxu0 0.0
  %824 = vmatprep.subr.mxu0 0.0
  %825 = vmatpush1.msra.mxu0 0.0
  %826 = vmatprep.subr.mxu0 0.0
  %827 = vmatpush1.msra.mxu0 0.0
  %828 = vmatprep.subr.mxu0 0.0
  %829 = vmatpush1.msra.mxu0 0.0
  %830 = vmatprep.subr.mxu0 0.0
  %831 = vmatpush1.msra.mxu0 0.0
  %832 = vmatprep.subr.mxu0 0.0
  %833 = vmatpush1.msra.mxu0 0.0
  %834 = vmatprep.subr.mxu0 0.0
  %835 = vmatpush1.msra.mxu0 0.0
  %836 = vmatprep.subr.mxu0 0.0
  %837 = vmatpush1.msra.mxu0 0.0
  %838 = vmatprep.subr.mxu0 0.0
  %839 = vmatpush1.msra.mxu0 0.0
  %840 = vmatprep.subr.mxu0 0.0
  %841 = vmatpush1.msra.mxu0 0.0
  %842 = vmatprep.subr.mxu0 0.0
  %843 = vmatpush1.msra.mxu0 0.0
  %844 = vmatprep.subr.mxu0 0.0
  %845 = vmatpush1.msra.mxu0 0.0
  %846 = vmatprep.subr.mxu0 0.0
  %847 = vmatpush1.msra.mxu0 0.0
  %848 = vmatprep.subr.mxu0 0.0
  %849 = vmatpush1.msra.mxu0 0.0
  %850 = vmatprep.mubr.f32.mxu0 0.0
  %851 = vmatmul.mubr.f32.gmra.mrb[0].mxu0 %v271
  %v852 = vpop.f32.mrb[0].mxu0
  %v853 = vadd.f32 0.0, %v852
  %v854 = vpop.f32.mrb[0].mxu0
  %855 = vmatprep.mubr.f32.mxu0 0.0
  %856 = vmatmul.mubr.f32.gmra.mrb[0].mxu0 %v274
  %v857 = vpop.f32.mrb[0].mxu0
  %v858 = vadd.f32 0.0, %v857
  %v859 = vpop.f32.mrb[0].mxu0
  %860 = vmatprep.mubr.f32.mxu0 0.0
  %861 = vmatmul.mubr.f32.gmra.mrb[0].mxu0 %v277
  %v862 = vpop.f32.mrb[0].mxu0
  %v863 = vadd.f32 0.0, %v862
  %v864 = vpop.f32.mrb[0].mxu0
  %865 = vmatprep.mubr.f32.mxu0 0.0
  %866 = vmatmul.mubr.f32.gmra.mrb[0].mxu0 %v280
  %v867 = vpop.f32.mrb[0].mxu0
  %v868 = vadd.f32 0.0, %v867
  %v869 = vpop.f32.mrb[0].mxu0
  %870 = vdwg.mxu0
  %871 = vmatprep.subr.mxu0 0.0
  %872 = vmatpush1.msra.mxu0 %v583
  %873 = vmatprep.subr.mxu0 0.0
  %874 = vmatpush1.msra.mxu0 %v584
  %875 = vmatprep.subr.mxu0 0.0
  %876 = vmatpush1.msra.mxu0 %v585
  %877 = vmatprep.subr.mxu0 0.0
  %878 = vmatpush1.msra.mxu0 %v586
  %879 = vmatprep.subr.mxu0 0.0
  %880 = vmatpush1.msra.mxu0 %v587
  %881 = vmatprep.subr.mxu0 0.0
  %882 = vmatpush1.msra.mxu0 %v588
  %883 = vmatprep.subr.mxu0 0.0
  %884 = vmatpush1.msra.mxu0 %v589
  %885 = vmatprep.subr.mxu0 0.0
  %886 = vmatpush1.msra.mxu0 %v590
  %887 = vmatprep.subr.mxu0 0.0
  %888 = vmatpush1.msra.mxu0 %v591
  %889 = vmatprep.subr.mxu0 0.0
  %890 = vmatpush1.msra.mxu0 %v592
  %891 = vmatprep.subr.mxu0 0.0
  %892 = vmatpush1.msra.mxu0 %v593
  %893 = vmatprep.subr.mxu0 0.0
  %894 = vmatpush1.msra.mxu0 %v594
  %895 = vmatprep.subr.mxu0 0.0
  %896 = vmatpush1.msra.mxu0 %v595
  %897 = vmatprep.subr.mxu0 0.0
  %898 = vmatpush1.msra.mxu0 %v596
  %899 = vmatprep.subr.mxu0 0.0
  %900 = vmatpush1.msra.mxu0 %v597
  %901 = vmatprep.subr.mxu0 0.0
  %902 = vmatpush1.msra.mxu0 %v598
  %903 = vmatprep.subr.mxu0 0.0
  %904 = vmatpush1.msra.mxu0 0.0
  %905 = vmatprep.subr.mxu0 0.0
  %906 = vmatpush1.msra.mxu0 0.0
  %907 = vmatprep.subr.mxu0 0.0
  %908 = vmatpush1.msra.mxu0 0.0
  %909 = vmatprep.subr.mxu0 0.0
  %910 = vmatpush1.msra.mxu0 0.0
  %911 = vmatprep.subr.mxu0 0.0
  %912 = vmatpush1.msra.mxu0 0.0
  %913 = vmatprep.subr.mxu0 0.0
  %914 = vmatpush1.msra.mxu0 0.0
  %915 = vmatprep.subr.mxu0 0.0
  %916 = vmatpush1.msra.mxu0 0.0
  %917 = vmatprep.subr.mxu0 0.0
  %918 = vmatpush1.msra.mxu0 0.0
  %919 = vmatprep.subr.mxu0 0.0
  %920 = vmatpush1.msra.mxu0 0.0
  %921 = vmatprep.subr.mxu0 0.0
  %922 = vmatpush1.msra.mxu0 0.0
  %923 = vmatprep.subr.mxu0 0.0
  %924 = vmatpush1.msra.mxu0 0.0
  %925 = vmatprep.subr.mxu0 0.0
  %926 = vmatpush1.msra.mxu0 0.0
  %927 = vmatprep.subr.mxu0 0.0
  %928 = vmatpush1.msra.mxu0 0.0
  %929 = vmatprep.subr.mxu0 0.0
  %930 = vmatpush1.msra.mxu0 0.0
  %931 = vmatprep.subr.mxu0 0.0
  %932 = vmatpush1.msra.mxu0 0.0
  %933 = vmatprep.subr.mxu0 0.0
  %934 = vmatpush1.msra.mxu0 0.0
  %935 = vmatprep.mubr.f32.mxu0 0.0
  %936 = vmatmul.mubr.f32.gmra.mrb[0].mxu0 %v563
  %v937 = vpop.f32.mrb[0].mxu0
  %v938 = vadd.f32 %v853, %v937
  %v939 = vpop.f32.mrb[0].mxu0
  %940 = vmatprep.mubr.f32.mxu0 0.0
  %941 = vmatmul.mubr.f32.gmra.mrb[0].mxu0 %v564
  %v942 = vpop.f32.mrb[0].mxu0
  %v943 = vadd.f32 %v858, %v942
  %v944 = vpop.f32.mrb[0].mxu0
  %945 = vmatprep.mubr.f32.mxu0 0.0
  %946 = vmatmul.mubr.f32.gmra.mrb[0].mxu0 %v565
  %v947 = vpop.f32.mrb[0].mxu0
  %v948 = vadd.f32 %v863, %v947
  %v949 = vpop.f32.mrb[0].mxu0
  %950 = vmatprep.mubr.f32.mxu0 0.0
  %951 = vmatmul.mubr.f32.gmra.mrb[0].mxu0 %v566
  %v952 = vpop.f32.mrb[0].mxu0
  %v953 = vadd.f32 %v868, %v952
  %v954 = vpop.f32.mrb[0].mxu0
  %955 = vdwg.mxu0
  %956 = vmatprep.subr.mxu0 0.0
  %957 = vmatpush1.msra.mxu0 %v768
  %958 = vmatprep.subr.mxu0 0.0
  %959 = vmatpush1.msra.mxu0 %v773
  %960 = vmatprep.subr.mxu0 0.0
  %961 = vmatpush1.msra.mxu0 %v778
  %962 = vmatprep.subr.mxu0 0.0
  %963 = vmatpush1.msra.mxu0 %v783
  %964 = vmatprep.subr.mxu0 0.0
  %965 = vmatpush1.msra.mxu0 0.0
  %966 = vmatprep.subr.mxu0 0.0
  %967 = vmatpush1.msra.mxu0 0.0
  %968 = vmatprep.subr.mxu0 0.0
  %969 = vmatpush1.msra.mxu0 0.0
  %970 = vmatprep.subr.mxu0 0.0
  %971 = vmatpush1.msra.mxu0 0.0
  %972 = vmatprep.subr.mxu0 0.0
  %973 = vmatpush1.msra.mxu0 0.0
  %974 = vmatprep.subr.mxu0 0.0
  %975 = vmatpush1.msra.mxu0 0.0
  %976 = vmatprep.subr.mxu0 0.0
  %977 = vmatpush1.msra.mxu0 0.0
  %978 = vmatprep.subr.mxu0 0.0
  %979 = vmatpush1.msra.mxu0 0.0
  %980 = vmatprep.subr.mxu0 0.0
  %981 = vmatpush1.msra.mxu0 0.0
  %982 = vmatprep.subr.mxu0 0.0
  %983 = vmatpush1.msra.mxu0 0.0
  %984 = vmatprep.subr.mxu0 0.0
  %985 = vmatpush1.msra.mxu0 0.0
  %986 = vmatprep.subr.mxu0 0.0
  %987 = vmatpush1.msra.mxu0 0.0
  %988 = vmatprep.subr.mxu0 0.0
  %989 = vmatpush1.msra.mxu0 0.0
  %990 = vmatprep.subr.mxu0 0.0
  %991 = vmatpush1.msra.mxu0 0.0
  %992 = vmatprep.subr.mxu0 0.0
  %993 = vmatpush1.msra.mxu0 0.0
  %994 = vmatprep.subr.mxu0 0.0
  %995 = vmatpush1.msra.mxu0 0.0
  %996 = vmatprep.subr.mxu0 0.0
  %997 = vmatpush1.msra.mxu0 0.0
  %998 = vmatprep.subr.mxu0 0.0
  %999 = vmatpush1.msra.mxu0 0.0
  %1000 = vmatprep.subr.mxu0 0.0
  %1001 = vmatpush1.msra.mxu0 0.0
  %1002 = vmatprep.subr.mxu0 0.0
  %1003 = vmatpush1.msra.mxu0 0.0
  %1004 = vmatprep.subr.mxu0 0.0
  %1005 = vmatpush1.msra.mxu0 0.0
  %1006 = vmatprep.subr.mxu0 0.0
  %1007 = vmatpush1.msra.mxu0 0.0
  %1008 = vmatprep.subr.mxu0 0.0
  %1009 = vmatpush1.msra.mxu0 0.0
  %1010 = vmatprep.subr.mxu0 0.0
  %1011 = vmatpush1.msra.mxu0 0.0
  %1012 = vmatprep.subr.mxu0 0.0
  %1013 = vmatpush1.msra.mxu0 0.0
  %1014 = vmatprep.subr.mxu0 0.0
  %1015 = vmatpush1.msra.mxu0 0.0
  %1016 = vmatprep.subr.mxu0 0.0
  %1017 = vmatpush1.msra.mxu0 0.0
  %1018 = vmatprep.subr.mxu0 0.0
  %1019 = vmatpush1.msra.mxu0 0.0
  %1020 = vmatprep.mubr.f32.mxu0 0.0
  %1021 = vmatmul.mubr.f32.gmra.mrb[0].mxu0 %v453
  %v1022 = vpop.f32.mrb[0].mxu0
  %v1023 = vadd.f32 0.0, %v1022
  %v1024 = vpop.f32.mrb[0].mxu0
  %1025 = vmatprep.mubr.f32.mxu0 0.0
  %1026 = vmatmul.mubr.f32.gmra.mrb[0].mxu0 %v456
  %v1027 = vpop.f32.mrb[0].mxu0
  %v1028 = vadd.f32 0.0, %v1027
  %v1029 = vpop.f32.mrb[0].mxu0
  %1030 = vmatprep.mubr.f32.mxu0 0.0
  %1031 = vmatmul.mubr.f32.gmra.mrb[0].mxu0 %v459
  %v1032 = vpop.f32.mrb[0].mxu0
  %v1033 = vadd.f32 0.0, %v1032
  %v1034 = vpop.f32.mrb[0].mxu0
  %1035 = vmatprep.mubr.f32.mxu0 0.0
  %1036 = vmatmul.mubr.f32.gmra.mrb[0].mxu0 %v462
  %v1037 = vpop.f32.mrb[0].mxu0
  %v1038 = vadd.f32 0.0, %v1037
  %v1039 = vpop.f32.mrb[0].mxu0
  %1040 = vdwg.mxu0
  %v1041 = vadd.f32 %v938, %v1023
  %v1042 = vadd.f32 %v943, %v1028
  %v1043 = vadd.f32 %v948, %v1033
  %v1044 = vadd.f32 %v953, %v1038
  %v1046 = vlaneseq
  %v1047 = vshrl.u32 %v1046, 7
  %v1048 = vsub.s32 0, %v1047
  %v1049 = vrot.slane %v615, %v1048
  %v1051 = vadd.f32 %v1041, %v1049
  %v1052 = vadd.f32 %v1042, %v1049
  %v1053 = vadd.f32 %v1043, %v1049
  %v1054 = vadd.f32 %v1044, %v1049
  %v1055 = vmul.f32 %v1051, 0.5
  %v1056 = vmul.f32 %v1052, 0.5
  %v1057 = vmul.f32 %v1053, 0.5
  %v1058 = vmul.f32 %v1054, 0.5
  %v1059 = vtanh.pop %v1055
  %v1060 = vtanh.pop %v1056
  %v1061 = vtanh.pop %v1057
  %v1062 = vtanh.pop %v1058
  %v1063 = vadd.f32 %v1059, 1.0
  %v1064 = vadd.f32 %v1060, 1.0
  %v1065 = vadd.f32 %v1061, 1.0
  %v1066 = vadd.f32 %v1062, 1.0
  %v1067 = vmul.f32 %v1063, 0.5
  %v1068 = vmul.f32 %v1064, 0.5
  %v1069 = vmul.f32 %v1065, 0.5
  %v1070 = vmul.f32 %v1066, 0.5
  %vm1071 = vcmask 523264
  %1072 = vst.msk [vmem:[%s11] sm:$0xff] %vm1071, %v1067
  %1073 = vst.msk [vmem:[%s11 + $0x8] sm:$0xff] %vm1071, %v1068
  %1074 = vst.msk [vmem:[%s11 + $0x10] sm:$0xff] %vm1071, %v1069
  %1075 = vst.msk [vmem:[%s11 + $0x18] sm:$0xff] %vm1071, %v1070
  // Predicated region
  $region46: #{_lambda_.5} parent=0 // pred_check
    _
  $region47: #{_lambda_.5} parent=0 // pred_check_branch
    %1077 = sbr.rel (0) target = $region49
  $region48: #{_lambda_.5} parent=0 // pred_region
    _
  $region49: #{_lambda_.5} parent=0 // pred_fallthru
    _
  // Predicated region
  $region50: #{_lambda_.5} parent=0 // pred_check
    _
  $region51: #{_lambda_.5} parent=0 // pred_check_branch
    %1079 = sbr.rel (0) target = $region53
  $region52: #{_lambda_.5} parent=0 // pred_region
    _
  $region53: #{_lambda_.5} parent=0 // pred_fallthru
    _

</llo_original>
